<compile_context>
chip_gen: v7x
topology: tpu7x:2x2x1
jax: 0.10.0
libtpu: 0.0.40
codegen_flags: <defaults>
</compile_context>

<pallas_src>
import math
import numpy as np
import jax
import jax.numpy as jnp
from jax import lax
from jax.experimental import pallas as pl
from jax.experimental.pallas import tpu as pltpu

# full-f32 matmuls everywhere (kernel and reference) so the tolerance check is tight
jax.config.update("jax_default_matmul_precision", "highest")

# ---------------- model hyper-parameters (consistent with the module) ----------
D_MODEL = 32                       # embed_dim
EXPAND = 1                         # Mamba(expand=1)
D_INNER = EXPAND * D_MODEL         # 32
D_STATE = 16                       # Mamba default d_state
D_CONV = 4                         # d_conv=4
DT_RANK = math.ceil(D_MODEL / 16)  # = 2
SEQ_LEN = 8
BATCH = 2
LN_EPS = 1e-5

N_CHAIN = 2 * BATCH                # 4 = (fwd,bwd) x batch
LANES = N_CHAIN * D_INNER          # 128 (scan lane layout: chain*32 + i)
XW = BATCH * D_MODEL               # 64  (activation lane layout: b*32 + d)

# ---------------- packed parameter slab layout: (N_ROWS, 128) f32 ---------------
R_MLN = 0                          # (64, 64)  block-diag LayerNorm mean matrix (1/D)
R_WIN = R_MLN + XW                 # 64:  (64,128) fused in_proj (gamma folded), block-diag / batch
R_WDL = R_WIN + XW                 # 128: (128,128) fused delta proj (dt_rank folded), block-diag / chain
R_WBC = R_WDL + LANES              # 256: (128,128) B|C proj, TRANSPOSED, block-diag / chain
R_WOUT = R_WBC + LANES             # 384: (64,64)  fused out_proj @ temporal_fc, block-diag / batch
R_ANEG = R_WOUT + XW               # 448: (16,128) -exp(A_log) as [n, chain*32+i]
R_MISC = R_ANEG + D_STATE          # 464
R_INB = R_MISC + 0                 # (1,128) LN-beta folded in_proj bias
R_DTB = R_MISC + 1                 # (1,128) dt_proj bias per chain
R_DPAR = R_MISC + 2                # (1,128) D (skip) per chain
R_CONVB = R_MISC + 3               # (1,128) conv bias per chain
R_TFCB = R_MISC + 4                # (1, 64) temporal_fc bias per batch
R_CONVW = R_MISC + 8               # (4,128) conv taps [k, chain*32+i]
N_ROWS = 480


# ------------------------------ in-kernel math ----------------------------------
def _silu(x):
    return x * (1.0 / (1.0 + jnp.exp(-x)))


def _softplus(x):
    return jnp.where(x > 20.0, x, jnp.log(1.0 + jnp.exp(x)))


def mamba_head_kernel(x_ref, w_ref, out_ref):
    f32 = jnp.float32
    x = x_ref[...]                                          # (8, 64)  [t, b*32+d]

    m_ln = w_ref[R_MLN:R_MLN + XW, 0:XW]
    w_in = w_ref[R_WIN:R_WIN + XW, :]
    w_dl = w_ref[R_WDL:R_WDL + LANES, :]
    w_bcT = w_ref[R_WBC:R_WBC + LANES, :]
    w_out = w_ref[R_WOUT:R_WOUT + XW, 0:XW]
    a_neg = w_ref[R_ANEG:R_ANEG + D_STATE, :]
    inb = w_ref[R_INB:R_INB + 1, :]
    dtb = w_ref[R_DTB:R_DTB + 1, :]
    dpar = w_ref[R_DPAR:R_DPAR + 1, :]
    convb = w_ref[R_CONVB:R_CONVB + 1, :]
    tfcb = w_ref[R_TFCB:R_TFCB + 1, 0:XW]
    convw = w_ref[R_CONVW:R_CONVW + D_CONV, :]

    # ---- LayerNorm: one-pass stats via block-diag mean matmul, gamma/beta folded
    mu = jnp.dot(x, m_ln, preferred_element_type=f32)
    ex2 = jnp.dot(x * x, m_ln, preferred_element_type=f32)
    xn = (x - mu) * lax.rsqrt(ex2 - mu * mu + LN_EPS)

    # ---- in_proj (block-diag / batch): cols [x_in b0 | x_in b1 | z b0 | z b1]
    xz = jnp.dot(xn, w_in, preferred_element_type=f32) + inb          # (8, 128)
    x_in = xz[:, 0:XW]
    gate = _silu(xz[:, XW:2 * XW])                                    # shared gate

    # ---- backward branch = forward math on the time-reversed sequence
    rev8 = (lax.broadcasted_iota(jnp.int32, (SEQ_LEN, SEQ_LEN), 0)
            + lax.broadcasted_iota(jnp.int32, (SEQ_LEN, SEQ_LEN), 1)
            == SEQ_LEN - 1).astype(f32)                               # anti-identity
    x_rev = jnp.dot(rev8, x_in, preferred_element_type=f32)
    xc = jnp.concatenate([x_in, x_rev], axis=1)                       # (8,128) [s, chain*32+i]

    # ---- depthwise causal conv (kernel 4), all 4 chains at once
    xp = jnp.concatenate([jnp.zeros((D_CONV - 1, LANES), f32), xc], axis=0)   # (11,128)
    conv = jnp.broadcast_to(convb, (SEQ_LEN, LANES))
    for k in range(D_CONV):
        conv = conv + xp[k:k + SEQ_LEN, :] * convw[k:k + 1, :]
    u = _silu(conv)                                                   # (8, 128)

    # ---- fused input-dependent projections (block-diag over the 4 chains)
    delta = _softplus(jnp.dot(u, w_dl, preferred_element_type=f32) + dtb)    # (8,128)
    du = delta * u
    # B|C with the state index on sublanes: contract both lane dims (q@k.T style)
    bcT = lax.dot_general(w_bcT, u, (((1,), (1,)), ((), ())),
                          preferred_element_type=f32)                 # (128, 8): [chain*32+{B:n, C:16+n}, s]

    # ---- batched selective scan: 4 chains advance together, lane-dense state
    h = jnp.zeros((D_STATE, LANES), f32)                              # (16,128) = 2 vregs
    y_rows = []
    for s in range(SEQ_LEN):
        dA = jnp.exp(delta[s:s + 1, :] * a_neg)                       # (16,128)
        bc_s = jnp.concatenate(
            [jnp.broadcast_to(bcT[c * D_INNER:(c + 1) * D_INNER, s:s + 1],
                              (2 * D_STATE, D_INNER))
             for c in range(N_CHAIN)], axis=1)                        # (32,128): rows 0:16 B, 16:32 C
        h = dA * h + du[s:s + 1, :] * bc_s[0:D_STATE, :]
        y_rows.append(jnp.sum(h * bc_s[D_STATE:2 * D_STATE, :], axis=0, keepdims=True))
    y = jnp.concatenate(y_rows, axis=0)                               # (8,128) [s, chain*32+i]

    # ---- D*u skip, un-reverse the bwd half, shared gate, fused out_proj@temporal_fc
    y = y + u * dpar
    y_comb = y[:, 0:XW] + jnp.dot(rev8, y[:, XW:2 * XW], preferred_element_type=f32)
    res = jnp.dot(y_comb * gate, w_out, preferred_element_type=f32) + tfcb
    out_ref[...] = x + res        # proj_drop is identity in eval mode


# ------------------------------- wrapper ----------------------------------------
@jax.jit
def mamba_head_forward(hidden_states, slab):
    B, L, D = hidden_states.shape
    x_tm = jnp.transpose(hidden_states.astype(jnp.float32), (1, 0, 2)).reshape(L, B * D)
    out_tm = pl.pallas_call(
        mamba_head_kernel,
        out_shape=jax.ShapeDtypeStruct((L, B * D), jnp.float32),
        grid=(1,),
        in_specs=[pl.BlockSpec((L, B * D), lambda i: (0, 0)),
                  pl.BlockSpec(slab.shape, lambda i: (0, 0))],
        out_specs=pl.BlockSpec((L, B * D), lambda i: (0, 0)),
        compiler_params=pltpu.CompilerParams(dimension_semantics=("arbitrary",)),
    )(x_tm, slab)
    return jnp.transpose(out_tm.reshape(L, B, D), (1, 0, 2))


# --------------------------- parameters & packing --------------------------------
def make_module_params(key, zero_temporal_fc):
    f32 = jnp.float32
    ks = list(jax.random.split(key, 24))

    def nrm(k, shape, scale):
        return scale * jax.random.normal(k, shape, dtype=f32)

    p = {}
    p['ln_g'] = 1.0 + 0.1 * jax.random.normal(ks[0], (D_MODEL,), dtype=f32)
    p['ln_b'] = 0.1 * jax.random.normal(ks[1], (D_MODEL,), dtype=f32)
    p['in_proj_w'] = nrm(ks[2], (2 * D_INNER, D_MODEL), 0.3)      # (out, in), no bias
    i = 3
    for d in ('f', 'b'):
        p[f'conv_w_{d}'] = nrm(ks[i], (D_INNER, D_CONV), 0.3); i += 1
        p[f'conv_b_{d}'] = nrm(ks[i], (D_INNER,), 0.1); i += 1
        p[f'xproj_w_{d}'] = nrm(ks[i], (DT_RANK + 2 * D_STATE, D_INNER), 0.3); i += 1
        p[f'dtproj_w_{d}'] = nrm(ks[i], (D_INNER, DT_RANK), 0.3); i += 1
        p[f'dtproj_b_{d}'] = (float(np.log(np.expm1(0.05)))
                              + nrm(ks[i], (D_INNER,), 0.05)); i += 1
        p[f'A_log_{d}'] = (jnp.log(jnp.broadcast_to(
            jnp.arange(1, D_STATE + 1, dtype=f32)[None, :], (D_INNER, D_STATE)))
            + 0.01 * jax.random.normal(ks[i], (D_INNER, D_STATE), dtype=f32)); i += 1
        p[f'D_{d}'] = 1.0 + 0.1 * jax.random.normal(ks[i], (D_INNER,), dtype=f32); i += 1
    p['out_proj_w'] = nrm(ks[i], (D_MODEL, D_INNER), 0.3); i += 1
    if zero_temporal_fc:      # faithful nn.init.constant_(..., 0.0)
        p['tfc_w'] = jnp.zeros((D_MODEL, D_MODEL), f32)
        p['tfc_b'] = jnp.zeros((D_MODEL,), f32)
    else:
        p['tfc_w'] = nrm(ks[i], (D_MODEL, D_MODEL), 0.3); i += 1
        p['tfc_b'] = 0.1 * jax.random.normal(ks[i], (D_MODEL,), dtype=f32)
    return p


def pack_params(p):
    def A(v):
        return np.asarray(v, np.float32)

    slab = np.zeros((N_ROWS, LANES), np.float32)
    # LayerNorm block-diag mean matrix
    for b in range(BATCH):
        slab[R_MLN + b * D_MODEL:R_MLN + (b + 1) * D_MODEL,
             b * D_MODEL:(b + 1) * D_MODEL] = 1.0 / D_MODEL
    # fused in_proj (gamma folded; beta contribution becomes a bias row)
    w_in = A(p['in_proj_w'])                              # (2*Di, D)
    wg = (w_in * A(p['ln_g'])[None, :]).T                 # (D, 2*Di) : [d, k]
    bias_k = A(p['ln_b']) @ w_in.T                        # (2*Di,)
    for b in range(BATCH):
        r = slice(R_WIN + b * D_MODEL, R_WIN + (b + 1) * D_MODEL)
        slab[r, b * D_INNER:(b + 1) * D_INNER] = wg[:, :D_INNER]
        slab[r, XW + b * D_INNER:XW + (b + 1) * D_INNER] = wg[:, D_INNER:]
        slab[R_INB, b * D_INNER:(b + 1) * D_INNER] = bias_k[:D_INNER]
        slab[R_INB, XW + b * D_INNER:XW + (b + 1) * D_INNER] = bias_k[D_INNER:]
    # per-chain blocks (chain = dir*BATCH + batch; weights shared across batch)
    for c in range(N_CHAIN):
        d = 'f' if c < BATCH else 'b'
        lo = c * D_INNER
        xp_w = A(p[f'xproj_w_{d}'])                       # (R+2N, Di)
        dt_w = A(p[f'dtproj_w_{d}'])                      # (Di, R)
        slab[R_WDL + lo:R_WDL + lo + D_INNER, lo:lo + D_INNER] = xp_w[:DT_RANK].T @ dt_w.T
        slab[R_WBC + lo:R_WBC + lo + 2 * D_STATE, lo:lo + D_INNER] = xp_w[DT_RANK:]  # transposed layout
        slab[R_ANEG:R_ANEG + D_STATE, lo:lo + D_INNER] = (-np.exp(A(p[f'A_log_{d}']))).T
        slab[R_DTB, lo:lo + D_INNER] = A(p[f'dtproj_b_{d}'])
        slab[R_DPAR, lo:lo + D_INNER] = A(p[f'D_{d}'])
        slab[R_CONVB, lo:lo + D_INNER] = A(p[f'conv_b_{d}'])
        slab[R_CONVW:R_CONVW + D_CONV, lo:lo + D_INNER] = A(p[f'conv_w_{d}']).T
    # fused out_proj -> temporal_fc (exact: no out_proj bias in Mamba)
    w_out_fused = A(p['out_proj_w']).T @ A(p['tfc_w']).T  # (Di, D)
    for b in range(BATCH):
        slab[R_WOUT + b * D_INNER:R_WOUT + (b + 1) * D_INNER,
             b * D_MODEL:(b + 1) * D_MODEL] = w_out_fused
        slab[R_TFCB, b * D_MODEL:(b + 1) * D_MODEL] = A(p['tfc_b'])
    return jnp.asarray(slab)


# --------------------------- pure-JAX reference ----------------------------------
@jax.jit
def reference_forward(x, p):
    mu = jnp.mean(x, -1, keepdims=True)
    var = jnp.mean((x - mu) ** 2, -1, keepdims=True)
    h = (x - mu) / jnp.sqrt(var + LN_EPS) * p['ln_g'] + p['ln_b']
    xz = h @ p['in_proj_w'].T
    x_in, z = xz[..., :D_INNER], xz[..., D_INNER:]

    def branch(xin, zin, d):
        xpad = jnp.pad(xin, ((0, 0), (D_CONV - 1, 0), (0, 0)))
        conv = p[f'conv_b_{d}'][None, None, :]
        for k in range(D_CONV):
            conv = conv + xpad[:, k:k + SEQ_LEN, :] * p[f'conv_w_{d}'][:, k][None, None, :]
        u = jax.nn.silu(conv)
        xdbl = u @ p[f'xproj_w_{d}'].T
        delta = jax.nn.softplus(xdbl[..., :DT_RANK] @ p[f'dtproj_w_{d}'].T + p[f'dtproj_b_{d}'])
        Bm = xdbl[..., DT_RANK:DT_RANK + D_STATE]
        Cm = xdbl[..., DT_RANK + D_STATE:]
        Amat = -jnp.exp(p[f'A_log_{d}'])
        hstate = jnp.zeros((xin.shape[0], D_INNER, D_STATE), jnp.float32)
        ys = []
        for t in range(SEQ_LEN):
            dA = jnp.exp(delta[:, t, :, None] * Amat[None])
            hstate = dA * hstate + (delta[:, t] * u[:, t])[..., None] * Bm[:, t, None, :]
            ys.append(jnp.einsum('bdn,bn->bd', hstate, Cm[:, t]))
        y = jnp.stack(ys, axis=1) + u * p[f'D_{d}'][None, None, :]
        return y * jax.nn.silu(zin)

    out_f = branch(x_in, z, 'f')
    out_b = branch(x_in[:, ::-1], z[:, ::-1], 'b')
    y = out_f + out_b[:, ::-1]
    res = (y @ p['out_proj_w'].T) @ p['tfc_w'].T + p['tfc_b']
    return x + res


if __name__ == "__main__":
    hidden_states = jax.random.normal(
        jax.random.PRNGKey(0), (BATCH, SEQ_LEN, D_MODEL), dtype=jnp.float32)

    # (1) Faithful module init: temporal_fc zero-initialized -> block returns the residual.
    p0 = make_module_params(jax.random.PRNGKey(42), zero_temporal_fc=True)
    out0 = jax.block_until_ready(mamba_head_forward(hidden_states, pack_params(p0)))
    assert out0.shape == (BATCH, SEQ_LEN, D_MODEL)
    np.testing.assert_allclose(np.asarray(out0), np.asarray(hidden_states),
                               rtol=1e-6, atol=1e-6)

    # (2) Nonzero temporal_fc: validate the full Mamba path against a pure-JAX reference.
    p1 = make_module_params(jax.random.PRNGKey(43), zero_temporal_fc=False)
    out1 = jax.block_until_ready(mamba_head_forward(hidden_states, pack_params(p1)))
    ref1 = jax.block_until_ready(reference_forward(hidden_states, p1))
    np.testing.assert_allclose(np.asarray(out1), np.asarray(ref1), rtol=5e-4, atol=1e-4)
    np.testing.assert_allclose(np.asarray(out1 - hidden_states),
                               np.asarray(ref1 - hidden_states), rtol=2e-3, atol=1e-4)

    print("KERNEL_OK")
</pallas_src>

<mosaic_0001>
module attributes {stable_mosaic.version = 11 : i64} {
  func.func @mamba_head_kernel(%arg0: i32, %arg1: memref<8x64xf32, #tpu.memory_space<vmem>>, %arg2: memref<480x128xf32, #tpu.memory_space<vmem>>, %arg3: memref<8x64xf32, #tpu.memory_space<vmem>>) attributes {dimension_semantics = [#tpu.dimension_semantics<arbitrary>], iteration_bounds = array<i64: 1>, scalar_prefetch = 0 : i64, scratch_operands = 0 : i64, tpu.core_type = #tpu.core_type<tc>, window_params = [{pipeline_mode = #tpu.pipeline_mode<synchronous>, transform_indices = @transform_0, window_bounds = array<i64: 8, 64>}, {pipeline_mode = #tpu.pipeline_mode<synchronous>, transform_indices = @transform_1, window_bounds = array<i64: 480, 128>}, {pipeline_mode = #tpu.pipeline_mode<synchronous>, transform_indices = @transform_2, window_bounds = array<i64: 8, 64>}]} {
    %c0 = arith.constant 0 : index
    %c0_0 = arith.constant 0 : index
    %0 = vector.load %arg1[%c0, %c0_0] : memref<8x64xf32, #tpu.memory_space<vmem>>, vector<8x64xf32>
    %c0_1 = arith.constant 0 : index
    %c0_2 = arith.constant 0 : index
    %1 = vector.load %arg2[%c0_1, %c0_2] : memref<480x128xf32, #tpu.memory_space<vmem>>, vector<64x64xf32>
    %c64 = arith.constant 64 : index
    %c0_3 = arith.constant 0 : index
    %2 = vector.load %arg2[%c64, %c0_3] : memref<480x128xf32, #tpu.memory_space<vmem>>, vector<64x128xf32>
    %c128 = arith.constant 128 : index
    %c0_4 = arith.constant 0 : index
    %3 = vector.load %arg2[%c128, %c0_4] : memref<480x128xf32, #tpu.memory_space<vmem>>, vector<128x128xf32>
    %c256 = arith.constant 256 : index
    %c0_5 = arith.constant 0 : index
    %4 = vector.load %arg2[%c256, %c0_5] : memref<480x128xf32, #tpu.memory_space<vmem>>, vector<128x128xf32>
    %c384 = arith.constant 384 : index
    %c0_6 = arith.constant 0 : index
    %5 = vector.load %arg2[%c384, %c0_6] : memref<480x128xf32, #tpu.memory_space<vmem>>, vector<64x64xf32>
    %c448 = arith.constant 448 : index
    %c0_7 = arith.constant 0 : index
    %6 = vector.load %arg2[%c448, %c0_7] : memref<480x128xf32, #tpu.memory_space<vmem>>, vector<16x128xf32>
    %c464 = arith.constant 464 : index
    %c0_8 = arith.constant 0 : index
    %7 = vector.load %arg2[%c464, %c0_8] : memref<480x128xf32, #tpu.memory_space<vmem>>, vector<1x128xf32>
    %c465 = arith.constant 465 : index
    %c0_9 = arith.constant 0 : index
    %8 = vector.load %arg2[%c465, %c0_9] : memref<480x128xf32, #tpu.memory_space<vmem>>, vector<1x128xf32>
    %c466 = arith.constant 466 : index
    %c0_10 = arith.constant 0 : index
    %9 = vector.load %arg2[%c466, %c0_10] : memref<480x128xf32, #tpu.memory_space<vmem>>, vector<1x128xf32>
    %c467 = arith.constant 467 : index
    %c0_11 = arith.constant 0 : index
    %10 = vector.load %arg2[%c467, %c0_11] : memref<480x128xf32, #tpu.memory_space<vmem>>, vector<1x128xf32>
    %c468 = arith.constant 468 : index
    %c0_12 = arith.constant 0 : index
    %11 = vector.load %arg2[%c468, %c0_12] : memref<480x128xf32, #tpu.memory_space<vmem>>, vector<1x64xf32>
    %c472 = arith.constant 472 : index
    %c0_13 = arith.constant 0 : index
    %12 = vector.load %arg2[%c472, %c0_13] : memref<480x128xf32, #tpu.memory_space<vmem>>, vector<4x128xf32>
    %cst = arith.constant dense<0.000000e+00> : vector<8x64xf32>
    %13 = tpu.matmul %0, %1, %cst {dimension_numbers = #tpu.dot_dimension_numbers<[1], [0], [0], [1], [0, 0, 1, 1], [], []>, precision = #tpu.contract_precision<fp32>} : vector<8x64xf32>, vector<64x64xf32>, vector<8x64xf32> -> vector<8x64xf32>
    %14 = arith.mulf %0, %0 : vector<8x64xf32>
    %cst_14 = arith.constant dense<0.000000e+00> : vector<8x64xf32>
    %15 = tpu.matmul %14, %1, %cst_14 {dimension_numbers = #tpu.dot_dimension_numbers<[1], [0], [0], [1], [0, 0, 1, 1], [], []>, precision = #tpu.contract_precision<fp32>} : vector<8x64xf32>, vector<64x64xf32>, vector<8x64xf32> -> vector<8x64xf32>
    %16 = arith.subf %0, %13 : vector<8x64xf32>
    %17 = arith.mulf %13, %13 : vector<8x64xf32>
    %18 = arith.subf %15, %17 : vector<8x64xf32>
    %cst_15 = arith.constant 9.99999974E-6 : f32
    %19 = vector.broadcast %cst_15 : f32 to vector<8x64xf32>
    %20 = arith.addf %18, %19 : vector<8x64xf32>
    %21 = math.rsqrt %20 : vector<8x64xf32>
    %22 = arith.mulf %16, %21 : vector<8x64xf32>
    %cst_16 = arith.constant dense<0.000000e+00> : vector<8x128xf32>
    %23 = tpu.matmul %22, %2, %cst_16 {dimension_numbers = #tpu.dot_dimension_numbers<[1], [0], [0], [1], [0, 0, 1, 1], [], []>, precision = #tpu.contract_precision<fp32>} : vector<8x64xf32>, vector<64x128xf32>, vector<8x128xf32> -> vector<8x128xf32>
    %24 = vector.broadcast %7 : vector<1x128xf32> to vector<8x128xf32>
    %25 = arith.addf %23, %24 : vector<8x128xf32>
    %26 = vector.extract_strided_slice %25 {offsets = [0, 0], sizes = [8, 64], strides = [1, 1]} : vector<8x128xf32> to vector<8x64xf32>
    %27 = vector.extract_strided_slice %25 {offsets = [0, 64], sizes = [8, 64], strides = [1, 1]} : vector<8x128xf32> to vector<8x64xf32>
    %cst_17 = arith.constant 0.000000e+00 : f32
    %28 = vector.broadcast %cst_17 : f32 to vector<8x64xf32>
    %29 = arith.subf %28, %27 : vector<8x64xf32>
    %30 = math.exp %29 : vector<8x64xf32>
    %cst_18 = arith.constant 1.000000e+00 : f32
    %31 = vector.broadcast %cst_18 : f32 to vector<8x64xf32>
    %32 = arith.addf %31, %30 : vector<8x64xf32>
    %cst_19 = arith.constant 1.000000e+00 : f32
    %33 = vector.broadcast %cst_19 : f32 to vector<8x64xf32>
    %34 = arith.divf %33, %32 : vector<8x64xf32>
    %35 = arith.mulf %27, %34 : vector<8x64xf32>
    %36 = tpu.iota {dimensions = array<i32: 0>} : vector<8x8xi32>
    %37 = tpu.iota {dimensions = array<i32: 1>} : vector<8x8xi32>
    %38 = arith.addi %36, %37 : vector<8x8xi32>
    %c7_i32 = arith.constant 7 : i32
    %39 = vector.broadcast %c7_i32 : i32 to vector<8x8xi32>
    %40 = arith.cmpi eq, %38, %39 : vector<8x8xi32>
    %41 = arith.extui %40 : vector<8x8xi1> to vector<8x8xi32>
    %42 = arith.sitofp %41 : vector<8x8xi32> to vector<8x8xf32>
    %cst_20 = arith.constant dense<0.000000e+00> : vector<8x64xf32>
    %43 = tpu.matmul %42, %26, %cst_20 {dimension_numbers = #tpu.dot_dimension_numbers<[1], [0], [0], [1], [0, 0, 1, 1], [], []>, precision = #tpu.contract_precision<fp32>} : vector<8x8xf32>, vector<8x64xf32>, vector<8x64xf32> -> vector<8x64xf32>
    %44 = tpu.concatenate %26, %43 in 1 : vector<8x64xf32>, vector<8x64xf32> -> vector<8x128xf32>
    %cst_21 = arith.constant 0.000000e+00 : f32
    %45 = vector.broadcast %cst_21 : f32 to vector<3x128xf32>
    %46 = tpu.concatenate %45, %44 in 0 : vector<3x128xf32>, vector<8x128xf32> -> vector<11x128xf32>
    %47 = vector.shape_cast %10 : vector<1x128xf32> to vector<1x128xf32>
    %48 = vector.broadcast %47 : vector<1x128xf32> to vector<8x128xf32>
    %49 = vector.extract_strided_slice %46 {offsets = [0, 0], sizes = [8, 128], strides = [1, 1]} : vector<11x128xf32> to vector<8x128xf32>
    %50 = vector.extract_strided_slice %12 {offsets = [0, 0], sizes = [1, 128], strides = [1, 1]} : vector<4x128xf32> to vector<1x128xf32>
    %51 = vector.broadcast %50 : vector<1x128xf32> to vector<8x128xf32>
    %52 = arith.mulf %49, %51 : vector<8x128xf32>
    %53 = arith.addf %48, %52 : vector<8x128xf32>
    %54 = vector.extract_strided_slice %46 {offsets = [1, 0], sizes = [8, 128], strides = [1, 1]} : vector<11x128xf32> to vector<8x128xf32>
    %55 = vector.extract_strided_slice %12 {offsets = [1, 0], sizes = [1, 128], strides = [1, 1]} : vector<4x128xf32> to vector<1x128xf32>
    %56 = vector.broadcast %55 : vector<1x128xf32> to vector<8x128xf32>
    %57 = arith.mulf %54, %56 : vector<8x128xf32>
    %58 = arith.addf %53, %57 : vector<8x128xf32>
    %59 = vector.extract_strided_slice %46 {offsets = [2, 0], sizes = [8, 128], strides = [1, 1]} : vector<11x128xf32> to vector<8x128xf32>
    %60 = vector.extract_strided_slice %12 {offsets = [2, 0], sizes = [1, 128], strides = [1, 1]} : vector<4x128xf32> to vector<1x128xf32>
    %61 = vector.broadcast %60 : vector<1x128xf32> to vector<8x128xf32>
    %62 = arith.mulf %59, %61 : vector<8x128xf32>
    %63 = arith.addf %58, %62 : vector<8x128xf32>
    %64 = vector.extract_strided_slice %46 {offsets = [3, 0], sizes = [8, 128], strides = [1, 1]} : vector<11x128xf32> to vector<8x128xf32>
    %65 = vector.extract_strided_slice %12 {offsets = [3, 0], sizes = [1, 128], strides = [1, 1]} : vector<4x128xf32> to vector<1x128xf32>
    %66 = vector.broadcast %65 : vector<1x128xf32> to vector<8x128xf32>
    %67 = arith.mulf %64, %66 : vector<8x128xf32>
    %68 = arith.addf %63, %67 : vector<8x128xf32>
    %cst_22 = arith.constant 0.000000e+00 : f32
    %69 = vector.broadcast %cst_22 : f32 to vector<8x128xf32>
    %70 = arith.subf %69, %68 : vector<8x128xf32>
    %71 = math.exp %70 : vector<8x128xf32>
    %cst_23 = arith.constant 1.000000e+00 : f32
    %72 = vector.broadcast %cst_23 : f32 to vector<8x128xf32>
    %73 = arith.addf %72, %71 : vector<8x128xf32>
    %cst_24 = arith.constant 1.000000e+00 : f32
    %74 = vector.broadcast %cst_24 : f32 to vector<8x128xf32>
    %75 = arith.divf %74, %73 : vector<8x128xf32>
    %76 = arith.mulf %68, %75 : vector<8x128xf32>
    %cst_25 = arith.constant dense<0.000000e+00> : vector<8x128xf32>
    %77 = tpu.matmul %76, %3, %cst_25 {dimension_numbers = #tpu.dot_dimension_numbers<[1], [0], [0], [1], [0, 0, 1, 1], [], []>, precision = #tpu.contract_precision<fp32>} : vector<8x128xf32>, vector<128x128xf32>, vector<8x128xf32> -> vector<8x128xf32>
    %78 = vector.broadcast %8 : vector<1x128xf32> to vector<8x128xf32>
    %79 = arith.addf %77, %78 : vector<8x128xf32>
    %cst_26 = arith.constant 2.000000e+01 : f32
    %80 = vector.broadcast %cst_26 : f32 to vector<8x128xf32>
    %81 = arith.cmpf ogt, %79, %80 : vector<8x128xf32>
    %82 = math.exp %79 : vector<8x128xf32>
    %cst_27 = arith.constant 1.000000e+00 : f32
    %83 = vector.broadcast %cst_27 : f32 to vector<8x128xf32>
    %84 = arith.addf %83, %82 : vector<8x128xf32>
    %85 = math.log %84 : vector<8x128xf32>
    %86 = arith.select %81, %79, %85 : vector<8x128xi1>, vector<8x128xf32>
    %87 = arith.mulf %86, %76 : vector<8x128xf32>
    %cst_28 = arith.constant dense<0.000000e+00> : vector<128x8xf32>
    %88 = tpu.matmul %4, %76, %cst_28 {dimension_numbers = #tpu.dot_dimension_numbers<[1], [1], [0], [0], [0, 0, 1, 0], [], []>, precision = #tpu.contract_precision<fp32>} : vector<128x128xf32>, vector<8x128xf32>, vector<128x8xf32> -> vector<128x8xf32>
    %cst_29 = arith.constant 0.000000e+00 : f32
    %89 = vector.broadcast %cst_29 : f32 to vector<16x128xf32>
    %90 = vector.extract_strided_slice %86 {offsets = [0, 0], sizes = [1, 128], strides = [1, 1]} : vector<8x128xf32> to vector<1x128xf32>
    %91 = vector.broadcast %90 : vector<1x128xf32> to vector<16x128xf32>
    %92 = arith.mulf %91, %6 : vector<16x128xf32>
    %93 = math.exp %92 : vector<16x128xf32>
    %94 = vector.extract_strided_slice %88 {offsets = [0, 0], sizes = [32, 1], strides = [1, 1]} : vector<128x8xf32> to vector<32x1xf32>
    %95 = vector.shape_cast %94 : vector<32x1xf32> to vector<32x1xf32>
    %96 = vector.broadcast %95 : vector<32x1xf32> to vector<32x32xf32>
    %97 = vector.extract_strided_slice %88 {offsets = [32, 0], sizes = [32, 1], strides = [1, 1]} : vector<128x8xf32> to vector<32x1xf32>
    %98 = vector.shape_cast %97 : vector<32x1xf32> to vector<32x1xf32>
    %99 = vector.broadcast %98 : vector<32x1xf32> to vector<32x32xf32>
    %100 = vector.extract_strided_slice %88 {offsets = [64, 0], sizes = [32, 1], strides = [1, 1]} : vector<128x8xf32> to vector<32x1xf32>
    %101 = vector.shape_cast %100 : vector<32x1xf32> to vector<32x1xf32>
    %102 = vector.broadcast %101 : vector<32x1xf32> to vector<32x32xf32>
    %103 = vector.extract_strided_slice %88 {offsets = [96, 0], sizes = [32, 1], strides = [1, 1]} : vector<128x8xf32> to vector<32x1xf32>
    %104 = vector.shape_cast %103 : vector<32x1xf32> to vector<32x1xf32>
    %105 = vector.broadcast %104 : vector<32x1xf32> to vector<32x32xf32>
    %106 = tpu.concatenate %96, %99, %102, %105 in 1 : vector<32x32xf32>, vector<32x32xf32>, vector<32x32xf32>, vector<32x32xf32> -> vector<32x128xf32>
    %107 = arith.mulf %93, %89 : vector<16x128xf32>
    %108 = vector.extract_strided_slice %87 {offsets = [0, 0], sizes = [1, 128], strides = [1, 1]} : vector<8x128xf32> to vector<1x128xf32>
    %109 = vector.extract_strided_slice %106 {offsets = [0, 0], sizes = [16, 128], strides = [1, 1]} : vector<32x128xf32> to vector<16x128xf32>
    %110 = vector.broadcast %108 : vector<1x128xf32> to vector<16x128xf32>
    %111 = arith.mulf %110, %109 : vector<16x128xf32>
    %112 = arith.addf %107, %111 : vector<16x128xf32>
    %113 = vector.extract_strided_slice %106 {offsets = [16, 0], sizes = [16, 128], strides = [1, 1]} : vector<32x128xf32> to vector<16x128xf32>
    %114 = arith.mulf %112, %113 : vector<16x128xf32>
    %cst_30 = arith.constant dense<0.000000e+00> : vector<128xf32>
    %115 = vector.multi_reduction <add>, %114, %cst_30 [0] : vector<16x128xf32> to vector<128xf32>
    %116 = vector.shape_cast %115 : vector<128xf32> to vector<1x128xf32>
    %117 = vector.extract_strided_slice %86 {offsets = [1, 0], sizes = [1, 128], strides = [1, 1]} : vector<8x128xf32> to vector<1x128xf32>
    %118 = vector.broadcast %117 : vector<1x128xf32> to vector<16x128xf32>
    %119 = arith.mulf %118, %6 : vector<16x128xf32>
    %120 = math.exp %119 : vector<16x128xf32>
    %121 = vector.extract_strided_slice %88 {offsets = [0, 1], sizes = [32, 1], strides = [1, 1]} : vector<128x8xf32> to vector<32x1xf32>
    %122 = vector.shape_cast %121 : vector<32x1xf32> to vector<32x1xf32>
    %123 = vector.broadcast %122 : vector<32x1xf32> to vector<32x32xf32>
    %124 = vector.extract_strided_slice %88 {offsets = [32, 1], sizes = [32, 1], strides = [1, 1]} : vector<128x8xf32> to vector<32x1xf32>
    %125 = vector.shape_cast %124 : vector<32x1xf32> to vector<32x1xf32>
    %126 = vector.broadcast %125 : vector<32x1xf32> to vector<32x32xf32>
    %127 = vector.extract_strided_slice %88 {offsets = [64, 1], sizes = [32, 1], strides = [1, 1]} : vector<128x8xf32> to vector<32x1xf32>
    %128 = vector.shape_cast %127 : vector<32x1xf32> to vector<32x1xf32>
    %129 = vector.broadcast %128 : vector<32x1xf32> to vector<32x32xf32>
    %130 = vector.extract_strided_slice %88 {offsets = [96, 1], sizes = [32, 1], strides = [1, 1]} : vector<128x8xf32> to vector<32x1xf32>
    %131 = vector.shape_cast %130 : vector<32x1xf32> to vector<32x1xf32>
    %132 = vector.broadcast %131 : vector<32x1xf32> to vector<32x32xf32>
    %133 = tpu.concatenate %123, %126, %129, %132 in 1 : vector<32x32xf32>, vector<32x32xf32>, vector<32x32xf32>, vector<32x32xf32> -> vector<32x128xf32>
    %134 = arith.mulf %120, %112 : vector<16x128xf32>
    %135 = vector.extract_strided_slice %87 {offsets = [1, 0], sizes = [1, 128], strides = [1, 1]} : vector<8x128xf32> to vector<1x128xf32>
    %136 = vector.extract_strided_slice %133 {offsets = [0, 0], sizes = [16, 128], strides = [1, 1]} : vector<32x128xf32> to vector<16x128xf32>
    %137 = vector.broadcast %135 : vector<1x128xf32> to vector<16x128xf32>
    %138 = arith.mulf %137, %136 : vector<16x128xf32>
    %139 = arith.addf %134, %138 : vector<16x128xf32>
    %140 = vector.extract_strided_slice %133 {offsets = [16, 0], sizes = [16, 128], strides = [1, 1]} : vector<32x128xf32> to vector<16x128xf32>
    %141 = arith.mulf %139, %140 : vector<16x128xf32>
    %cst_31 = arith.constant dense<0.000000e+00> : vector<128xf32>
    %142 = vector.multi_reduction <add>, %141, %cst_31 [0] : vector<16x128xf32> to vector<128xf32>
    %143 = vector.shape_cast %142 : vector<128xf32> to vector<1x128xf32>
    %144 = vector.extract_strided_slice %86 {offsets = [2, 0], sizes = [1, 128], strides = [1, 1]} : vector<8x128xf32> to vector<1x128xf32>
    %145 = vector.broadcast %144 : vector<1x128xf32> to vector<16x128xf32>
    %146 = arith.mulf %145, %6 : vector<16x128xf32>
    %147 = math.exp %146 : vector<16x128xf32>
    %148 = vector.extract_strided_slice %88 {offsets = [0, 2], sizes = [32, 1], strides = [1, 1]} : vector<128x8xf32> to vector<32x1xf32>
    %149 = vector.shape_cast %148 : vector<32x1xf32> to vector<32x1xf32>
    %150 = vector.broadcast %149 : vector<32x1xf32> to vector<32x32xf32>
    %151 = vector.extract_strided_slice %88 {offsets = [32, 2], sizes = [32, 1], strides = [1, 1]} : vector<128x8xf32> to vector<32x1xf32>
    %152 = vector.shape_cast %151 : vector<32x1xf32> to vector<32x1xf32>
    %153 = vector.broadcast %152 : vector<32x1xf32> to vector<32x32xf32>
    %154 = vector.extract_strided_slice %88 {offsets = [64, 2], sizes = [32, 1], strides = [1, 1]} : vector<128x8xf32> to vector<32x1xf32>
    %155 = vector.shape_cast %154 : vector<32x1xf32> to vector<32x1xf32>
    %156 = vector.broadcast %155 : vector<32x1xf32> to vector<32x32xf32>
    %157 = vector.extract_strided_slice %88 {offsets = [96, 2], sizes = [32, 1], strides = [1, 1]} : vector<128x8xf32> to vector<32x1xf32>
    %158 = vector.shape_cast %157 : vector<32x1xf32> to vector<32x1xf32>
    %159 = vector.broadcast %158 : vector<32x1xf32> to vector<32x32xf32>
    %160 = tpu.concatenate %150, %153, %156, %159 in 1 : vector<32x32xf32>, vector<32x32xf32>, vector<32x32xf32>, vector<32x32xf32> -> vector<32x128xf32>
    %161 = arith.mulf %147, %139 : vector<16x128xf32>
    %162 = vector.extract_strided_slice %87 {offsets = [2, 0], sizes = [1, 128], strides = [1, 1]} : vector<8x128xf32> to vector<1x128xf32>
    %163 = vector.extract_strided_slice %160 {offsets = [0, 0], sizes = [16, 128], strides = [1, 1]} : vector<32x128xf32> to vector<16x128xf32>
    %164 = vector.broadcast %162 : vector<1x128xf32> to vector<16x128xf32>
    %165 = arith.mulf %164, %163 : vector<16x128xf32>
    %166 = arith.addf %161, %165 : vector<16x128xf32>
    %167 = vector.extract_strided_slice %160 {offsets = [16, 0], sizes = [16, 128], strides = [1, 1]} : vector<32x128xf32> to vector<16x128xf32>
    %168 = arith.mulf %166, %167 : vector<16x128xf32>
    %cst_32 = arith.constant dense<0.000000e+00> : vector<128xf32>
    %169 = vector.multi_reduction <add>, %168, %cst_32 [0] : vector<16x128xf32> to vector<128xf32>
    %170 = vector.shape_cast %169 : vector<128xf32> to vector<1x128xf32>
    %171 = vector.extract_strided_slice %86 {offsets = [3, 0], sizes = [1, 128], strides = [1, 1]} : vector<8x128xf32> to vector<1x128xf32>
    %172 = vector.broadcast %171 : vector<1x128xf32> to vector<16x128xf32>
    %173 = arith.mulf %172, %6 : vector<16x128xf32>
    %174 = math.exp %173 : vector<16x128xf32>
    %175 = vector.extract_strided_slice %88 {offsets = [0, 3], sizes = [32, 1], strides = [1, 1]} : vector<128x8xf32> to vector<32x1xf32>
    %176 = vector.shape_cast %175 : vector<32x1xf32> to vector<32x1xf32>
    %177 = vector.broadcast %176 : vector<32x1xf32> to vector<32x32xf32>
    %178 = vector.extract_strided_slice %88 {offsets = [32, 3], sizes = [32, 1], strides = [1, 1]} : vector<128x8xf32> to vector<32x1xf32>
    %179 = vector.shape_cast %178 : vector<32x1xf32> to vector<32x1xf32>
    %180 = vector.broadcast %179 : vector<32x1xf32> to vector<32x32xf32>
    %181 = vector.extract_strided_slice %88 {offsets = [64, 3], sizes = [32, 1], strides = [1, 1]} : vector<128x8xf32> to vector<32x1xf32>
    %182 = vector.shape_cast %181 : vector<32x1xf32> to vector<32x1xf32>
    %183 = vector.broadcast %182 : vector<32x1xf32> to vector<32x32xf32>
    %184 = vector.extract_strided_slice %88 {offsets = [96, 3], sizes = [32, 1], strides = [1, 1]} : vector<128x8xf32> to vector<32x1xf32>
    %185 = vector.shape_cast %184 : vector<32x1xf32> to vector<32x1xf32>
    %186 = vector.broadcast %185 : vector<32x1xf32> to vector<32x32xf32>
    %187 = tpu.concatenate %177, %180, %183, %186 in 1 : vector<32x32xf32>, vector<32x32xf32>, vector<32x32xf32>, vector<32x32xf32> -> vector<32x128xf32>
    %188 = arith.mulf %174, %166 : vector<16x128xf32>
    %189 = vector.extract_strided_slice %87 {offsets = [3, 0], sizes = [1, 128], strides = [1, 1]} : vector<8x128xf32> to vector<1x128xf32>
    %190 = vector.extract_strided_slice %187 {offsets = [0, 0], sizes = [16, 128], strides = [1, 1]} : vector<32x128xf32> to vector<16x128xf32>
    %191 = vector.broadcast %189 : vector<1x128xf32> to vector<16x128xf32>
    %192 = arith.mulf %191, %190 : vector<16x128xf32>
    %193 = arith.addf %188, %192 : vector<16x128xf32>
    %194 = vector.extract_strided_slice %187 {offsets = [16, 0], sizes = [16, 128], strides = [1, 1]} : vector<32x128xf32> to vector<16x128xf32>
    %195 = arith.mulf %193, %194 : vector<16x128xf32>
    %cst_33 = arith.constant dense<0.000000e+00> : vector<128xf32>
    %196 = vector.multi_reduction <add>, %195, %cst_33 [0] : vector<16x128xf32> to vector<128xf32>
    %197 = vector.shape_cast %196 : vector<128xf32> to vector<1x128xf32>
    %198 = vector.extract_strided_slice %86 {offsets = [4, 0], sizes = [1, 128], strides = [1, 1]} : vector<8x128xf32> to vector<1x128xf32>
    %199 = vector.broadcast %198 : vector<1x128xf32> to vector<16x128xf32>
    %200 = arith.mulf %199, %6 : vector<16x128xf32>
    %201 = math.exp %200 : vector<16x128xf32>
    %202 = vector.extract_strided_slice %88 {offsets = [0, 4], sizes = [32, 1], strides = [1, 1]} : vector<128x8xf32> to vector<32x1xf32>
    %203 = vector.shape_cast %202 : vector<32x1xf32> to vector<32x1xf32>
    %204 = vector.broadcast %203 : vector<32x1xf32> to vector<32x32xf32>
    %205 = vector.extract_strided_slice %88 {offsets = [32, 4], sizes = [32, 1], strides = [1, 1]} : vector<128x8xf32> to vector<32x1xf32>
    %206 = vector.shape_cast %205 : vector<32x1xf32> to vector<32x1xf32>
    %207 = vector.broadcast %206 : vector<32x1xf32> to vector<32x32xf32>
    %208 = vector.extract_strided_slice %88 {offsets = [64, 4], sizes = [32, 1], strides = [1, 1]} : vector<128x8xf32> to vector<32x1xf32>
    %209 = vector.shape_cast %208 : vector<32x1xf32> to vector<32x1xf32>
    %210 = vector.broadcast %209 : vector<32x1xf32> to vector<32x32xf32>
    %211 = vector.extract_strided_slice %88 {offsets = [96, 4], sizes = [32, 1], strides = [1, 1]} : vector<128x8xf32> to vector<32x1xf32>
    %212 = vector.shape_cast %211 : vector<32x1xf32> to vector<32x1xf32>
    %213 = vector.broadcast %212 : vector<32x1xf32> to vector<32x32xf32>
    %214 = tpu.concatenate %204, %207, %210, %213 in 1 : vector<32x32xf32>, vector<32x32xf32>, vector<32x32xf32>, vector<32x32xf32> -> vector<32x128xf32>
    %215 = arith.mulf %201, %193 : vector<16x128xf32>
    %216 = vector.extract_strided_slice %87 {offsets = [4, 0], sizes = [1, 128], strides = [1, 1]} : vector<8x128xf32> to vector<1x128xf32>
    %217 = vector.extract_strided_slice %214 {offsets = [0, 0], sizes = [16, 128], strides = [1, 1]} : vector<32x128xf32> to vector<16x128xf32>
    %218 = vector.broadcast %216 : vector<1x128xf32> to vector<16x128xf32>
    %219 = arith.mulf %218, %217 : vector<16x128xf32>
    %220 = arith.addf %215, %219 : vector<16x128xf32>
    %221 = vector.extract_strided_slice %214 {offsets = [16, 0], sizes = [16, 128], strides = [1, 1]} : vector<32x128xf32> to vector<16x128xf32>
    %222 = arith.mulf %220, %221 : vector<16x128xf32>
    %cst_34 = arith.constant dense<0.000000e+00> : vector<128xf32>
    %223 = vector.multi_reduction <add>, %222, %cst_34 [0] : vector<16x128xf32> to vector<128xf32>
    %224 = vector.shape_cast %223 : vector<128xf32> to vector<1x128xf32>
    %225 = vector.extract_strided_slice %86 {offsets = [5, 0], sizes = [1, 128], strides = [1, 1]} : vector<8x128xf32> to vector<1x128xf32>
    %226 = vector.broadcast %225 : vector<1x128xf32> to vector<16x128xf32>
    %227 = arith.mulf %226, %6 : vector<16x128xf32>
    %228 = math.exp %227 : vector<16x128xf32>
    %229 = vector.extract_strided_slice %88 {offsets = [0, 5], sizes = [32, 1], strides = [1, 1]} : vector<128x8xf32> to vector<32x1xf32>
    %230 = vector.shape_cast %229 : vector<32x1xf32> to vector<32x1xf32>
    %231 = vector.broadcast %230 : vector<32x1xf32> to vector<32x32xf32>
    %232 = vector.extract_strided_slice %88 {offsets = [32, 5], sizes = [32, 1], strides = [1, 1]} : vector<128x8xf32> to vector<32x1xf32>
    %233 = vector.shape_cast %232 : vector<32x1xf32> to vector<32x1xf32>
    %234 = vector.broadcast %233 : vector<32x1xf32> to vector<32x32xf32>
    %235 = vector.extract_strided_slice %88 {offsets = [64, 5], sizes = [32, 1], strides = [1, 1]} : vector<128x8xf32> to vector<32x1xf32>
    %236 = vector.shape_cast %235 : vector<32x1xf32> to vector<32x1xf32>
    %237 = vector.broadcast %236 : vector<32x1xf32> to vector<32x32xf32>
    %238 = vector.extract_strided_slice %88 {offsets = [96, 5], sizes = [32, 1], strides = [1, 1]} : vector<128x8xf32> to vector<32x1xf32>
    %239 = vector.shape_cast %238 : vector<32x1xf32> to vector<32x1xf32>
    %240 = vector.broadcast %239 : vector<32x1xf32> to vector<32x32xf32>
    %241 = tpu.concatenate %231, %234, %237, %240 in 1 : vector<32x32xf32>, vector<32x32xf32>, vector<32x32xf32>, vector<32x32xf32> -> vector<32x128xf32>
    %242 = arith.mulf %228, %220 : vector<16x128xf32>
    %243 = vector.extract_strided_slice %87 {offsets = [5, 0], sizes = [1, 128], strides = [1, 1]} : vector<8x128xf32> to vector<1x128xf32>
    %244 = vector.extract_strided_slice %241 {offsets = [0, 0], sizes = [16, 128], strides = [1, 1]} : vector<32x128xf32> to vector<16x128xf32>
    %245 = vector.broadcast %243 : vector<1x128xf32> to vector<16x128xf32>
    %246 = arith.mulf %245, %244 : vector<16x128xf32>
    %247 = arith.addf %242, %246 : vector<16x128xf32>
    %248 = vector.extract_strided_slice %241 {offsets = [16, 0], sizes = [16, 128], strides = [1, 1]} : vector<32x128xf32> to vector<16x128xf32>
    %249 = arith.mulf %247, %248 : vector<16x128xf32>
    %cst_35 = arith.constant dense<0.000000e+00> : vector<128xf32>
    %250 = vector.multi_reduction <add>, %249, %cst_35 [0] : vector<16x128xf32> to vector<128xf32>
    %251 = vector.shape_cast %250 : vector<128xf32> to vector<1x128xf32>
    %252 = vector.extract_strided_slice %86 {offsets = [6, 0], sizes = [1, 128], strides = [1, 1]} : vector<8x128xf32> to vector<1x128xf32>
    %253 = vector.broadcast %252 : vector<1x128xf32> to vector<16x128xf32>
    %254 = arith.mulf %253, %6 : vector<16x128xf32>
    %255 = math.exp %254 : vector<16x128xf32>
    %256 = vector.extract_strided_slice %88 {offsets = [0, 6], sizes = [32, 1], strides = [1, 1]} : vector<128x8xf32> to vector<32x1xf32>
    %257 = vector.shape_cast %256 : vector<32x1xf32> to vector<32x1xf32>
    %258 = vector.broadcast %257 : vector<32x1xf32> to vector<32x32xf32>
    %259 = vector.extract_strided_slice %88 {offsets = [32, 6], sizes = [32, 1], strides = [1, 1]} : vector<128x8xf32> to vector<32x1xf32>
    %260 = vector.shape_cast %259 : vector<32x1xf32> to vector<32x1xf32>
    %261 = vector.broadcast %260 : vector<32x1xf32> to vector<32x32xf32>
    %262 = vector.extract_strided_slice %88 {offsets = [64, 6], sizes = [32, 1], strides = [1, 1]} : vector<128x8xf32> to vector<32x1xf32>
    %263 = vector.shape_cast %262 : vector<32x1xf32> to vector<32x1xf32>
    %264 = vector.broadcast %263 : vector<32x1xf32> to vector<32x32xf32>
    %265 = vector.extract_strided_slice %88 {offsets = [96, 6], sizes = [32, 1], strides = [1, 1]} : vector<128x8xf32> to vector<32x1xf32>
    %266 = vector.shape_cast %265 : vector<32x1xf32> to vector<32x1xf32>
    %267 = vector.broadcast %266 : vector<32x1xf32> to vector<32x32xf32>
    %268 = tpu.concatenate %258, %261, %264, %267 in 1 : vector<32x32xf32>, vector<32x32xf32>, vector<32x32xf32>, vector<32x32xf32> -> vector<32x128xf32>
    %269 = arith.mulf %255, %247 : vector<16x128xf32>
    %270 = vector.extract_strided_slice %87 {offsets = [6, 0], sizes = [1, 128], strides = [1, 1]} : vector<8x128xf32> to vector<1x128xf32>
    %271 = vector.extract_strided_slice %268 {offsets = [0, 0], sizes = [16, 128], strides = [1, 1]} : vector<32x128xf32> to vector<16x128xf32>
    %272 = vector.broadcast %270 : vector<1x128xf32> to vector<16x128xf32>
    %273 = arith.mulf %272, %271 : vector<16x128xf32>
    %274 = arith.addf %269, %273 : vector<16x128xf32>
    %275 = vector.extract_strided_slice %268 {offsets = [16, 0], sizes = [16, 128], strides = [1, 1]} : vector<32x128xf32> to vector<16x128xf32>
    %276 = arith.mulf %274, %275 : vector<16x128xf32>
    %cst_36 = arith.constant dense<0.000000e+00> : vector<128xf32>
    %277 = vector.multi_reduction <add>, %276, %cst_36 [0] : vector<16x128xf32> to vector<128xf32>
    %278 = vector.shape_cast %277 : vector<128xf32> to vector<1x128xf32>
    %279 = vector.extract_strided_slice %86 {offsets = [7, 0], sizes = [1, 128], strides = [1, 1]} : vector<8x128xf32> to vector<1x128xf32>
    %280 = vector.broadcast %279 : vector<1x128xf32> to vector<16x128xf32>
    %281 = arith.mulf %280, %6 : vector<16x128xf32>
    %282 = math.exp %281 : vector<16x128xf32>
    %283 = vector.extract_strided_slice %88 {offsets = [0, 7], sizes = [32, 1], strides = [1, 1]} : vector<128x8xf32> to vector<32x1xf32>
    %284 = vector.shape_cast %283 : vector<32x1xf32> to vector<32x1xf32>
    %285 = vector.broadcast %284 : vector<32x1xf32> to vector<32x32xf32>
    %286 = vector.extract_strided_slice %88 {offsets = [32, 7], sizes = [32, 1], strides = [1, 1]} : vector<128x8xf32> to vector<32x1xf32>
    %287 = vector.shape_cast %286 : vector<32x1xf32> to vector<32x1xf32>
    %288 = vector.broadcast %287 : vector<32x1xf32> to vector<32x32xf32>
    %289 = vector.extract_strided_slice %88 {offsets = [64, 7], sizes = [32, 1], strides = [1, 1]} : vector<128x8xf32> to vector<32x1xf32>
    %290 = vector.shape_cast %289 : vector<32x1xf32> to vector<32x1xf32>
    %291 = vector.broadcast %290 : vector<32x1xf32> to vector<32x32xf32>
    %292 = vector.extract_strided_slice %88 {offsets = [96, 7], sizes = [32, 1], strides = [1, 1]} : vector<128x8xf32> to vector<32x1xf32>
    %293 = vector.shape_cast %292 : vector<32x1xf32> to vector<32x1xf32>
    %294 = vector.broadcast %293 : vector<32x1xf32> to vector<32x32xf32>
    %295 = tpu.concatenate %285, %288, %291, %294 in 1 : vector<32x32xf32>, vector<32x32xf32>, vector<32x32xf32>, vector<32x32xf32> -> vector<32x128xf32>
    %296 = arith.mulf %282, %274 : vector<16x128xf32>
    %297 = vector.extract_strided_slice %87 {offsets = [7, 0], sizes = [1, 128], strides = [1, 1]} : vector<8x128xf32> to vector<1x128xf32>
    %298 = vector.extract_strided_slice %295 {offsets = [0, 0], sizes = [16, 128], strides = [1, 1]} : vector<32x128xf32> to vector<16x128xf32>
    %299 = vector.broadcast %297 : vector<1x128xf32> to vector<16x128xf32>
    %300 = arith.mulf %299, %298 : vector<16x128xf32>
    %301 = arith.addf %296, %300 : vector<16x128xf32>
    %302 = vector.extract_strided_slice %295 {offsets = [16, 0], sizes = [16, 128], strides = [1, 1]} : vector<32x128xf32> to vector<16x128xf32>
    %303 = arith.mulf %301, %302 : vector<16x128xf32>
    %cst_37 = arith.constant dense<0.000000e+00> : vector<128xf32>
    %304 = vector.multi_reduction <add>, %303, %cst_37 [0] : vector<16x128xf32> to vector<128xf32>
    %305 = vector.shape_cast %304 : vector<128xf32> to vector<1x128xf32>
    %306 = tpu.concatenate %116, %143, %170, %197, %224, %251, %278, %305 in 0 : vector<1x128xf32>, vector<1x128xf32>, vector<1x128xf32>, vector<1x128xf32>, vector<1x128xf32>, vector<1x128xf32>, vector<1x128xf32>, vector<1x128xf32> -> vector<8x128xf32>
    %307 = vector.broadcast %9 : vector<1x128xf32> to vector<8x128xf32>
    %308 = arith.mulf %76, %307 : vector<8x128xf32>
    %309 = arith.addf %306, %308 : vector<8x128xf32>
    %310 = vector.extract_strided_slice %309 {offsets = [0, 0], sizes = [8, 64], strides = [1, 1]} : vector<8x128xf32> to vector<8x64xf32>
    %311 = vector.extract_strided_slice %309 {offsets = [0, 64], sizes = [8, 64], strides = [1, 1]} : vector<8x128xf32> to vector<8x64xf32>
    %cst_38 = arith.constant dense<0.000000e+00> : vector<8x64xf32>
    %312 = tpu.matmul %42, %311, %cst_38 {dimension_numbers = #tpu.dot_dimension_numbers<[1], [0], [0], [1], [0, 0, 1, 1], [], []>, precision = #tpu.contract_precision<fp32>} : vector<8x8xf32>, vector<8x64xf32>, vector<8x64xf32> -> vector<8x64xf32>
    %313 = arith.addf %310, %312 : vector<8x64xf32>
    %314 = arith.mulf %313, %35 : vector<8x64xf32>
    %cst_39 = arith.constant dense<0.000000e+00> : vector<8x64xf32>
    %315 = tpu.matmul %314, %5, %cst_39 {dimension_numbers = #tpu.dot_dimension_numbers<[1], [0], [0], [1], [0, 0, 1, 1], [], []>, precision = #tpu.contract_precision<fp32>} : vector<8x64xf32>, vector<64x64xf32>, vector<8x64xf32> -> vector<8x64xf32>
    %316 = vector.broadcast %11 : vector<1x64xf32> to vector<8x64xf32>
    %317 = arith.addf %315, %316 : vector<8x64xf32>
    %318 = arith.addf %0, %317 : vector<8x64xf32>
    %c0_40 = arith.constant 0 : index
    %c0_41 = arith.constant 0 : index
    %319 = vector.load %arg3[%c0_40, %c0_41] : memref<8x64xf32, #tpu.memory_space<vmem>>, vector<8x64xf32>
    tpu.vector_store %arg3[%c0_40, %c0_41], %318 {strides = array<i32>} : memref<8x64xf32, #tpu.memory_space<vmem>>, vector<8x64xf32>,
    return
  }
  func.func @transform_0(%arg0: i32) -> (i32, i32) {
    %c0_i32 = arith.constant 0 : i32
    %c0_i32_0 = arith.constant 0 : i32
    %c0_i32_1 = arith.constant 0 : i32
    return %c0_i32, %c0_i32_0 : i32, i32
  }
  func.func @transform_1(%arg0: i32) -> (i32, i32) {
    %c0_i32 = arith.constant 0 : i32
    %c0_i32_0 = arith.constant 0 : i32
    %c0_i32_1 = arith.constant 0 : i32
    return %c0_i32, %c0_i32_0 : i32, i32
  }
  func.func @transform_2(%arg0: i32) -> (i32, i32) {
    %c0_i32 = arith.constant 0 : i32
    %c0_i32_0 = arith.constant 0 : i32
    %c0_i32_1 = arith.constant 0 : i32
    return %c0_i32, %c0_i32_0 : i32, i32
  }
}

</mosaic_0001>

<llo_original>
// kernel: mamba_head_forward.1
$region0: #{mamba_head_forward.1}
  #allocation0 [shape = 'u32[]', space=smem, size = 0x4, offset = 0x4, fixed_abs, tag = 'smem constant byte address 0x4 - core index']
  #allocation1 [shape = 'u32[144,128]{1,0:T(1,128)}', space=vmem, size = 0x12000, scoped, tag = 'internal scratch']
  %s0 = inlined_call_operand.vmem [shape: f32[8,64], index: 0, kind: input, shape index: {}]
  %s1 = inlined_call_operand.hbm [shape: f32[480,128], index: 1, kind: input, shape index: {}]
  %s2 = inlined_call_operand.vmem [shape: f32[8,64], index: 2, kind: output, shape index: {}]
  %s3 = sld [smem:[#allocation0]]
  $region22: #{mamba_head_forward.1} parent=0
    _
  %s5 = ssub.s32 1, %s3
  %s6 = scalar_select 0, %s5, %s3
  $region1: #{mamba_head_forward.1} parent=0
    #allocation2 [shape = 'u8[245760]{0}', space=vmem, size = 0x3c000, scoped, tag = 'input window, operand 1, single buffered']
    #allocation3 [shape = 's32[1]{0}', space=sflag, size = 0x4, scoped, tag = 'scoped memory for mamba_head_forward.1']
    %7 = vsyncpa [#allocation3], 0
    // Predicated region
    $region2: #{mamba_head_forward.1} parent=1 // pred_check
      _
    $region3: #{mamba_head_forward.1} parent=1 // pred_check_branch
      %9 = sbr.rel (0) target = $region5
    $region4: #{mamba_head_forward.1} parent=1 // pred_region
      _
    $region5: #{mamba_head_forward.1} parent=1 // pred_fallthru
      _
    // Predicated region
    $region6: #{mamba_head_forward.1} parent=1 // pred_check
      _
    $region7: #{mamba_head_forward.1} parent=1 // pred_check_branch
      %11 = sbr.rel (0) target = $region9
    $region8: #{mamba_head_forward.1} parent=1 // pred_region
      %s13 = ssub.s32 7680, 7680
      %14 = vsyncadd [#allocation3], %s13
      %s15 = sshll.u32 [#allocation2], 4
      %s16 = int_to_ptr.vmem [resolvable:$true] %s15
      %21 = dma.hbm_to_vmem [thread:$0]  %s1, 7680, %s16, [#allocation3], 128, 128, 8
    $region9: #{mamba_head_forward.1} parent=1 // pred_fallthru
      _
    // Predicated region
    $region10: #{mamba_head_forward.1} parent=1 // pred_check
      _
    $region11: #{mamba_head_forward.1} parent=1 // pred_check_branch
      %23 = sbr.rel (0) target = $region13
    $region12: #{mamba_head_forward.1} parent=1 // pred_region
      %24 = dma.done [#allocation3], 7680
    $region13: #{mamba_head_forward.1} parent=1 // pred_fallthru
      _
    %v25 = vld [vmem:[%s0] sm:$0xff]
    %v26 = vld [vmem:[#allocation2] sm:$0xff]
    %v27 = vld [vmem:[#allocation2 + $0x8] sm:$0xff]
    %v28 = vld [vmem:[#allocation2 + $0x10] sm:$0xff]
    %v29 = vld [vmem:[#allocation2 + $0x18] sm:$0xff]
    %v30 = vld [vmem:[#allocation2 + $0x20] sm:$0xff]
    %v31 = vld [vmem:[#allocation2 + $0x28] sm:$0xff]
    %v32 = vld [vmem:[#allocation2 + $0x30] sm:$0xff]
    %v33 = vld [vmem:[#allocation2 + $0x38] sm:$0xff]
    %v34 = vld [vmem:[#allocation2 + $0x40] sm:$0xff]
    %v35 = vld [vmem:[#allocation2 + $0x48] sm:$0xff]
    %v36 = vld [vmem:[#allocation2 + $0x50] sm:$0xff]
    %v37 = vld [vmem:[#allocation2 + $0x58] sm:$0xff]
    %v38 = vld [vmem:[#allocation2 + $0x60] sm:$0xff]
    %v39 = vld [vmem:[#allocation2 + $0x68] sm:$0xff]
    %v40 = vld [vmem:[#allocation2 + $0x70] sm:$0xff]
    %v41 = vld [vmem:[#allocation2 + $0x78] sm:$0xff]
    %v42 = vld [vmem:[#allocation2 + $0x80] sm:$0xff]
    %v43 = vld [vmem:[#allocation2 + $0x88] sm:$0xff]
    %v44 = vld [vmem:[#allocation2 + $0x90] sm:$0xff]
    %v45 = vld [vmem:[#allocation2 + $0x98] sm:$0xff]
    %v46 = vld [vmem:[#allocation2 + $0xa0] sm:$0xff]
    %v47 = vld [vmem:[#allocation2 + $0xa8] sm:$0xff]
    %v48 = vld [vmem:[#allocation2 + $0xb0] sm:$0xff]
    %v49 = vld [vmem:[#allocation2 + $0xb8] sm:$0xff]
    %v50 = vld [vmem:[#allocation2 + $0xc0] sm:$0xff]
    %v51 = vld [vmem:[#allocation2 + $0xc8] sm:$0xff]
    %v52 = vld [vmem:[#allocation2 + $0xd0] sm:$0xff]
    %v53 = vld [vmem:[#allocation2 + $0xd8] sm:$0xff]
    %v54 = vld [vmem:[#allocation2 + $0xe0] sm:$0xff]
    %v55 = vld [vmem:[#allocation2 + $0xe8] sm:$0xff]
    %v56 = vld [vmem:[#allocation2 + $0xf0] sm:$0xff]
    %v57 = vld [vmem:[#allocation2 + $0xf8] sm:$0xff]
    %v58 = vld [vmem:[#allocation2 + $0x100] sm:$0xff]
    %v59 = vld [vmem:[#allocation2 + $0x108] sm:$0xff]
    %v60 = vld [vmem:[#allocation2 + $0x110] sm:$0xff]
    %v61 = vld [vmem:[#allocation2 + $0x118] sm:$0xff]
    %v62 = vld [vmem:[#allocation2 + $0x120] sm:$0xff]
    %v63 = vld [vmem:[#allocation2 + $0x128] sm:$0xff]
    %v64 = vld [vmem:[#allocation2 + $0x130] sm:$0xff]
    %v65 = vld [vmem:[#allocation2 + $0x138] sm:$0xff]
    %v66 = vld [vmem:[#allocation2 + $0x140] sm:$0xff]
    %v67 = vld [vmem:[#allocation2 + $0x148] sm:$0xff]
    %v68 = vld [vmem:[#allocation2 + $0x150] sm:$0xff]
    %v69 = vld [vmem:[#allocation2 + $0x158] sm:$0xff]
    %v70 = vld [vmem:[#allocation2 + $0x160] sm:$0xff]
    %v71 = vld [vmem:[#allocation2 + $0x168] sm:$0xff]
    %v72 = vld [vmem:[#allocation2 + $0x170] sm:$0xff]
    %v73 = vld [vmem:[#allocation2 + $0x178] sm:$0xff]
    %v74 = vld [vmem:[#allocation2 + $0x180] sm:$0xff]
    %v75 = vld [vmem:[#allocation2 + $0x188] sm:$0xff]
    %v76 = vld [vmem:[#allocation2 + $0x190] sm:$0xff]
    %v77 = vld [vmem:[#allocation2 + $0x198] sm:$0xff]
    %v78 = vld [vmem:[#allocation2 + $0x1a0] sm:$0xff]
    %v79 = vld [vmem:[#allocation2 + $0x1a8] sm:$0xff]
    %v80 = vld [vmem:[#allocation2 + $0x1b0] sm:$0xff]
    %v81 = vld [vmem:[#allocation2 + $0x1b8] sm:$0xff]
    %v82 = vld [vmem:[#allocation2 + $0x1c0] sm:$0xff]
    %v83 = vld [vmem:[#allocation2 + $0x1c8] sm:$0xff]
    %v84 = vld [vmem:[#allocation2 + $0x1d0] sm:$0x1]
    %v85 = vld [vmem:[#allocation2 + $0x1d1] sm:$0x1]
    %v86 = vld [vmem:[#allocation2 + $0x1d2] sm:$0x1]
    %v87 = vld [vmem:[#allocation2 + $0x1d3] sm:$0x1]
    %v88 = vld [vmem:[#allocation2 + $0x1d4] sm:$0x1]
    %v89 = vld [vmem:[#allocation2 + $0x1d8] sm:$0xf]
    %vm90 = vcmask 523264
    %v92 = vsel %vm90, %v25, 0
    %94 = vmatprep.subr.mxu0 0.0
    %v95 = vand.u32 %v26, 4294901760
    %96 = vmatpush1.msra.mxu0 %v95
    %97 = vmatprep.subr.mxu0 0.0
    %v98 = vand.u32 %v27, 4294901760
    %99 = vmatpush1.msra.mxu0 %v98
    %100 = vmatprep.subr.mxu0 0.0
    %v101 = vand.u32 %v28, 4294901760
    %102 = vmatpush1.msra.mxu0 %v101
    %103 = vmatprep.subr.mxu0 0.0
    %v104 = vand.u32 %v29, 4294901760
    %105 = vmatpush1.msra.mxu0 %v104
    %106 = vmatprep.subr.mxu0 0.0
    %v107 = vand.u32 %v30, 4294901760
    %108 = vmatpush1.msra.mxu0 %v107
    %109 = vmatprep.subr.mxu0 0.0
    %v110 = vand.u32 %v31, 4294901760
    %111 = vmatpush1.msra.mxu0 %v110
    %112 = vmatprep.subr.mxu0 0.0
    %v113 = vand.u32 %v32, 4294901760
    %114 = vmatpush1.msra.mxu0 %v113
    %115 = vmatprep.subr.mxu0 0.0
    %v116 = vand.u32 %v33, 4294901760
    %117 = vmatpush1.msra.mxu0 %v116
    %118 = vmatprep.subr.mxu0 0.0
    %119 = vmatpush1.msra.mxu0 0.0
    %120 = vmatprep.subr.mxu0 0.0
    %121 = vmatpush1.msra.mxu0 0.0
    %122 = vmatprep.subr.mxu0 0.0
    %123 = vmatpush1.msra.mxu0 0.0
    %124 = vmatprep.subr.mxu0 0.0
    %125 = vmatpush1.msra.mxu0 0.0
    %126 = vmatprep.subr.mxu0 0.0
    %127 = vmatpush1.msra.mxu0 0.0
    %128 = vmatprep.subr.mxu0 0.0
    %129 = vmatpush1.msra.mxu0 0.0
    %130 = vmatprep.subr.mxu0 0.0
    %131 = vmatpush1.msra.mxu0 0.0
    %132 = vmatprep.subr.mxu0 0.0
    %133 = vmatpush1.msra.mxu0 0.0
    %134 = vmatprep.subr.mxu0 0.0
    %135 = vmatpush1.msra.mxu0 0.0
    %136 = vmatprep.subr.mxu0 0.0
    %137 = vmatpush1.msra.mxu0 0.0
    %138 = vmatprep.subr.mxu0 0.0
    %139 = vmatpush1.msra.mxu0 0.0
    %140 = vmatprep.subr.mxu0 0.0
    %141 = vmatpush1.msra.mxu0 0.0
    %142 = vmatprep.subr.mxu0 0.0
    %143 = vmatpush1.msra.mxu0 0.0
    %144 = vmatprep.subr.mxu0 0.0
    %145 = vmatpush1.msra.mxu0 0.0
    %146 = vmatprep.subr.mxu0 0.0
    %147 = vmatpush1.msra.mxu0 0.0
    %148 = vmatprep.subr.mxu0 0.0
    %149 = vmatpush1.msra.mxu0 0.0
    %150 = vmatprep.subr.mxu0 0.0
    %151 = vmatpush1.msra.mxu0 0.0
    %152 = vmatprep.subr.mxu0 0.0
    %153 = vmatpush1.msra.mxu0 0.0
    %154 = vmatprep.subr.mxu0 0.0
    %155 = vmatpush1.msra.mxu0 0.0
    %156 = vmatprep.subr.mxu0 0.0
    %157 = vmatpush1.msra.mxu0 0.0
    %158 = vmatprep.subr.mxu0 0.0
    %159 = vmatpush1.msra.mxu0 0.0
    %160 = vmatprep.subr.mxu0 0.0
    %161 = vmatpush1.msra.mxu0 0.0
    %162 = vmatprep.subr.mxu0 0.0
    %163 = vmatpush1.msra.mxu0 0.0
    %164 = vmatprep.subr.mxu0 0.0
    %165 = vmatpush1.msra.mxu0 0.0
    %166 = vmatprep.mubr.f32.mxu0 0.0
    %v167 = vand.u32 %v92, 4294901760
    %v168 = vsub.f32 %v92, %v167
    %v169 = vand.u32 %v168, 4294901760
    %v170 = vsub.f32 %v168, %v169
    %v171 = vand.u32 %v170, 4294901760
    %172 = vmatmul.mubr.f32.gmra.mrb[0].mxu0 %v171
    %v173 = vpop.f32.mrb[0].mxu0
    %v174 = vadd.f32 0.0, %v173
    %v175 = vpop.f32.mrb[0].mxu0
    %176 = vdwg.mxu0
    %177 = vmatprep.subr.mxu0 0.0
    %v178 = vand.u32 %v26, 4294901760
    %v179 = vsub.f32 %v26, %v178
    %v180 = vand.u32 %v179, 4294901760
    %v181 = vsub.f32 %v179, %v180
    %v182 = vand.u32 %v181, 4294901760
    %183 = vmatpush1.msra.mxu0 %v182
    %184 = vmatprep.subr.mxu0 0.0
    %v185 = vand.u32 %v27, 4294901760
    %v186 = vsub.f32 %v27, %v185
    %v187 = vand.u32 %v186, 4294901760
    %v188 = vsub.f32 %v186, %v187
    %v189 = vand.u32 %v188, 4294901760
    %190 = vmatpush1.msra.mxu0 %v189
    %191 = vmatprep.subr.mxu0 0.0
    %v192 = vand.u32 %v28, 4294901760
    %v193 = vsub.f32 %v28, %v192
    %v194 = vand.u32 %v193, 4294901760
    %v195 = vsub.f32 %v193, %v194
    %v196 = vand.u32 %v195, 4294901760
    %197 = vmatpush1.msra.mxu0 %v196
    %198 = vmatprep.subr.mxu0 0.0
    %v199 = vand.u32 %v29, 4294901760
    %v200 = vsub.f32 %v29, %v199
    %v201 = vand.u32 %v200, 4294901760
    %v202 = vsub.f32 %v200, %v201
    %v203 = vand.u32 %v202, 4294901760
    %204 = vmatpush1.msra.mxu0 %v203
    %205 = vmatprep.subr.mxu0 0.0
    %v206 = vand.u32 %v30, 4294901760
    %v207 = vsub.f32 %v30, %v206
    %v208 = vand.u32 %v207, 4294901760
    %v209 = vsub.f32 %v207, %v208
    %v210 = vand.u32 %v209, 4294901760
    %211 = vmatpush1.msra.mxu0 %v210
    %212 = vmatprep.subr.mxu0 0.0
    %v213 = vand.u32 %v31, 4294901760
    %v214 = vsub.f32 %v31, %v213
    %v215 = vand.u32 %v214, 4294901760
    %v216 = vsub.f32 %v214, %v215
    %v217 = vand.u32 %v216, 4294901760
    %218 = vmatpush1.msra.mxu0 %v217
    %219 = vmatprep.subr.mxu0 0.0
    %v220 = vand.u32 %v32, 4294901760
    %v221 = vsub.f32 %v32, %v220
    %v222 = vand.u32 %v221, 4294901760
    %v223 = vsub.f32 %v221, %v222
    %v224 = vand.u32 %v223, 4294901760
    %225 = vmatpush1.msra.mxu0 %v224
    %226 = vmatprep.subr.mxu0 0.0
    %v227 = vand.u32 %v33, 4294901760
    %v228 = vsub.f32 %v33, %v227
    %v229 = vand.u32 %v228, 4294901760
    %v230 = vsub.f32 %v228, %v229
    %v231 = vand.u32 %v230, 4294901760
    %232 = vmatpush1.msra.mxu0 %v231
    %233 = vmatprep.subr.mxu0 0.0
    %234 = vmatpush1.msra.mxu0 0.0
    %235 = vmatprep.subr.mxu0 0.0
    %236 = vmatpush1.msra.mxu0 0.0
    %237 = vmatprep.subr.mxu0 0.0
    %238 = vmatpush1.msra.mxu0 0.0
    %239 = vmatprep.subr.mxu0 0.0
    %240 = vmatpush1.msra.mxu0 0.0
    %241 = vmatprep.subr.mxu0 0.0
    %242 = vmatpush1.msra.mxu0 0.0
    %243 = vmatprep.subr.mxu0 0.0
    %244 = vmatpush1.msra.mxu0 0.0
    %245 = vmatprep.subr.mxu0 0.0
    %246 = vmatpush1.msra.mxu0 0.0
    %247 = vmatprep.subr.mxu0 0.0
    %248 = vmatpush1.msra.mxu0 0.0
    %249 = vmatprep.subr.mxu0 0.0
    %250 = vmatpush1.msra.mxu0 0.0
    %251 = vmatprep.subr.mxu0 0.0
    %252 = vmatpush1.msra.mxu0 0.0
    %253 = vmatprep.subr.mxu0 0.0
    %254 = vmatpush1.msra.mxu0 0.0
    %255 = vmatprep.subr.mxu0 0.0
    %256 = vmatpush1.msra.mxu0 0.0
    %257 = vmatprep.subr.mxu0 0.0
    %258 = vmatpush1.msra.mxu0 0.0
    %259 = vmatprep.subr.mxu0 0.0
    %260 = vmatpush1.msra.mxu0 0.0
    %261 = vmatprep.subr.mxu0 0.0
    %262 = vmatpush1.msra.mxu0 0.0
    %263 = vmatprep.subr.mxu0 0.0
    %264 = vmatpush1.msra.mxu0 0.0
    %265 = vmatprep.subr.mxu0 0.0
    %266 = vmatpush1.msra.mxu0 0.0
    %267 = vmatprep.subr.mxu0 0.0
    %268 = vmatpush1.msra.mxu0 0.0
    %269 = vmatprep.subr.mxu0 0.0
    %270 = vmatpush1.msra.mxu0 0.0
    %271 = vmatprep.subr.mxu0 0.0
    %272 = vmatpush1.msra.mxu0 0.0
    %273 = vmatprep.subr.mxu0 0.0
    %274 = vmatpush1.msra.mxu0 0.0
    %275 = vmatprep.subr.mxu0 0.0
    %276 = vmatpush1.msra.mxu0 0.0
    %277 = vmatprep.subr.mxu0 0.0
    %278 = vmatpush1.msra.mxu0 0.0
    %279 = vmatprep.subr.mxu0 0.0
    %280 = vmatpush1.msra.mxu0 0.0
    %281 = vmatprep.mubr.f32.mxu0 0.0
    %v282 = vand.u32 %v92, 4294901760
    %283 = vmatmul.mubr.f32.gmra.mrb[0].mxu0 %v282
    %v284 = vpop.f32.mrb[0].mxu0
    %v285 = vadd.f32 %v174, %v284
    %v286 = vpop.f32.mrb[0].mxu0
    %287 = vdwg.mxu0
    %288 = vmatprep.subr.mxu0 0.0
    %v289 = vand.u32 %v26, 4294901760
    %v290 = vsub.f32 %v26, %v289
    %291 = vmatpush1.msra.mxu0 %v290
    %292 = vmatprep.subr.mxu0 0.0
    %v293 = vand.u32 %v27, 4294901760
    %v294 = vsub.f32 %v27, %v293
    %295 = vmatpush1.msra.mxu0 %v294
    %296 = vmatprep.subr.mxu0 0.0
    %v297 = vand.u32 %v28, 4294901760
    %v298 = vsub.f32 %v28, %v297
    %299 = vmatpush1.msra.mxu0 %v298
    %300 = vmatprep.subr.mxu0 0.0
    %v301 = vand.u32 %v29, 4294901760
    %v302 = vsub.f32 %v29, %v301
    %303 = vmatpush1.msra.mxu0 %v302
    %304 = vmatprep.subr.mxu0 0.0
    %v305 = vand.u32 %v30, 4294901760
    %v306 = vsub.f32 %v30, %v305
    %307 = vmatpush1.msra.mxu0 %v306
    %308 = vmatprep.subr.mxu0 0.0
    %v309 = vand.u32 %v31, 4294901760
    %v310 = vsub.f32 %v31, %v309
    %311 = vmatpush1.msra.mxu0 %v310
    %312 = vmatprep.subr.mxu0 0.0
    %v313 = vand.u32 %v32, 4294901760
    %v314 = vsub.f32 %v32, %v313
    %315 = vmatpush1.msra.mxu0 %v314
    %316 = vmatprep.subr.mxu0 0.0
    %v317 = vand.u32 %v33, 4294901760
    %v318 = vsub.f32 %v33, %v317
    %319 = vmatpush1.msra.mxu0 %v318
    %320 = vmatprep.subr.mxu0 0.0
    %321 = vmatpush1.msra.mxu0 0.0
    %322 = vmatprep.subr.mxu0 0.0
    %323 = vmatpush1.msra.mxu0 0.0
    %324 = vmatprep.subr.mxu0 0.0
    %325 = vmatpush1.msra.mxu0 0.0
    %326 = vmatprep.subr.mxu0 0.0
    %327 = vmatpush1.msra.mxu0 0.0
    %328 = vmatprep.subr.mxu0 0.0
    %329 = vmatpush1.msra.mxu0 0.0
    %330 = vmatprep.subr.mxu0 0.0
    %331 = vmatpush1.msra.mxu0 0.0
    %332 = vmatprep.subr.mxu0 0.0
    %333 = vmatpush1.msra.mxu0 0.0
    %334 = vmatprep.subr.mxu0 0.0
    %335 = vmatpush1.msra.mxu0 0.0
    %336 = vmatprep.subr.mxu0 0.0
    %337 = vmatpush1.msra.mxu0 0.0
    %338 = vmatprep.subr.mxu0 0.0
    %339 = vmatpush1.msra.mxu0 0.0
    %340 = vmatprep.subr.mxu0 0.0
    %341 = vmatpush1.msra.mxu0 0.0
    %342 = vmatprep.subr.mxu0 0.0
    %343 = vmatpush1.msra.mxu0 0.0
    %344 = vmatprep.subr.mxu0 0.0
    %345 = vmatpush1.msra.mxu0 0.0
    %346 = vmatprep.subr.mxu0 0.0
    %347 = vmatpush1.msra.mxu0 0.0
    %348 = vmatprep.subr.mxu0 0.0
    %349 = vmatpush1.msra.mxu0 0.0
    %350 = vmatprep.subr.mxu0 0.0
    %351 = vmatpush1.msra.mxu0 0.0
    %352 = vmatprep.subr.mxu0 0.0
    %353 = vmatpush1.msra.mxu0 0.0
    %354 = vmatprep.subr.mxu0 0.0
    %355 = vmatpush1.msra.mxu0 0.0
    %356 = vmatprep.subr.mxu0 0.0
    %357 = vmatpush1.msra.mxu0 0.0
    %358 = vmatprep.subr.mxu0 0.0
    %359 = vmatpush1.msra.mxu0 0.0
    %360 = vmatprep.subr.mxu0 0.0
    %361 = vmatpush1.msra.mxu0 0.0
    %362 = vmatprep.subr.mxu0 0.0
    %363 = vmatpush1.msra.mxu0 0.0
    %364 = vmatprep.subr.mxu0 0.0
    %365 = vmatpush1.msra.mxu0 0.0
    %366 = vmatprep.subr.mxu0 0.0
    %367 = vmatpush1.msra.mxu0 0.0
    %368 = vmatprep.mubr.f32.mxu0 0.0
    %v369 = vand.u32 %v92, 4294901760
    %v370 = vsub.f32 %v92, %v369
    %371 = vmatmul.mubr.f32.gmra.mrb[0].mxu0 %v370
    %v372 = vpop.f32.mrb[0].mxu0
    %v373 = vadd.f32 %v285, %v372
    %v374 = vpop.f32.mrb[0].mxu0
    %375 = vdwg.mxu0
    %376 = vmatprep.subr.mxu0 0.0
    %v377 = vand.u32 %v26, 4294901760
    %378 = vmatpush1.msra.mxu0 %v377
    %379 = vmatprep.subr.mxu0 0.0
    %v380 = vand.u32 %v27, 4294901760
    %381 = vmatpush1.msra.mxu0 %v380
    %382 = vmatprep.subr.mxu0 0.0
    %v383 = vand.u32 %v28, 4294901760
    %384 = vmatpush1.msra.mxu0 %v383
    %385 = vmatprep.subr.mxu0 0.0
    %v386 = vand.u32 %v29, 4294901760
    %387 = vmatpush1.msra.mxu0 %v386
    %388 = vmatprep.subr.mxu0 0.0
    %v389 = vand.u32 %v30, 4294901760
    %390 = vmatpush1.msra.mxu0 %v389
    %391 = vmatprep.subr.mxu0 0.0
    %v392 = vand.u32 %v31, 4294901760
    %393 = vmatpush1.msra.mxu0 %v392
    %394 = vmatprep.subr.mxu0 0.0
    %v395 = vand.u32 %v32, 4294901760
    %396 = vmatpush1.msra.mxu0 %v395
    %397 = vmatprep.subr.mxu0 0.0
    %v398 = vand.u32 %v33, 4294901760
    %399 = vmatpush1.msra.mxu0 %v398
    %400 = vmatprep.subr.mxu0 0.0
    %401 = vmatpush1.msra.mxu0 0.0
    %402 = vmatprep.subr.mxu0 0.0
    %403 = vmatpush1.msra.mxu0 0.0
    %404 = vmatprep.subr.mxu0 0.0
    %405 = vmatpush1.msra.mxu0 0.0
    %406 = vmatprep.subr.mxu0 0.0
    %407 = vmatpush1.msra.mxu0 0.0
    %408 = vmatprep.subr.mxu0 0.0
    %409 = vmatpush1.msra.mxu0 0.0
    %410 = vmatprep.subr.mxu0 0.0
    %411 = vmatpush1.msra.mxu0 0.0
    %412 = vmatprep.subr.mxu0 0.0
    %413 = vmatpush1.msra.mxu0 0.0
    %414 = vmatprep.subr.mxu0 0.0
    %415 = vmatpush1.msra.mxu0 0.0
    %416 = vmatprep.subr.mxu0 0.0
    %417 = vmatpush1.msra.mxu0 0.0
    %418 = vmatprep.subr.mxu0 0.0
    %419 = vmatpush1.msra.mxu0 0.0
    %420 = vmatprep.subr.mxu0 0.0
    %421 = vmatpush1.msra.mxu0 0.0
    %422 = vmatprep.subr.mxu0 0.0
    %423 = vmatpush1.msra.mxu0 0.0
    %424 = vmatprep.subr.mxu0 0.0
    %425 = vmatpush1.msra.mxu0 0.0
    %426 = vmatprep.subr.mxu0 0.0
    %427 = vmatpush1.msra.mxu0 0.0
    %428 = vmatprep.subr.mxu0 0.0
    %429 = vmatpush1.msra.mxu0 0.0
    %430 = vmatprep.subr.mxu0 0.0
    %431 = vmatpush1.msra.mxu0 0.0
    %432 = vmatprep.subr.mxu0 0.0
    %433 = vmatpush1.msra.mxu0 0.0
    %434 = vmatprep.subr.mxu0 0.0
    %435 = vmatpush1.msra.mxu0 0.0
    %436 = vmatprep.subr.mxu0 0.0
    %437 = vmatpush1.msra.mxu0 0.0
    %438 = vmatprep.subr.mxu0 0.0
    %439 = vmatpush1.msra.mxu0 0.0
    %440 = vmatprep.subr.mxu0 0.0
    %441 = vmatpush1.msra.mxu0 0.0
    %442 = vmatprep.subr.mxu0 0.0
    %443 = vmatpush1.msra.mxu0 0.0
    %444 = vmatprep.subr.mxu0 0.0
    %445 = vmatpush1.msra.mxu0 0.0
    %446 = vmatprep.subr.mxu0 0.0
    %447 = vmatpush1.msra.mxu0 0.0
    %448 = vmatprep.mubr.f32.mxu0 0.0
    %v449 = vand.u32 %v92, 4294901760
    %v450 = vsub.f32 %v92, %v449
    %v451 = vand.u32 %v450, 4294901760
    %452 = vmatmul.mubr.f32.gmra.mrb[0].mxu0 %v451
    %v453 = vpop.f32.mrb[0].mxu0
    %v454 = vadd.f32 %v373, %v453
    %v455 = vpop.f32.mrb[0].mxu0
    %456 = vdwg.mxu0
    %457 = vmatprep.subr.mxu0 0.0
    %v458 = vand.u32 %v26, 4294901760
    %v459 = vsub.f32 %v26, %v458
    %v460 = vand.u32 %v459, 4294901760
    %461 = vmatpush1.msra.mxu0 %v460
    %462 = vmatprep.subr.mxu0 0.0
    %v463 = vand.u32 %v27, 4294901760
    %v464 = vsub.f32 %v27, %v463
    %v465 = vand.u32 %v464, 4294901760
    %466 = vmatpush1.msra.mxu0 %v465
    %467 = vmatprep.subr.mxu0 0.0
    %v468 = vand.u32 %v28, 4294901760
    %v469 = vsub.f32 %v28, %v468
    %v470 = vand.u32 %v469, 4294901760
    %471 = vmatpush1.msra.mxu0 %v470
    %472 = vmatprep.subr.mxu0 0.0
    %v473 = vand.u32 %v29, 4294901760
    %v474 = vsub.f32 %v29, %v473
    %v475 = vand.u32 %v474, 4294901760
    %476 = vmatpush1.msra.mxu0 %v475
    %477 = vmatprep.subr.mxu0 0.0
    %v478 = vand.u32 %v30, 4294901760
    %v479 = vsub.f32 %v30, %v478
    %v480 = vand.u32 %v479, 4294901760
    %481 = vmatpush1.msra.mxu0 %v480
    %482 = vmatprep.subr.mxu0 0.0
    %v483 = vand.u32 %v31, 4294901760
    %v484 = vsub.f32 %v31, %v483
    %v485 = vand.u32 %v484, 4294901760
    %486 = vmatpush1.msra.mxu0 %v485
    %487 = vmatprep.subr.mxu0 0.0
    %v488 = vand.u32 %v32, 4294901760
    %v489 = vsub.f32 %v32, %v488
    %v490 = vand.u32 %v489, 4294901760
    %491 = vmatpush1.msra.mxu0 %v490
    %492 = vmatprep.subr.mxu0 0.0
    %v493 = vand.u32 %v33, 4294901760
    %v494 = vsub.f32 %v33, %v493
    %v495 = vand.u32 %v494, 4294901760
    %496 = vmatpush1.msra.mxu0 %v495
    %497 = vmatprep.subr.mxu0 0.0
    %498 = vmatpush1.msra.mxu0 0.0
    %499 = vmatprep.subr.mxu0 0.0
    %500 = vmatpush1.msra.mxu0 0.0
    %501 = vmatprep.subr.mxu0 0.0
    %502 = vmatpush1.msra.mxu0 0.0
    %503 = vmatprep.subr.mxu0 0.0
    %504 = vmatpush1.msra.mxu0 0.0
    %505 = vmatprep.subr.mxu0 0.0
    %506 = vmatpush1.msra.mxu0 0.0
    %507 = vmatprep.subr.mxu0 0.0
    %508 = vmatpush1.msra.mxu0 0.0
    %509 = vmatprep.subr.mxu0 0.0
    %510 = vmatpush1.msra.mxu0 0.0
    %511 = vmatprep.subr.mxu0 0.0
    %512 = vmatpush1.msra.mxu0 0.0
    %513 = vmatprep.subr.mxu0 0.0
    %514 = vmatpush1.msra.mxu0 0.0
    %515 = vmatprep.subr.mxu0 0.0
    %516 = vmatpush1.msra.mxu0 0.0
    %517 = vmatprep.subr.mxu0 0.0
    %518 = vmatpush1.msra.mxu0 0.0
    %519 = vmatprep.subr.mxu0 0.0
    %520 = vmatpush1.msra.mxu0 0.0
    %521 = vmatprep.subr.mxu0 0.0
    %522 = vmatpush1.msra.mxu0 0.0
    %523 = vmatprep.subr.mxu0 0.0
    %524 = vmatpush1.msra.mxu0 0.0
    %525 = vmatprep.subr.mxu0 0.0
    %526 = vmatpush1.msra.mxu0 0.0
    %527 = vmatprep.subr.mxu0 0.0
    %528 = vmatpush1.msra.mxu0 0.0
    %529 = vmatprep.subr.mxu0 0.0
    %530 = vmatpush1.msra.mxu0 0.0
    %531 = vmatprep.subr.mxu0 0.0
    %532 = vmatpush1.msra.mxu0 0.0
    %533 = vmatprep.subr.mxu0 0.0
    %534 = vmatpush1.msra.mxu0 0.0
    %535 = vmatprep.subr.mxu0 0.0
    %536 = vmatpush1.msra.mxu0 0.0
    %537 = vmatprep.subr.mxu0 0.0
    %538 = vmatpush1.msra.mxu0 0.0
    %539 = vmatprep.subr.mxu0 0.0
    %540 = vmatpush1.msra.mxu0 0.0
    %541 = vmatprep.subr.mxu0 0.0
    %542 = vmatpush1.msra.mxu0 0.0
    %543 = vmatprep.subr.mxu0 0.0
    %544 = vmatpush1.msra.mxu0 0.0
    %545 = vmatprep.mubr.f32.mxu0 0.0
    %v546 = vand.u32 %v92, 4294901760
    %547 = vmatmul.mubr.f32.gmra.mrb[0].mxu0 %v546
    %v548 = vpop.f32.mrb[0].mxu0
    %v549 = vadd.f32 %v454, %v548
    %v550 = vpop.f32.mrb[0].mxu0
    %551 = vdwg.mxu0
    %552 = vmatprep.subr.mxu0 0.0
    %v553 = vand.u32 %v26, 4294901760
    %554 = vmatpush1.msra.mxu0 %v553
    %555 = vmatprep.subr.mxu0 0.0
    %v556 = vand.u32 %v27, 4294901760
    %557 = vmatpush1.msra.mxu0 %v556
    %558 = vmatprep.subr.mxu0 0.0
    %v559 = vand.u32 %v28, 4294901760
    %560 = vmatpush1.msra.mxu0 %v559
    %561 = vmatprep.subr.mxu0 0.0
    %v562 = vand.u32 %v29, 4294901760
    %563 = vmatpush1.msra.mxu0 %v562
    %564 = vmatprep.subr.mxu0 0.0
    %v565 = vand.u32 %v30, 4294901760
    %566 = vmatpush1.msra.mxu0 %v565
    %567 = vmatprep.subr.mxu0 0.0
    %v568 = vand.u32 %v31, 4294901760
    %569 = vmatpush1.msra.mxu0 %v568
    %570 = vmatprep.subr.mxu0 0.0
    %v571 = vand.u32 %v32, 4294901760
    %572 = vmatpush1.msra.mxu0 %v571
    %573 = vmatprep.subr.mxu0 0.0
    %v574 = vand.u32 %v33, 4294901760
    %575 = vmatpush1.msra.mxu0 %v574
    %576 = vmatprep.subr.mxu0 0.0
    %577 = vmatpush1.msra.mxu0 0.0
    %578 = vmatprep.subr.mxu0 0.0
    %579 = vmatpush1.msra.mxu0 0.0
    %580 = vmatprep.subr.mxu0 0.0
    %581 = vmatpush1.msra.mxu0 0.0
    %582 = vmatprep.subr.mxu0 0.0
    %583 = vmatpush1.msra.mxu0 0.0
    %584 = vmatprep.subr.mxu0 0.0
    %585 = vmatpush1.msra.mxu0 0.0
    %586 = vmatprep.subr.mxu0 0.0
    %587 = vmatpush1.msra.mxu0 0.0
    %588 = vmatprep.subr.mxu0 0.0
    %589 = vmatpush1.msra.mxu0 0.0
    %590 = vmatprep.subr.mxu0 0.0
    %591 = vmatpush1.msra.mxu0 0.0
    %592 = vmatprep.subr.mxu0 0.0
    %593 = vmatpush1.msra.mxu0 0.0
    %594 = vmatprep.subr.mxu0 0.0
    %595 = vmatpush1.msra.mxu0 0.0
    %596 = vmatprep.subr.mxu0 0.0
    %597 = vmatpush1.msra.mxu0 0.0
    %598 = vmatprep.subr.mxu0 0.0
    %599 = vmatpush1.msra.mxu0 0.0
    %600 = vmatprep.subr.mxu0 0.0
    %601 = vmatpush1.msra.mxu0 0.0
    %602 = vmatprep.subr.mxu0 0.0
    %603 = vmatpush1.msra.mxu0 0.0
    %604 = vmatprep.subr.mxu0 0.0
    %605 = vmatpush1.msra.mxu0 0.0
    %606 = vmatprep.subr.mxu0 0.0
    %607 = vmatpush1.msra.mxu0 0.0
    %608 = vmatprep.subr.mxu0 0.0
    %609 = vmatpush1.msra.mxu0 0.0
    %610 = vmatprep.subr.mxu0 0.0
    %611 = vmatpush1.msra.mxu0 0.0
    %612 = vmatprep.subr.mxu0 0.0
    %613 = vmatpush1.msra.mxu0 0.0
    %614 = vmatprep.subr.mxu0 0.0
    %615 = vmatpush1.msra.mxu0 0.0
    %616 = vmatprep.subr.mxu0 0.0
    %617 = vmatpush1.msra.mxu0 0.0
    %618 = vmatprep.subr.mxu0 0.0
    %619 = vmatpush1.msra.mxu0 0.0
    %620 = vmatprep.subr.mxu0 0.0
    %621 = vmatpush1.msra.mxu0 0.0
    %622 = vmatprep.subr.mxu0 0.0
    %623 = vmatpush1.msra.mxu0 0.0
    %624 = vmatprep.mubr.f32.mxu0 0.0
    %v625 = vand.u32 %v92, 4294901760
    %626 = vmatmul.mubr.f32.gmra.mrb[0].mxu0 %v625
    %v627 = vpop.f32.mrb[0].mxu0
    %v628 = vadd.f32 %v549, %v627
    %v629 = vpop.f32.mrb[0].mxu0
    %630 = vdwg.mxu0
    %v631 = vmul.f32 %v25, %v25
    %v633 = vsel %vm90, %v631, 0
    %635 = vmatprep.subr.mxu0 0.0
    %v636 = vand.u32 %v26, 4294901760
    %637 = vmatpush1.msra.mxu0 %v636
    %638 = vmatprep.subr.mxu0 0.0
    %v639 = vand.u32 %v27, 4294901760
    %640 = vmatpush1.msra.mxu0 %v639
    %641 = vmatprep.subr.mxu0 0.0
    %v642 = vand.u32 %v28, 4294901760
    %643 = vmatpush1.msra.mxu0 %v642
    %644 = vmatprep.subr.mxu0 0.0
    %v645 = vand.u32 %v29, 4294901760
    %646 = vmatpush1.msra.mxu0 %v645
    %647 = vmatprep.subr.mxu0 0.0
    %v648 = vand.u32 %v30, 4294901760
    %649 = vmatpush1.msra.mxu0 %v648
    %650 = vmatprep.subr.mxu0 0.0
    %v651 = vand.u32 %v31, 4294901760
    %652 = vmatpush1.msra.mxu0 %v651
    %653 = vmatprep.subr.mxu0 0.0
    %v654 = vand.u32 %v32, 4294901760
    %655 = vmatpush1.msra.mxu0 %v654
    %656 = vmatprep.subr.mxu0 0.0
    %v657 = vand.u32 %v33, 4294901760
    %658 = vmatpush1.msra.mxu0 %v657
    %659 = vmatprep.subr.mxu0 0.0
    %660 = vmatpush1.msra.mxu0 0.0
    %661 = vmatprep.subr.mxu0 0.0
    %662 = vmatpush1.msra.mxu0 0.0
    %663 = vmatprep.subr.mxu0 0.0
    %664 = vmatpush1.msra.mxu0 0.0
    %665 = vmatprep.subr.mxu0 0.0
    %666 = vmatpush1.msra.mxu0 0.0
    %667 = vmatprep.subr.mxu0 0.0
    %668 = vmatpush1.msra.mxu0 0.0
    %669 = vmatprep.subr.mxu0 0.0
    %670 = vmatpush1.msra.mxu0 0.0
    %671 = vmatprep.subr.mxu0 0.0
    %672 = vmatpush1.msra.mxu0 0.0
    %673 = vmatprep.subr.mxu0 0.0
    %674 = vmatpush1.msra.mxu0 0.0
    %675 = vmatprep.subr.mxu0 0.0
    %676 = vmatpush1.msra.mxu0 0.0
    %677 = vmatprep.subr.mxu0 0.0
    %678 = vmatpush1.msra.mxu0 0.0
    %679 = vmatprep.subr.mxu0 0.0
    %680 = vmatpush1.msra.mxu0 0.0
    %681 = vmatprep.subr.mxu0 0.0
    %682 = vmatpush1.msra.mxu0 0.0
    %683 = vmatprep.subr.mxu0 0.0
    %684 = vmatpush1.msra.mxu0 0.0
    %685 = vmatprep.subr.mxu0 0.0
    %686 = vmatpush1.msra.mxu0 0.0
    %687 = vmatprep.subr.mxu0 0.0
    %688 = vmatpush1.msra.mxu0 0.0
    %689 = vmatprep.subr.mxu0 0.0
    %690 = vmatpush1.msra.mxu0 0.0
    %691 = vmatprep.subr.mxu0 0.0
    %692 = vmatpush1.msra.mxu0 0.0
    %693 = vmatprep.subr.mxu0 0.0
    %694 = vmatpush1.msra.mxu0 0.0
    %695 = vmatprep.subr.mxu0 0.0
    %696 = vmatpush1.msra.mxu0 0.0
    %697 = vmatprep.subr.mxu0 0.0
    %698 = vmatpush1.msra.mxu0 0.0
    %699 = vmatprep.subr.mxu0 0.0
    %700 = vmatpush1.msra.mxu0 0.0
    %701 = vmatprep.subr.mxu0 0.0
    %702 = vmatpush1.msra.mxu0 0.0
    %703 = vmatprep.subr.mxu0 0.0
    %704 = vmatpush1.msra.mxu0 0.0
    %705 = vmatprep.subr.mxu0 0.0
    %706 = vmatpush1.msra.mxu0 0.0
    %707 = vmatprep.mubr.f32.mxu0 0.0
    %v708 = vand.u32 %v633, 4294901760
    %v709 = vsub.f32 %v633, %v708
    %v710 = vand.u32 %v709, 4294901760
    %v711 = vsub.f32 %v709, %v710
    %v712 = vand.u32 %v711, 4294901760
    %713 = vmatmul.mubr.f32.gmra.mrb[0].mxu0 %v712
    %v714 = vpop.f32.mrb[0].mxu0
    %v715 = vadd.f32 0.0, %v714
    %v716 = vpop.f32.mrb[0].mxu0
    %717 = vdwg.mxu0
    %718 = vmatprep.subr.mxu0 0.0
    %v719 = vand.u32 %v26, 4294901760
    %v720 = vsub.f32 %v26, %v719
    %v721 = vand.u32 %v720, 4294901760
    %v722 = vsub.f32 %v720, %v721
    %v723 = vand.u32 %v722, 4294901760
    %724 = vmatpush1.msra.mxu0 %v723
    %725 = vmatprep.subr.mxu0 0.0
    %v726 = vand.u32 %v27, 4294901760
    %v727 = vsub.f32 %v27, %v726
    %v728 = vand.u32 %v727, 4294901760
    %v729 = vsub.f32 %v727, %v728
    %v730 = vand.u32 %v729, 4294901760
    %731 = vmatpush1.msra.mxu0 %v730
    %732 = vmatprep.subr.mxu0 0.0
    %v733 = vand.u32 %v28, 4294901760
    %v734 = vsub.f32 %v28, %v733
    %v735 = vand.u32 %v734, 4294901760
    %v736 = vsub.f32 %v734, %v735
    %v737 = vand.u32 %v736, 4294901760
    %738 = vmatpush1.msra.mxu0 %v737
    %739 = vmatprep.subr.mxu0 0.0
    %v740 = vand.u32 %v29, 4294901760
    %v741 = vsub.f32 %v29, %v740
    %v742 = vand.u32 %v741, 4294901760
    %v743 = vsub.f32 %v741, %v742
    %v744 = vand.u32 %v743, 4294901760
    %745 = vmatpush1.msra.mxu0 %v744
    %746 = vmatprep.subr.mxu0 0.0
    %v747 = vand.u32 %v30, 4294901760
    %v748 = vsub.f32 %v30, %v747
    %v749 = vand.u32 %v748, 4294901760
    %v750 = vsub.f32 %v748, %v749
    %v751 = vand.u32 %v750, 4294901760
    %752 = vmatpush1.msra.mxu0 %v751
    %753 = vmatprep.subr.mxu0 0.0
    %v754 = vand.u32 %v31, 4294901760
    %v755 = vsub.f32 %v31, %v754
    %v756 = vand.u32 %v755, 4294901760
    %v757 = vsub.f32 %v755, %v756
    %v758 = vand.u32 %v757, 4294901760
    %759 = vmatpush1.msra.mxu0 %v758
    %760 = vmatprep.subr.mxu0 0.0
    %v761 = vand.u32 %v32, 4294901760
    %v762 = vsub.f32 %v32, %v761
    %v763 = vand.u32 %v762, 4294901760
    %v764 = vsub.f32 %v762, %v763
    %v765 = vand.u32 %v764, 4294901760
    %766 = vmatpush1.msra.mxu0 %v765
    %767 = vmatprep.subr.mxu0 0.0
    %v768 = vand.u32 %v33, 4294901760
    %v769 = vsub.f32 %v33, %v768
    %v770 = vand.u32 %v769, 4294901760
    %v771 = vsub.f32 %v769, %v770
    %v772 = vand.u32 %v771, 4294901760
    %773 = vmatpush1.msra.mxu0 %v772
    %774 = vmatprep.subr.mxu0 0.0
    %775 = vmatpush1.msra.mxu0 0.0
    %776 = vmatprep.subr.mxu0 0.0
    %777 = vmatpush1.msra.mxu0 0.0
    %778 = vmatprep.subr.mxu0 0.0
    %779 = vmatpush1.msra.mxu0 0.0
    %780 = vmatprep.subr.mxu0 0.0
    %781 = vmatpush1.msra.mxu0 0.0
    %782 = vmatprep.subr.mxu0 0.0
    %783 = vmatpush1.msra.mxu0 0.0
    %784 = vmatprep.subr.mxu0 0.0
    %785 = vmatpush1.msra.mxu0 0.0
    %786 = vmatprep.subr.mxu0 0.0
    %787 = vmatpush1.msra.mxu0 0.0
    %788 = vmatprep.subr.mxu0 0.0
    %789 = vmatpush1.msra.mxu0 0.0
    %790 = vmatprep.subr.mxu0 0.0
    %791 = vmatpush1.msra.mxu0 0.0
    %792 = vmatprep.subr.mxu0 0.0
    %793 = vmatpush1.msra.mxu0 0.0
    %794 = vmatprep.subr.mxu0 0.0
    %795 = vmatpush1.msra.mxu0 0.0
    %796 = vmatprep.subr.mxu0 0.0
    %797 = vmatpush1.msra.mxu0 0.0
    %798 = vmatprep.subr.mxu0 0.0
    %799 = vmatpush1.msra.mxu0 0.0
    %800 = vmatprep.subr.mxu0 0.0
    %801 = vmatpush1.msra.mxu0 0.0
    %802 = vmatprep.subr.mxu0 0.0
    %803 = vmatpush1.msra.mxu0 0.0
    %804 = vmatprep.subr.mxu0 0.0
    %805 = vmatpush1.msra.mxu0 0.0
    %806 = vmatprep.subr.mxu0 0.0
    %807 = vmatpush1.msra.mxu0 0.0
    %808 = vmatprep.subr.mxu0 0.0
    %809 = vmatpush1.msra.mxu0 0.0
    %810 = vmatprep.subr.mxu0 0.0
    %811 = vmatpush1.msra.mxu0 0.0
    %812 = vmatprep.subr.mxu0 0.0
    %813 = vmatpush1.msra.mxu0 0.0
    %814 = vmatprep.subr.mxu0 0.0
    %815 = vmatpush1.msra.mxu0 0.0
    %816 = vmatprep.subr.mxu0 0.0
    %817 = vmatpush1.msra.mxu0 0.0
    %818 = vmatprep.subr.mxu0 0.0
    %819 = vmatpush1.msra.mxu0 0.0
    %820 = vmatprep.subr.mxu0 0.0
    %821 = vmatpush1.msra.mxu0 0.0
    %822 = vmatprep.mubr.f32.mxu0 0.0
    %v823 = vand.u32 %v633, 4294901760
    %824 = vmatmul.mubr.f32.gmra.mrb[0].mxu0 %v823
    %v825 = vpop.f32.mrb[0].mxu0
    %v826 = vadd.f32 %v715, %v825
    %v827 = vpop.f32.mrb[0].mxu0
    %828 = vdwg.mxu0
    %829 = vmatprep.subr.mxu0 0.0
    %v830 = vand.u32 %v26, 4294901760
    %v831 = vsub.f32 %v26, %v830
    %832 = vmatpush1.msra.mxu0 %v831
    %833 = vmatprep.subr.mxu0 0.0
    %v834 = vand.u32 %v27, 4294901760
    %v835 = vsub.f32 %v27, %v834
    %836 = vmatpush1.msra.mxu0 %v835
    %837 = vmatprep.subr.mxu0 0.0
    %v838 = vand.u32 %v28, 4294901760
    %v839 = vsub.f32 %v28, %v838
    %840 = vmatpush1.msra.mxu0 %v839
    %841 = vmatprep.subr.mxu0 0.0
    %v842 = vand.u32 %v29, 4294901760
    %v843 = vsub.f32 %v29, %v842
    %844 = vmatpush1.msra.mxu0 %v843
    %845 = vmatprep.subr.mxu0 0.0
    %v846 = vand.u32 %v30, 4294901760
    %v847 = vsub.f32 %v30, %v846
    %848 = vmatpush1.msra.mxu0 %v847
    %849 = vmatprep.subr.mxu0 0.0
    %v850 = vand.u32 %v31, 4294901760
    %v851 = vsub.f32 %v31, %v850
    %852 = vmatpush1.msra.mxu0 %v851
    %853 = vmatprep.subr.mxu0 0.0
    %v854 = vand.u32 %v32, 4294901760
    %v855 = vsub.f32 %v32, %v854
    %856 = vmatpush1.msra.mxu0 %v855
    %857 = vmatprep.subr.mxu0 0.0
    %v858 = vand.u32 %v33, 4294901760
    %v859 = vsub.f32 %v33, %v858
    %860 = vmatpush1.msra.mxu0 %v859
    %861 = vmatprep.subr.mxu0 0.0
    %862 = vmatpush1.msra.mxu0 0.0
    %863 = vmatprep.subr.mxu0 0.0
    %864 = vmatpush1.msra.mxu0 0.0
    %865 = vmatprep.subr.mxu0 0.0
    %866 = vmatpush1.msra.mxu0 0.0
    %867 = vmatprep.subr.mxu0 0.0
    %868 = vmatpush1.msra.mxu0 0.0
    %869 = vmatprep.subr.mxu0 0.0
    %870 = vmatpush1.msra.mxu0 0.0
    %871 = vmatprep.subr.mxu0 0.0
    %872 = vmatpush1.msra.mxu0 0.0
    %873 = vmatprep.subr.mxu0 0.0
    %874 = vmatpush1.msra.mxu0 0.0
    %875 = vmatprep.subr.mxu0 0.0
    %876 = vmatpush1.msra.mxu0 0.0
    %877 = vmatprep.subr.mxu0 0.0
    %878 = vmatpush1.msra.mxu0 0.0
    %879 = vmatprep.subr.mxu0 0.0
    %880 = vmatpush1.msra.mxu0 0.0
    %881 = vmatprep.subr.mxu0 0.0
    %882 = vmatpush1.msra.mxu0 0.0
    %883 = vmatprep.subr.mxu0 0.0
    %884 = vmatpush1.msra.mxu0 0.0
    %885 = vmatprep.subr.mxu0 0.0
    %886 = vmatpush1.msra.mxu0 0.0
    %887 = vmatprep.subr.mxu0 0.0
    %888 = vmatpush1.msra.mxu0 0.0
    %889 = vmatprep.subr.mxu0 0.0
    %890 = vmatpush1.msra.mxu0 0.0
    %891 = vmatprep.subr.mxu0 0.0
    %892 = vmatpush1.msra.mxu0 0.0
    %893 = vmatprep.subr.mxu0 0.0
    %894 = vmatpush1.msra.mxu0 0.0
    %895 = vmatprep.subr.mxu0 0.0
    %896 = vmatpush1.msra.mxu0 0.0
    %897 = vmatprep.subr.mxu0 0.0
    %898 = vmatpush1.msra.mxu0 0.0
    %899 = vmatprep.subr.mxu0 0.0
    %900 = vmatpush1.msra.mxu0 0.0
    %901 = vmatprep.subr.mxu0 0.0
    %902 = vmatpush1.msra.mxu0 0.0
    %903 = vmatprep.subr.mxu0 0.0
    %904 = vmatpush1.msra.mxu0 0.0
    %905 = vmatprep.subr.mxu0 0.0
    %906 = vmatpush1.msra.mxu0 0.0
    %907 = vmatprep.subr.mxu0 0.0
    %908 = vmatpush1.msra.mxu0 0.0
    %909 = vmatprep.mubr.f32.mxu0 0.0
    %v910 = vand.u32 %v633, 4294901760
    %v911 = vsub.f32 %v633, %v910
    %912 = vmatmul.mubr.f32.gmra.mrb[0].mxu0 %v911
    %v913 = vpop.f32.mrb[0].mxu0
    %v914 = vadd.f32 %v826, %v913
    %v915 = vpop.f32.mrb[0].mxu0
    %916 = vdwg.mxu0
    %917 = vmatprep.subr.mxu0 0.0
    %v918 = vand.u32 %v26, 4294901760
    %919 = vmatpush1.msra.mxu0 %v918
    %920 = vmatprep.subr.mxu0 0.0
    %v921 = vand.u32 %v27, 4294901760
    %922 = vmatpush1.msra.mxu0 %v921
    %923 = vmatprep.subr.mxu0 0.0
    %v924 = vand.u32 %v28, 4294901760
    %925 = vmatpush1.msra.mxu0 %v924
    %926 = vmatprep.subr.mxu0 0.0
    %v927 = vand.u32 %v29, 4294901760
    %928 = vmatpush1.msra.mxu0 %v927
    %929 = vmatprep.subr.mxu0 0.0
    %v930 = vand.u32 %v30, 4294901760
    %931 = vmatpush1.msra.mxu0 %v930
    %932 = vmatprep.subr.mxu0 0.0
    %v933 = vand.u32 %v31, 4294901760
    %934 = vmatpush1.msra.mxu0 %v933
    %935 = vmatprep.subr.mxu0 0.0
    %v936 = vand.u32 %v32, 4294901760
    %937 = vmatpush1.msra.mxu0 %v936
    %938 = vmatprep.subr.mxu0 0.0
    %v939 = vand.u32 %v33, 4294901760
    %940 = vmatpush1.msra.mxu0 %v939
    %941 = vmatprep.subr.mxu0 0.0
    %942 = vmatpush1.msra.mxu0 0.0
    %943 = vmatprep.subr.mxu0 0.0
    %944 = vmatpush1.msra.mxu0 0.0
    %945 = vmatprep.subr.mxu0 0.0
    %946 = vmatpush1.msra.mxu0 0.0
    %947 = vmatprep.subr.mxu0 0.0
    %948 = vmatpush1.msra.mxu0 0.0
    %949 = vmatprep.subr.mxu0 0.0
    %950 = vmatpush1.msra.mxu0 0.0
    %951 = vmatprep.subr.mxu0 0.0
    %952 = vmatpush1.msra.mxu0 0.0
    %953 = vmatprep.subr.mxu0 0.0
    %954 = vmatpush1.msra.mxu0 0.0
    %955 = vmatprep.subr.mxu0 0.0
    %956 = vmatpush1.msra.mxu0 0.0
    %957 = vmatprep.subr.mxu0 0.0
    %958 = vmatpush1.msra.mxu0 0.0
    %959 = vmatprep.subr.mxu0 0.0
    %960 = vmatpush1.msra.mxu0 0.0
    %961 = vmatprep.subr.mxu0 0.0
    %962 = vmatpush1.msra.mxu0 0.0
    %963 = vmatprep.subr.mxu0 0.0
    %964 = vmatpush1.msra.mxu0 0.0
    %965 = vmatprep.subr.mxu0 0.0
    %966 = vmatpush1.msra.mxu0 0.0
    %967 = vmatprep.subr.mxu0 0.0
    %968 = vmatpush1.msra.mxu0 0.0
    %969 = vmatprep.subr.mxu0 0.0
    %970 = vmatpush1.msra.mxu0 0.0
    %971 = vmatprep.subr.mxu0 0.0
    %972 = vmatpush1.msra.mxu0 0.0
    %973 = vmatprep.subr.mxu0 0.0
    %974 = vmatpush1.msra.mxu0 0.0
    %975 = vmatprep.subr.mxu0 0.0
    %976 = vmatpush1.msra.mxu0 0.0
    %977 = vmatprep.subr.mxu0 0.0
    %978 = vmatpush1.msra.mxu0 0.0
    %979 = vmatprep.subr.mxu0 0.0
    %980 = vmatpush1.msra.mxu0 0.0
    %981 = vmatprep.subr.mxu0 0.0
    %982 = vmatpush1.msra.mxu0 0.0
    %983 = vmatprep.subr.mxu0 0.0
    %984 = vmatpush1.msra.mxu0 0.0
    %985 = vmatprep.subr.mxu0 0.0
    %986 = vmatpush1.msra.mxu0 0.0
    %987 = vmatprep.subr.mxu0 0.0
    %988 = vmatpush1.msra.mxu0 0.0
    %989 = vmatprep.mubr.f32.mxu0 0.0
    %v990 = vand.u32 %v633, 4294901760
    %v991 = vsub.f32 %v633, %v990
    %v992 = vand.u32 %v991, 4294901760
    %993 = vmatmul.mubr.f32.gmra.mrb[0].mxu0 %v992
    %v994 = vpop.f32.mrb[0].mxu0
    %v995 = vadd.f32 %v914, %v994
    %v996 = vpop.f32.mrb[0].mxu0
    %997 = vdwg.mxu0
    %998 = vmatprep.subr.mxu0 0.0
    %v999 = vand.u32 %v26, 4294901760
    %v1000 = vsub.f32 %v26, %v999
    %v1001 = vand.u32 %v1000, 4294901760
    %1002 = vmatpush1.msra.mxu0 %v1001
    %1003 = vmatprep.subr.mxu0 0.0
    %v1004 = vand.u32 %v27, 4294901760
    %v1005 = vsub.f32 %v27, %v1004
    %v1006 = vand.u32 %v1005, 4294901760
    %1007 = vmatpush1.msra.mxu0 %v1006
    %1008 = vmatprep.subr.mxu0 0.0
    %v1009 = vand.u32 %v28, 4294901760
    %v1010 = vsub.f32 %v28, %v1009
    %v1011 = vand.u32 %v1010, 4294901760
    %1012 = vmatpush1.msra.mxu0 %v1011
    %1013 = vmatprep.subr.mxu0 0.0
    %v1014 = vand.u32 %v29, 4294901760
    %v1015 = vsub.f32 %v29, %v1014
    %v1016 = vand.u32 %v1015, 4294901760
    %1017 = vmatpush1.msra.mxu0 %v1016
    %1018 = vmatprep.subr.mxu0 0.0
    %v1019 = vand.u32 %v30, 4294901760
    %v1020 = vsub.f32 %v30, %v1019
    %v1021 = vand.u32 %v1020, 4294901760
    %1022 = vmatpush1.msra.mxu0 %v1021
    %1023 = vmatprep.subr.mxu0 0.0
    %v1024 = vand.u32 %v31, 4294901760
    %v1025 = vsub.f32 %v31, %v1024
    %v1026 = vand.u32 %v1025, 4294901760
    %1027 = vmatpush1.msra.mxu0 %v1026
    %1028 = vmatprep.subr.mxu0 0.0
    %v1029 = vand.u32 %v32, 4294901760
    %v1030 = vsub.f32 %v32, %v1029
    %v1031 = vand.u32 %v1030, 4294901760
    %1032 = vmatpush1.msra.mxu0 %v1031
    %1033 = vmatprep.subr.mxu0 0.0
    %v1034 = vand.u32 %v33, 4294901760
    %v1035 = vsub.f32 %v33, %v1034
    %v1036 = vand.u32 %v1035, 4294901760
    %1037 = vmatpush1.msra.mxu0 %v1036
    %1038 = vmatprep.subr.mxu0 0.0
    %1039 = vmatpush1.msra.mxu0 0.0
    %1040 = vmatprep.subr.mxu0 0.0
    %1041 = vmatpush1.msra.mxu0 0.0
    %1042 = vmatprep.subr.mxu0 0.0
    %1043 = vmatpush1.msra.mxu0 0.0
    %1044 = vmatprep.subr.mxu0 0.0
    %1045 = vmatpush1.msra.mxu0 0.0
    %1046 = vmatprep.subr.mxu0 0.0
    %1047 = vmatpush1.msra.mxu0 0.0
    %1048 = vmatprep.subr.mxu0 0.0
    %1049 = vmatpush1.msra.mxu0 0.0
    %1050 = vmatprep.subr.mxu0 0.0
    %1051 = vmatpush1.msra.mxu0 0.0
    %1052 = vmatprep.subr.mxu0 0.0
    %1053 = vmatpush1.msra.mxu0 0.0
    %1054 = vmatprep.subr.mxu0 0.0
    %1055 = vmatpush1.msra.mxu0 0.0
    %1056 = vmatprep.subr.mxu0 0.0
    %1057 = vmatpush1.msra.mxu0 0.0
    %1058 = vmatprep.subr.mxu0 0.0
    %1059 = vmatpush1.msra.mxu0 0.0
    %1060 = vmatprep.subr.mxu0 0.0
    %1061 = vmatpush1.msra.mxu0 0.0
    %1062 = vmatprep.subr.mxu0 0.0
    %1063 = vmatpush1.msra.mxu0 0.0
    %1064 = vmatprep.subr.mxu0 0.0
    %1065 = vmatpush1.msra.mxu0 0.0
    %1066 = vmatprep.subr.mxu0 0.0
    %1067 = vmatpush1.msra.mxu0 0.0
    %1068 = vmatprep.subr.mxu0 0.0
    %1069 = vmatpush1.msra.mxu0 0.0
    %1070 = vmatprep.subr.mxu0 0.0
    %1071 = vmatpush1.msra.mxu0 0.0
    %1072 = vmatprep.subr.mxu0 0.0
    %1073 = vmatpush1.msra.mxu0 0.0
    %1074 = vmatprep.subr.mxu0 0.0
    %1075 = vmatpush1.msra.mxu0 0.0
    %1076 = vmatprep.subr.mxu0 0.0
    %1077 = vmatpush1.msra.mxu0 0.0
    %1078 = vmatprep.subr.mxu0 0.0
    %1079 = vmatpush1.msra.mxu0 0.0
    %1080 = vmatprep.subr.mxu0 0.0
    %1081 = vmatpush1.msra.mxu0 0.0
    %1082 = vmatprep.subr.mxu0 0.0
    %1083 = vmatpush1.msra.mxu0 0.0
    %1084 = vmatprep.subr.mxu0 0.0
    %1085 = vmatpush1.msra.mxu0 0.0
    %1086 = vmatprep.mubr.f32.mxu0 0.0
    %v1087 = vand.u32 %v633, 4294901760
    %1088 = vmatmul.mubr.f32.gmra.mrb[0].mxu0 %v1087
    %v1089 = vpop.f32.mrb[0].mxu0
    %v1090 = vadd.f32 %v995, %v1089
    %v1091 = vpop.f32.mrb[0].mxu0
    %1092 = vdwg.mxu0
    %1093 = vmatprep.subr.mxu0 0.0
    %v1094 = vand.u32 %v26, 4294901760
    %1095 = vmatpush1.msra.mxu0 %v1094
    %1096 = vmatprep.subr.mxu0 0.0
    %v1097 = vand.u32 %v27, 4294901760
    %1098 = vmatpush1.msra.mxu0 %v1097
    %1099 = vmatprep.subr.mxu0 0.0
    %v1100 = vand.u32 %v28, 4294901760
    %1101 = vmatpush1.msra.mxu0 %v1100
    %1102 = vmatprep.subr.mxu0 0.0
    %v1103 = vand.u32 %v29, 4294901760
    %1104 = vmatpush1.msra.mxu0 %v1103
    %1105 = vmatprep.subr.mxu0 0.0
    %v1106 = vand.u32 %v30, 4294901760
    %1107 = vmatpush1.msra.mxu0 %v1106
    %1108 = vmatprep.subr.mxu0 0.0
    %v1109 = vand.u32 %v31, 4294901760
    %1110 = vmatpush1.msra.mxu0 %v1109
    %1111 = vmatprep.subr.mxu0 0.0
    %v1112 = vand.u32 %v32, 4294901760
    %1113 = vmatpush1.msra.mxu0 %v1112
    %1114 = vmatprep.subr.mxu0 0.0
    %v1115 = vand.u32 %v33, 4294901760
    %1116 = vmatpush1.msra.mxu0 %v1115
    %1117 = vmatprep.subr.mxu0 0.0
    %1118 = vmatpush1.msra.mxu0 0.0
    %1119 = vmatprep.subr.mxu0 0.0
    %1120 = vmatpush1.msra.mxu0 0.0
    %1121 = vmatprep.subr.mxu0 0.0
    %1122 = vmatpush1.msra.mxu0 0.0
    %1123 = vmatprep.subr.mxu0 0.0
    %1124 = vmatpush1.msra.mxu0 0.0
    %1125 = vmatprep.subr.mxu0 0.0
    %1126 = vmatpush1.msra.mxu0 0.0
    %1127 = vmatprep.subr.mxu0 0.0
    %1128 = vmatpush1.msra.mxu0 0.0
    %1129 = vmatprep.subr.mxu0 0.0
    %1130 = vmatpush1.msra.mxu0 0.0
    %1131 = vmatprep.subr.mxu0 0.0
    %1132 = vmatpush1.msra.mxu0 0.0
    %1133 = vmatprep.subr.mxu0 0.0
    %1134 = vmatpush1.msra.mxu0 0.0
    %1135 = vmatprep.subr.mxu0 0.0
    %1136 = vmatpush1.msra.mxu0 0.0
    %1137 = vmatprep.subr.mxu0 0.0
    %1138 = vmatpush1.msra.mxu0 0.0
    %1139 = vmatprep.subr.mxu0 0.0
    %1140 = vmatpush1.msra.mxu0 0.0
    %1141 = vmatprep.subr.mxu0 0.0
    %1142 = vmatpush1.msra.mxu0 0.0
    %1143 = vmatprep.subr.mxu0 0.0
    %1144 = vmatpush1.msra.mxu0 0.0
    %1145 = vmatprep.subr.mxu0 0.0
    %1146 = vmatpush1.msra.mxu0 0.0
    %1147 = vmatprep.subr.mxu0 0.0
    %1148 = vmatpush1.msra.mxu0 0.0
    %1149 = vmatprep.subr.mxu0 0.0
    %1150 = vmatpush1.msra.mxu0 0.0
    %1151 = vmatprep.subr.mxu0 0.0
    %1152 = vmatpush1.msra.mxu0 0.0
    %1153 = vmatprep.subr.mxu0 0.0
    %1154 = vmatpush1.msra.mxu0 0.0
    %1155 = vmatprep.subr.mxu0 0.0
    %1156 = vmatpush1.msra.mxu0 0.0
    %1157 = vmatprep.subr.mxu0 0.0
    %1158 = vmatpush1.msra.mxu0 0.0
    %1159 = vmatprep.subr.mxu0 0.0
    %1160 = vmatpush1.msra.mxu0 0.0
    %1161 = vmatprep.subr.mxu0 0.0
    %1162 = vmatpush1.msra.mxu0 0.0
    %1163 = vmatprep.subr.mxu0 0.0
    %1164 = vmatpush1.msra.mxu0 0.0
    %1165 = vmatprep.mubr.f32.mxu0 0.0
    %v1166 = vand.u32 %v633, 4294901760
    %1167 = vmatmul.mubr.f32.gmra.mrb[0].mxu0 %v1166
    %v1168 = vpop.f32.mrb[0].mxu0
    %v1169 = vadd.f32 %v1090, %v1168
    %v1170 = vpop.f32.mrb[0].mxu0
    %1171 = vdwg.mxu0
    %v1172 = vsub.f32 %v25, %v628
    %v1173 = vmul.f32 %v628, %v628
    %v1174 = vsub.f32 %v1169, %v1173
    %v1175 = vadd.f32 %v1174, 1e-05
    %v1176 = vrsqrt.pop %v1175
    %v1177 = vmul.f32 %v1172, %v1176
    %v1178 = vlaneseq
    %v1179 = vshrl.u32 %v1178, 7
    %v1180 = vsub.s32 0, %v1179
    %v1181 = vrot.slane %v84, %v1180
    %v1183 = vsel %vm90, %v1177, 0
    %1185 = vmatprep.subr.mxu0 0.0
    %v1186 = vand.u32 %v34, 4294901760
    %1187 = vmatpush1.msra.mxu0 %v1186
    %1188 = vmatprep.subr.mxu0 0.0
    %v1189 = vand.u32 %v35, 4294901760
    %1190 = vmatpush1.msra.mxu0 %v1189
    %1191 = vmatprep.subr.mxu0 0.0
    %v1192 = vand.u32 %v36, 4294901760
    %1193 = vmatpush1.msra.mxu0 %v1192
    %1194 = vmatprep.subr.mxu0 0.0
    %v1195 = vand.u32 %v37, 4294901760
    %1196 = vmatpush1.msra.mxu0 %v1195
    %1197 = vmatprep.subr.mxu0 0.0
    %v1198 = vand.u32 %v38, 4294901760
    %1199 = vmatpush1.msra.mxu0 %v1198
    %1200 = vmatprep.subr.mxu0 0.0
    %v1201 = vand.u32 %v39, 4294901760
    %1202 = vmatpush1.msra.mxu0 %v1201
    %1203 = vmatprep.subr.mxu0 0.0
    %v1204 = vand.u32 %v40, 4294901760
    %1205 = vmatpush1.msra.mxu0 %v1204
    %1206 = vmatprep.subr.mxu0 0.0
    %v1207 = vand.u32 %v41, 4294901760
    %1208 = vmatpush1.msra.mxu0 %v1207
    %1209 = vmatprep.subr.mxu0 0.0
    %1210 = vmatpush1.msra.mxu0 0.0
    %1211 = vmatprep.subr.mxu0 0.0
    %1212 = vmatpush1.msra.mxu0 0.0
    %1213 = vmatprep.subr.mxu0 0.0
    %1214 = vmatpush1.msra.mxu0 0.0
    %1215 = vmatprep.subr.mxu0 0.0
    %1216 = vmatpush1.msra.mxu0 0.0
    %1217 = vmatprep.subr.mxu0 0.0
    %1218 = vmatpush1.msra.mxu0 0.0
    %1219 = vmatprep.subr.mxu0 0.0
    %1220 = vmatpush1.msra.mxu0 0.0
    %1221 = vmatprep.subr.mxu0 0.0
    %1222 = vmatpush1.msra.mxu0 0.0
    %1223 = vmatprep.subr.mxu0 0.0
    %1224 = vmatpush1.msra.mxu0 0.0
    %1225 = vmatprep.subr.mxu0 0.0
    %1226 = vmatpush1.msra.mxu0 0.0
    %1227 = vmatprep.subr.mxu0 0.0
    %1228 = vmatpush1.msra.mxu0 0.0
    %1229 = vmatprep.subr.mxu0 0.0
    %1230 = vmatpush1.msra.mxu0 0.0
    %1231 = vmatprep.subr.mxu0 0.0
    %1232 = vmatpush1.msra.mxu0 0.0
    %1233 = vmatprep.subr.mxu0 0.0
    %1234 = vmatpush1.msra.mxu0 0.0
    %1235 = vmatprep.subr.mxu0 0.0
    %1236 = vmatpush1.msra.mxu0 0.0
    %1237 = vmatprep.subr.mxu0 0.0
    %1238 = vmatpush1.msra.mxu0 0.0
    %1239 = vmatprep.subr.mxu0 0.0
    %1240 = vmatpush1.msra.mxu0 0.0
    %1241 = vmatprep.subr.mxu0 0.0
    %1242 = vmatpush1.msra.mxu0 0.0
    %1243 = vmatprep.subr.mxu0 0.0
    %1244 = vmatpush1.msra.mxu0 0.0
    %1245 = vmatprep.subr.mxu0 0.0
    %1246 = vmatpush1.msra.mxu0 0.0
    %1247 = vmatprep.subr.mxu0 0.0
    %1248 = vmatpush1.msra.mxu0 0.0
    %1249 = vmatprep.subr.mxu0 0.0
    %1250 = vmatpush1.msra.mxu0 0.0
    %1251 = vmatprep.subr.mxu0 0.0
    %1252 = vmatpush1.msra.mxu0 0.0
    %1253 = vmatprep.subr.mxu0 0.0
    %1254 = vmatpush1.msra.mxu0 0.0
    %1255 = vmatprep.subr.mxu0 0.0
    %1256 = vmatpush1.msra.mxu0 0.0
    %1257 = vmatprep.mubr.f32.mxu0 0.0
    %v1258 = vand.u32 %v1183, 4294901760
    %v1259 = vsub.f32 %v1183, %v1258
    %v1260 = vand.u32 %v1259, 4294901760
    %v1261 = vsub.f32 %v1259, %v1260
    %v1262 = vand.u32 %v1261, 4294901760
    %1263 = vmatmul.mubr.f32.gmra.mrb[0].mxu0 %v1262
    %v1264 = vpop.f32.mrb[0].mxu0
    %v1265 = vadd.f32 %v1181, %v1264
    %v1266 = vpop.f32.mrb[0].mxu0
    %1267 = vdwg.mxu0
    %1268 = vmatprep.subr.mxu0 0.0
    %v1269 = vand.u32 %v34, 4294901760
    %v1270 = vsub.f32 %v34, %v1269
    %v1271 = vand.u32 %v1270, 4294901760
    %v1272 = vsub.f32 %v1270, %v1271
    %v1273 = vand.u32 %v1272, 4294901760
    %1274 = vmatpush1.msra.mxu0 %v1273
    %1275 = vmatprep.subr.mxu0 0.0
    %v1276 = vand.u32 %v35, 4294901760
    %v1277 = vsub.f32 %v35, %v1276
    %v1278 = vand.u32 %v1277, 4294901760
    %v1279 = vsub.f32 %v1277, %v1278
    %v1280 = vand.u32 %v1279, 4294901760
    %1281 = vmatpush1.msra.mxu0 %v1280
    %1282 = vmatprep.subr.mxu0 0.0
    %v1283 = vand.u32 %v36, 4294901760
    %v1284 = vsub.f32 %v36, %v1283
    %v1285 = vand.u32 %v1284, 4294901760
    %v1286 = vsub.f32 %v1284, %v1285
    %v1287 = vand.u32 %v1286, 4294901760
    %1288 = vmatpush1.msra.mxu0 %v1287
    %1289 = vmatprep.subr.mxu0 0.0
    %v1290 = vand.u32 %v37, 4294901760
    %v1291 = vsub.f32 %v37, %v1290
    %v1292 = vand.u32 %v1291, 4294901760
    %v1293 = vsub.f32 %v1291, %v1292
    %v1294 = vand.u32 %v1293, 4294901760
    %1295 = vmatpush1.msra.mxu0 %v1294
    %1296 = vmatprep.subr.mxu0 0.0
    %v1297 = vand.u32 %v38, 4294901760
    %v1298 = vsub.f32 %v38, %v1297
    %v1299 = vand.u32 %v1298, 4294901760
    %v1300 = vsub.f32 %v1298, %v1299
    %v1301 = vand.u32 %v1300, 4294901760
    %1302 = vmatpush1.msra.mxu0 %v1301
    %1303 = vmatprep.subr.mxu0 0.0
    %v1304 = vand.u32 %v39, 4294901760
    %v1305 = vsub.f32 %v39, %v1304
    %v1306 = vand.u32 %v1305, 4294901760
    %v1307 = vsub.f32 %v1305, %v1306
    %v1308 = vand.u32 %v1307, 4294901760
    %1309 = vmatpush1.msra.mxu0 %v1308
    %1310 = vmatprep.subr.mxu0 0.0
    %v1311 = vand.u32 %v40, 4294901760
    %v1312 = vsub.f32 %v40, %v1311
    %v1313 = vand.u32 %v1312, 4294901760
    %v1314 = vsub.f32 %v1312, %v1313
    %v1315 = vand.u32 %v1314, 4294901760
    %1316 = vmatpush1.msra.mxu0 %v1315
    %1317 = vmatprep.subr.mxu0 0.0
    %v1318 = vand.u32 %v41, 4294901760
    %v1319 = vsub.f32 %v41, %v1318
    %v1320 = vand.u32 %v1319, 4294901760
    %v1321 = vsub.f32 %v1319, %v1320
    %v1322 = vand.u32 %v1321, 4294901760
    %1323 = vmatpush1.msra.mxu0 %v1322
    %1324 = vmatprep.subr.mxu0 0.0
    %1325 = vmatpush1.msra.mxu0 0.0
    %1326 = vmatprep.subr.mxu0 0.0
    %1327 = vmatpush1.msra.mxu0 0.0
    %1328 = vmatprep.subr.mxu0 0.0
    %1329 = vmatpush1.msra.mxu0 0.0
    %1330 = vmatprep.subr.mxu0 0.0
    %1331 = vmatpush1.msra.mxu0 0.0
    %1332 = vmatprep.subr.mxu0 0.0
    %1333 = vmatpush1.msra.mxu0 0.0
    %1334 = vmatprep.subr.mxu0 0.0
    %1335 = vmatpush1.msra.mxu0 0.0
    %1336 = vmatprep.subr.mxu0 0.0
    %1337 = vmatpush1.msra.mxu0 0.0
    %1338 = vmatprep.subr.mxu0 0.0
    %1339 = vmatpush1.msra.mxu0 0.0
    %1340 = vmatprep.subr.mxu0 0.0
    %1341 = vmatpush1.msra.mxu0 0.0
    %1342 = vmatprep.subr.mxu0 0.0
    %1343 = vmatpush1.msra.mxu0 0.0
    %1344 = vmatprep.subr.mxu0 0.0
    %1345 = vmatpush1.msra.mxu0 0.0
    %1346 = vmatprep.subr.mxu0 0.0
    %1347 = vmatpush1.msra.mxu0 0.0
    %1348 = vmatprep.subr.mxu0 0.0
    %1349 = vmatpush1.msra.mxu0 0.0
    %1350 = vmatprep.subr.mxu0 0.0
    %1351 = vmatpush1.msra.mxu0 0.0
    %1352 = vmatprep.subr.mxu0 0.0
    %1353 = vmatpush1.msra.mxu0 0.0
    %1354 = vmatprep.subr.mxu0 0.0
    %1355 = vmatpush1.msra.mxu0 0.0
    %1356 = vmatprep.subr.mxu0 0.0
    %1357 = vmatpush1.msra.mxu0 0.0
    %1358 = vmatprep.subr.mxu0 0.0
    %1359 = vmatpush1.msra.mxu0 0.0
    %1360 = vmatprep.subr.mxu0 0.0
    %1361 = vmatpush1.msra.mxu0 0.0
    %1362 = vmatprep.subr.mxu0 0.0
    %1363 = vmatpush1.msra.mxu0 0.0
    %1364 = vmatprep.subr.mxu0 0.0
    %1365 = vmatpush1.msra.mxu0 0.0
    %1366 = vmatprep.subr.mxu0 0.0
    %1367 = vmatpush1.msra.mxu0 0.0
    %1368 = vmatprep.subr.mxu0 0.0
    %1369 = vmatpush1.msra.mxu0 0.0
    %1370 = vmatprep.subr.mxu0 0.0
    %1371 = vmatpush1.msra.mxu0 0.0
    %1372 = vmatprep.mubr.f32.mxu0 0.0
    %v1373 = vand.u32 %v1183, 4294901760
    %1374 = vmatmul.mubr.f32.gmra.mrb[0].mxu0 %v1373
    %v1375 = vpop.f32.mrb[0].mxu0
    %v1376 = vadd.f32 %v1265, %v1375
    %v1377 = vpop.f32.mrb[0].mxu0
    %1378 = vdwg.mxu0
    %1379 = vmatprep.subr.mxu0 0.0
    %v1380 = vand.u32 %v34, 4294901760
    %v1381 = vsub.f32 %v34, %v1380
    %1382 = vmatpush1.msra.mxu0 %v1381
    %1383 = vmatprep.subr.mxu0 0.0
    %v1384 = vand.u32 %v35, 4294901760
    %v1385 = vsub.f32 %v35, %v1384
    %1386 = vmatpush1.msra.mxu0 %v1385
    %1387 = vmatprep.subr.mxu0 0.0
    %v1388 = vand.u32 %v36, 4294901760
    %v1389 = vsub.f32 %v36, %v1388
    %1390 = vmatpush1.msra.mxu0 %v1389
    %1391 = vmatprep.subr.mxu0 0.0
    %v1392 = vand.u32 %v37, 4294901760
    %v1393 = vsub.f32 %v37, %v1392
    %1394 = vmatpush1.msra.mxu0 %v1393
    %1395 = vmatprep.subr.mxu0 0.0
    %v1396 = vand.u32 %v38, 4294901760
    %v1397 = vsub.f32 %v38, %v1396
    %1398 = vmatpush1.msra.mxu0 %v1397
    %1399 = vmatprep.subr.mxu0 0.0
    %v1400 = vand.u32 %v39, 4294901760
    %v1401 = vsub.f32 %v39, %v1400
    %1402 = vmatpush1.msra.mxu0 %v1401
    %1403 = vmatprep.subr.mxu0 0.0
    %v1404 = vand.u32 %v40, 4294901760
    %v1405 = vsub.f32 %v40, %v1404
    %1406 = vmatpush1.msra.mxu0 %v1405
    %1407 = vmatprep.subr.mxu0 0.0
    %v1408 = vand.u32 %v41, 4294901760
    %v1409 = vsub.f32 %v41, %v1408
    %1410 = vmatpush1.msra.mxu0 %v1409
    %1411 = vmatprep.subr.mxu0 0.0
    %1412 = vmatpush1.msra.mxu0 0.0
    %1413 = vmatprep.subr.mxu0 0.0
    %1414 = vmatpush1.msra.mxu0 0.0
    %1415 = vmatprep.subr.mxu0 0.0
    %1416 = vmatpush1.msra.mxu0 0.0
    %1417 = vmatprep.subr.mxu0 0.0
    %1418 = vmatpush1.msra.mxu0 0.0
    %1419 = vmatprep.subr.mxu0 0.0
    %1420 = vmatpush1.msra.mxu0 0.0
    %1421 = vmatprep.subr.mxu0 0.0
    %1422 = vmatpush1.msra.mxu0 0.0
    %1423 = vmatprep.subr.mxu0 0.0
    %1424 = vmatpush1.msra.mxu0 0.0
    %1425 = vmatprep.subr.mxu0 0.0
    %1426 = vmatpush1.msra.mxu0 0.0
    %1427 = vmatprep.subr.mxu0 0.0
    %1428 = vmatpush1.msra.mxu0 0.0
    %1429 = vmatprep.subr.mxu0 0.0
    %1430 = vmatpush1.msra.mxu0 0.0
    %1431 = vmatprep.subr.mxu0 0.0
    %1432 = vmatpush1.msra.mxu0 0.0
    %1433 = vmatprep.subr.mxu0 0.0
    %1434 = vmatpush1.msra.mxu0 0.0
    %1435 = vmatprep.subr.mxu0 0.0
    %1436 = vmatpush1.msra.mxu0 0.0
    %1437 = vmatprep.subr.mxu0 0.0
    %1438 = vmatpush1.msra.mxu0 0.0
    %1439 = vmatprep.subr.mxu0 0.0
    %1440 = vmatpush1.msra.mxu0 0.0
    %1441 = vmatprep.subr.mxu0 0.0
    %1442 = vmatpush1.msra.mxu0 0.0
    %1443 = vmatprep.subr.mxu0 0.0
    %1444 = vmatpush1.msra.mxu0 0.0
    %1445 = vmatprep.subr.mxu0 0.0
    %1446 = vmatpush1.msra.mxu0 0.0
    %1447 = vmatprep.subr.mxu0 0.0
    %1448 = vmatpush1.msra.mxu0 0.0
    %1449 = vmatprep.subr.mxu0 0.0
    %1450 = vmatpush1.msra.mxu0 0.0
    %1451 = vmatprep.subr.mxu0 0.0
    %1452 = vmatpush1.msra.mxu0 0.0
    %1453 = vmatprep.subr.mxu0 0.0
    %1454 = vmatpush1.msra.mxu0 0.0
    %1455 = vmatprep.subr.mxu0 0.0
    %1456 = vmatpush1.msra.mxu0 0.0
    %1457 = vmatprep.subr.mxu0 0.0
    %1458 = vmatpush1.msra.mxu0 0.0
    %1459 = vmatprep.mubr.f32.mxu0 0.0
    %v1460 = vand.u32 %v1183, 4294901760
    %v1461 = vsub.f32 %v1183, %v1460
    %1462 = vmatmul.mubr.f32.gmra.mrb[0].mxu0 %v1461
    %v1463 = vpop.f32.mrb[0].mxu0
    %v1464 = vadd.f32 %v1376, %v1463
    %v1465 = vpop.f32.mrb[0].mxu0
    %1466 = vdwg.mxu0
    %1467 = vmatprep.subr.mxu0 0.0
    %v1468 = vand.u32 %v34, 4294901760
    %1469 = vmatpush1.msra.mxu0 %v1468
    %1470 = vmatprep.subr.mxu0 0.0
    %v1471 = vand.u32 %v35, 4294901760
    %1472 = vmatpush1.msra.mxu0 %v1471
    %1473 = vmatprep.subr.mxu0 0.0
    %v1474 = vand.u32 %v36, 4294901760
    %1475 = vmatpush1.msra.mxu0 %v1474
    %1476 = vmatprep.subr.mxu0 0.0
    %v1477 = vand.u32 %v37, 4294901760
    %1478 = vmatpush1.msra.mxu0 %v1477
    %1479 = vmatprep.subr.mxu0 0.0
    %v1480 = vand.u32 %v38, 4294901760
    %1481 = vmatpush1.msra.mxu0 %v1480
    %1482 = vmatprep.subr.mxu0 0.0
    %v1483 = vand.u32 %v39, 4294901760
    %1484 = vmatpush1.msra.mxu0 %v1483
    %1485 = vmatprep.subr.mxu0 0.0
    %v1486 = vand.u32 %v40, 4294901760
    %1487 = vmatpush1.msra.mxu0 %v1486
    %1488 = vmatprep.subr.mxu0 0.0
    %v1489 = vand.u32 %v41, 4294901760
    %1490 = vmatpush1.msra.mxu0 %v1489
    %1491 = vmatprep.subr.mxu0 0.0
    %1492 = vmatpush1.msra.mxu0 0.0
    %1493 = vmatprep.subr.mxu0 0.0
    %1494 = vmatpush1.msra.mxu0 0.0
    %1495 = vmatprep.subr.mxu0 0.0
    %1496 = vmatpush1.msra.mxu0 0.0
    %1497 = vmatprep.subr.mxu0 0.0
    %1498 = vmatpush1.msra.mxu0 0.0
    %1499 = vmatprep.subr.mxu0 0.0
    %1500 = vmatpush1.msra.mxu0 0.0
    %1501 = vmatprep.subr.mxu0 0.0
    %1502 = vmatpush1.msra.mxu0 0.0
    %1503 = vmatprep.subr.mxu0 0.0
    %1504 = vmatpush1.msra.mxu0 0.0
    %1505 = vmatprep.subr.mxu0 0.0
    %1506 = vmatpush1.msra.mxu0 0.0
    %1507 = vmatprep.subr.mxu0 0.0
    %1508 = vmatpush1.msra.mxu0 0.0
    %1509 = vmatprep.subr.mxu0 0.0
    %1510 = vmatpush1.msra.mxu0 0.0
    %1511 = vmatprep.subr.mxu0 0.0
    %1512 = vmatpush1.msra.mxu0 0.0
    %1513 = vmatprep.subr.mxu0 0.0
    %1514 = vmatpush1.msra.mxu0 0.0
    %1515 = vmatprep.subr.mxu0 0.0
    %1516 = vmatpush1.msra.mxu0 0.0
    %1517 = vmatprep.subr.mxu0 0.0
    %1518 = vmatpush1.msra.mxu0 0.0
    %1519 = vmatprep.subr.mxu0 0.0
    %1520 = vmatpush1.msra.mxu0 0.0
    %1521 = vmatprep.subr.mxu0 0.0
    %1522 = vmatpush1.msra.mxu0 0.0
    %1523 = vmatprep.subr.mxu0 0.0
    %1524 = vmatpush1.msra.mxu0 0.0
    %1525 = vmatprep.subr.mxu0 0.0
    %1526 = vmatpush1.msra.mxu0 0.0
    %1527 = vmatprep.subr.mxu0 0.0
    %1528 = vmatpush1.msra.mxu0 0.0
    %1529 = vmatprep.subr.mxu0 0.0
    %1530 = vmatpush1.msra.mxu0 0.0
    %1531 = vmatprep.subr.mxu0 0.0
    %1532 = vmatpush1.msra.mxu0 0.0
    %1533 = vmatprep.subr.mxu0 0.0
    %1534 = vmatpush1.msra.mxu0 0.0
    %1535 = vmatprep.subr.mxu0 0.0
    %1536 = vmatpush1.msra.mxu0 0.0
    %1537 = vmatprep.subr.mxu0 0.0
    %1538 = vmatpush1.msra.mxu0 0.0
    %1539 = vmatprep.mubr.f32.mxu0 0.0
    %v1540 = vand.u32 %v1183, 4294901760
    %v1541 = vsub.f32 %v1183, %v1540
    %v1542 = vand.u32 %v1541, 4294901760
    %1543 = vmatmul.mubr.f32.gmra.mrb[0].mxu0 %v1542
    %v1544 = vpop.f32.mrb[0].mxu0
    %v1545 = vadd.f32 %v1464, %v1544
    %v1546 = vpop.f32.mrb[0].mxu0
    %1547 = vdwg.mxu0
    %1548 = vmatprep.subr.mxu0 0.0
    %v1549 = vand.u32 %v34, 4294901760
    %v1550 = vsub.f32 %v34, %v1549
    %v1551 = vand.u32 %v1550, 4294901760
    %1552 = vmatpush1.msra.mxu0 %v1551
    %1553 = vmatprep.subr.mxu0 0.0
    %v1554 = vand.u32 %v35, 4294901760
    %v1555 = vsub.f32 %v35, %v1554
    %v1556 = vand.u32 %v1555, 4294901760
    %1557 = vmatpush1.msra.mxu0 %v1556
    %1558 = vmatprep.subr.mxu0 0.0
    %v1559 = vand.u32 %v36, 4294901760
    %v1560 = vsub.f32 %v36, %v1559
    %v1561 = vand.u32 %v1560, 4294901760
    %1562 = vmatpush1.msra.mxu0 %v1561
    %1563 = vmatprep.subr.mxu0 0.0
    %v1564 = vand.u32 %v37, 4294901760
    %v1565 = vsub.f32 %v37, %v1564
    %v1566 = vand.u32 %v1565, 4294901760
    %1567 = vmatpush1.msra.mxu0 %v1566
    %1568 = vmatprep.subr.mxu0 0.0
    %v1569 = vand.u32 %v38, 4294901760
    %v1570 = vsub.f32 %v38, %v1569
    %v1571 = vand.u32 %v1570, 4294901760
    %1572 = vmatpush1.msra.mxu0 %v1571
    %1573 = vmatprep.subr.mxu0 0.0
    %v1574 = vand.u32 %v39, 4294901760
    %v1575 = vsub.f32 %v39, %v1574
    %v1576 = vand.u32 %v1575, 4294901760
    %1577 = vmatpush1.msra.mxu0 %v1576
    %1578 = vmatprep.subr.mxu0 0.0
    %v1579 = vand.u32 %v40, 4294901760
    %v1580 = vsub.f32 %v40, %v1579
    %v1581 = vand.u32 %v1580, 4294901760
    %1582 = vmatpush1.msra.mxu0 %v1581
    %1583 = vmatprep.subr.mxu0 0.0
    %v1584 = vand.u32 %v41, 4294901760
    %v1585 = vsub.f32 %v41, %v1584
    %v1586 = vand.u32 %v1585, 4294901760
    %1587 = vmatpush1.msra.mxu0 %v1586
    %1588 = vmatprep.subr.mxu0 0.0
    %1589 = vmatpush1.msra.mxu0 0.0
    %1590 = vmatprep.subr.mxu0 0.0
    %1591 = vmatpush1.msra.mxu0 0.0
    %1592 = vmatprep.subr.mxu0 0.0
    %1593 = vmatpush1.msra.mxu0 0.0
    %1594 = vmatprep.subr.mxu0 0.0
    %1595 = vmatpush1.msra.mxu0 0.0
    %1596 = vmatprep.subr.mxu0 0.0
    %1597 = vmatpush1.msra.mxu0 0.0
    %1598 = vmatprep.subr.mxu0 0.0
    %1599 = vmatpush1.msra.mxu0 0.0
    %1600 = vmatprep.subr.mxu0 0.0
    %1601 = vmatpush1.msra.mxu0 0.0
    %1602 = vmatprep.subr.mxu0 0.0
    %1603 = vmatpush1.msra.mxu0 0.0
    %1604 = vmatprep.subr.mxu0 0.0
    %1605 = vmatpush1.msra.mxu0 0.0
    %1606 = vmatprep.subr.mxu0 0.0
    %1607 = vmatpush1.msra.mxu0 0.0
    %1608 = vmatprep.subr.mxu0 0.0
    %1609 = vmatpush1.msra.mxu0 0.0
    %1610 = vmatprep.subr.mxu0 0.0
    %1611 = vmatpush1.msra.mxu0 0.0
    %1612 = vmatprep.subr.mxu0 0.0
    %1613 = vmatpush1.msra.mxu0 0.0
    %1614 = vmatprep.subr.mxu0 0.0
    %1615 = vmatpush1.msra.mxu0 0.0
    %1616 = vmatprep.subr.mxu0 0.0
    %1617 = vmatpush1.msra.mxu0 0.0
    %1618 = vmatprep.subr.mxu0 0.0
    %1619 = vmatpush1.msra.mxu0 0.0
    %1620 = vmatprep.subr.mxu0 0.0
    %1621 = vmatpush1.msra.mxu0 0.0
    %1622 = vmatprep.subr.mxu0 0.0
    %1623 = vmatpush1.msra.mxu0 0.0
    %1624 = vmatprep.subr.mxu0 0.0
    %1625 = vmatpush1.msra.mxu0 0.0
    %1626 = vmatprep.subr.mxu0 0.0
    %1627 = vmatpush1.msra.mxu0 0.0
    %1628 = vmatprep.subr.mxu0 0.0
    %1629 = vmatpush1.msra.mxu0 0.0
    %1630 = vmatprep.subr.mxu0 0.0
    %1631 = vmatpush1.msra.mxu0 0.0
    %1632 = vmatprep.subr.mxu0 0.0
    %1633 = vmatpush1.msra.mxu0 0.0
    %1634 = vmatprep.subr.mxu0 0.0
    %1635 = vmatpush1.msra.mxu0 0.0
    %1636 = vmatprep.mubr.f32.mxu0 0.0
    %v1637 = vand.u32 %v1183, 4294901760
    %1638 = vmatmul.mubr.f32.gmra.mrb[0].mxu0 %v1637
    %v1639 = vpop.f32.mrb[0].mxu0
    %v1640 = vadd.f32 %v1545, %v1639
    %v1641 = vpop.f32.mrb[0].mxu0
    %1642 = vdwg.mxu0
    %1643 = vmatprep.subr.mxu0 0.0
    %v1644 = vand.u32 %v34, 4294901760
    %1645 = vmatpush1.msra.mxu0 %v1644
    %1646 = vmatprep.subr.mxu0 0.0
    %v1647 = vand.u32 %v35, 4294901760
    %1648 = vmatpush1.msra.mxu0 %v1647
    %1649 = vmatprep.subr.mxu0 0.0
    %v1650 = vand.u32 %v36, 4294901760
    %1651 = vmatpush1.msra.mxu0 %v1650
    %1652 = vmatprep.subr.mxu0 0.0
    %v1653 = vand.u32 %v37, 4294901760
    %1654 = vmatpush1.msra.mxu0 %v1653
    %1655 = vmatprep.subr.mxu0 0.0
    %v1656 = vand.u32 %v38, 4294901760
    %1657 = vmatpush1.msra.mxu0 %v1656
    %1658 = vmatprep.subr.mxu0 0.0
    %v1659 = vand.u32 %v39, 4294901760
    %1660 = vmatpush1.msra.mxu0 %v1659
    %1661 = vmatprep.subr.mxu0 0.0
    %v1662 = vand.u32 %v40, 4294901760
    %1663 = vmatpush1.msra.mxu0 %v1662
    %1664 = vmatprep.subr.mxu0 0.0
    %v1665 = vand.u32 %v41, 4294901760
    %1666 = vmatpush1.msra.mxu0 %v1665
    %1667 = vmatprep.subr.mxu0 0.0
    %1668 = vmatpush1.msra.mxu0 0.0
    %1669 = vmatprep.subr.mxu0 0.0
    %1670 = vmatpush1.msra.mxu0 0.0
    %1671 = vmatprep.subr.mxu0 0.0
    %1672 = vmatpush1.msra.mxu0 0.0
    %1673 = vmatprep.subr.mxu0 0.0
    %1674 = vmatpush1.msra.mxu0 0.0
    %1675 = vmatprep.subr.mxu0 0.0
    %1676 = vmatpush1.msra.mxu0 0.0
    %1677 = vmatprep.subr.mxu0 0.0
    %1678 = vmatpush1.msra.mxu0 0.0
    %1679 = vmatprep.subr.mxu0 0.0
    %1680 = vmatpush1.msra.mxu0 0.0
    %1681 = vmatprep.subr.mxu0 0.0
    %1682 = vmatpush1.msra.mxu0 0.0
    %1683 = vmatprep.subr.mxu0 0.0
    %1684 = vmatpush1.msra.mxu0 0.0
    %1685 = vmatprep.subr.mxu0 0.0
    %1686 = vmatpush1.msra.mxu0 0.0
    %1687 = vmatprep.subr.mxu0 0.0
    %1688 = vmatpush1.msra.mxu0 0.0
    %1689 = vmatprep.subr.mxu0 0.0
    %1690 = vmatpush1.msra.mxu0 0.0
    %1691 = vmatprep.subr.mxu0 0.0
    %1692 = vmatpush1.msra.mxu0 0.0
    %1693 = vmatprep.subr.mxu0 0.0
    %1694 = vmatpush1.msra.mxu0 0.0
    %1695 = vmatprep.subr.mxu0 0.0
    %1696 = vmatpush1.msra.mxu0 0.0
    %1697 = vmatprep.subr.mxu0 0.0
    %1698 = vmatpush1.msra.mxu0 0.0
    %1699 = vmatprep.subr.mxu0 0.0
    %1700 = vmatpush1.msra.mxu0 0.0
    %1701 = vmatprep.subr.mxu0 0.0
    %1702 = vmatpush1.msra.mxu0 0.0
    %1703 = vmatprep.subr.mxu0 0.0
    %1704 = vmatpush1.msra.mxu0 0.0
    %1705 = vmatprep.subr.mxu0 0.0
    %1706 = vmatpush1.msra.mxu0 0.0
    %1707 = vmatprep.subr.mxu0 0.0
    %1708 = vmatpush1.msra.mxu0 0.0
    %1709 = vmatprep.subr.mxu0 0.0
    %1710 = vmatpush1.msra.mxu0 0.0
    %1711 = vmatprep.subr.mxu0 0.0
    %1712 = vmatpush1.msra.mxu0 0.0
    %1713 = vmatprep.subr.mxu0 0.0
    %1714 = vmatpush1.msra.mxu0 0.0
    %1715 = vmatprep.mubr.f32.mxu0 0.0
    %v1716 = vand.u32 %v1183, 4294901760
    %1717 = vmatmul.mubr.f32.gmra.mrb[0].mxu0 %v1716
    %v1718 = vpop.f32.mrb[0].mxu0
    %v1719 = vadd.f32 %v1640, %v1718
    %v1720 = vpop.f32.mrb[0].mxu0
    %1721 = vdwg.mxu0
    %v1722 = vsub.f32 0.0, %v1719
    %v1723 = vmul.f32 %v1722, 1.442695
    %v1724 = vpow.pop %v1723
    %v1725 = vadd.f32 %v1724, 1.0
    %v1726 = vrcp.pop %v1725
    %v1727 = vmul.f32 1.0, %v1726
    %v1728 = vmul.f32 %v1719, %v1727
    %v1729 = vlaneseq
    %v1730 = vshrl.u32 %v1729, 7
    %v1731 = vlaneseq
    %v1732 = vand.u32 %v1731, 127
    %v1733 = vadd.s32 %v1730, %v1732
    %vm1734 = vcmp.eq.s32.totalorder %v1733, 7
    %v1735 = vsel %vm1734, 1, 0
    %v1736 = vcvt.s32.f32 %v1735
    %vm1737 = vcmask 64512
    %v1739 = vsel %vm1737, %v1736, 0
    %1741 = vmatprep.subr.mxu0 0.0
    %v1742 = vand.u32 %v1719, 4294901760
    %1743 = vmatpush1.msra.mxu0 %v1742
    %1744 = vmatprep.subr.mxu0 0.0
    %1745 = vmatpush1.msra.mxu0 0.0
    %1746 = vmatprep.subr.mxu0 0.0
    %1747 = vmatpush1.msra.mxu0 0.0
    %1748 = vmatprep.subr.mxu0 0.0
    %1749 = vmatpush1.msra.mxu0 0.0
    %1750 = vmatprep.subr.mxu0 0.0
    %1751 = vmatpush1.msra.mxu0 0.0
    %1752 = vmatprep.subr.mxu0 0.0
    %1753 = vmatpush1.msra.mxu0 0.0
    %1754 = vmatprep.subr.mxu0 0.0
    %1755 = vmatpush1.msra.mxu0 0.0
    %1756 = vmatprep.subr.mxu0 0.0
    %1757 = vmatpush1.msra.mxu0 0.0
    %1758 = vmatprep.subr.mxu0 0.0
    %1759 = vmatpush1.msra.mxu0 0.0
    %1760 = vmatprep.subr.mxu0 0.0
    %1761 = vmatpush1.msra.mxu0 0.0
    %1762 = vmatprep.subr.mxu0 0.0
    %1763 = vmatpush1.msra.mxu0 0.0
    %1764 = vmatprep.subr.mxu0 0.0
    %1765 = vmatpush1.msra.mxu0 0.0
    %1766 = vmatprep.subr.mxu0 0.0
    %1767 = vmatpush1.msra.mxu0 0.0
    %1768 = vmatprep.subr.mxu0 0.0
    %1769 = vmatpush1.msra.mxu0 0.0
    %1770 = vmatprep.subr.mxu0 0.0
    %1771 = vmatpush1.msra.mxu0 0.0
    %1772 = vmatprep.subr.mxu0 0.0
    %1773 = vmatpush1.msra.mxu0 0.0
    %1774 = vmatprep.subr.mxu0 0.0
    %1775 = vmatpush1.msra.mxu0 0.0
    %1776 = vmatprep.subr.mxu0 0.0
    %1777 = vmatpush1.msra.mxu0 0.0
    %1778 = vmatprep.subr.mxu0 0.0
    %1779 = vmatpush1.msra.mxu0 0.0
    %1780 = vmatprep.subr.mxu0 0.0
    %1781 = vmatpush1.msra.mxu0 0.0
    %1782 = vmatprep.subr.mxu0 0.0
    %1783 = vmatpush1.msra.mxu0 0.0
    %1784 = vmatprep.subr.mxu0 0.0
    %1785 = vmatpush1.msra.mxu0 0.0
    %1786 = vmatprep.subr.mxu0 0.0
    %1787 = vmatpush1.msra.mxu0 0.0
    %1788 = vmatprep.subr.mxu0 0.0
    %1789 = vmatpush1.msra.mxu0 0.0
    %1790 = vmatprep.subr.mxu0 0.0
    %1791 = vmatpush1.msra.mxu0 0.0
    %1792 = vmatprep.subr.mxu0 0.0
    %1793 = vmatpush1.msra.mxu0 0.0
    %1794 = vmatprep.subr.mxu0 0.0
    %1795 = vmatpush1.msra.mxu0 0.0
    %1796 = vmatprep.subr.mxu0 0.0
    %1797 = vmatpush1.msra.mxu0 0.0
    %1798 = vmatprep.subr.mxu0 0.0
    %1799 = vmatpush1.msra.mxu0 0.0
    %1800 = vmatprep.subr.mxu0 0.0
    %1801 = vmatpush1.msra.mxu0 0.0
    %1802 = vmatprep.subr.mxu0 0.0
    %1803 = vmatpush1.msra.mxu0 0.0
    %1804 = vmatprep.subr.mxu0 0.0
    %1805 = vmatpush1.msra.mxu0 0.0
    %1806 = vmatprep.mubr.f32.mxu0 0.0
    %v1807 = vand.u32 %v1739, 4294901760
    %v1808 = vsub.f32 %v1739, %v1807
    %v1809 = vand.u32 %v1808, 4294901760
    %v1810 = vsub.f32 %v1808, %v1809
    %v1811 = vand.u32 %v1810, 4294901760
    %1812 = vmatmul.mubr.f32.gmra.mrb[0].mxu0 %v1811
    %v1813 = vpop.f32.mrb[0].mxu0
    %v1814 = vadd.f32 0.0, %v1813
    %v1815 = vpop.f32.mrb[0].mxu0
    %1816 = vdwg.mxu0
    %1817 = vmatprep.subr.mxu0 0.0
    %v1818 = vand.u32 %v1719, 4294901760
    %v1819 = vsub.f32 %v1719, %v1818
    %v1820 = vand.u32 %v1819, 4294901760
    %v1821 = vsub.f32 %v1819, %v1820
    %v1822 = vand.u32 %v1821, 4294901760
    %1823 = vmatpush1.msra.mxu0 %v1822
    %1824 = vmatprep.subr.mxu0 0.0
    %1825 = vmatpush1.msra.mxu0 0.0
    %1826 = vmatprep.subr.mxu0 0.0
    %1827 = vmatpush1.msra.mxu0 0.0
    %1828 = vmatprep.subr.mxu0 0.0
    %1829 = vmatpush1.msra.mxu0 0.0
    %1830 = vmatprep.subr.mxu0 0.0
    %1831 = vmatpush1.msra.mxu0 0.0
    %1832 = vmatprep.subr.mxu0 0.0
    %1833 = vmatpush1.msra.mxu0 0.0
    %1834 = vmatprep.subr.mxu0 0.0
    %1835 = vmatpush1.msra.mxu0 0.0
    %1836 = vmatprep.subr.mxu0 0.0
    %1837 = vmatpush1.msra.mxu0 0.0
    %1838 = vmatprep.subr.mxu0 0.0
    %1839 = vmatpush1.msra.mxu0 0.0
    %1840 = vmatprep.subr.mxu0 0.0
    %1841 = vmatpush1.msra.mxu0 0.0
    %1842 = vmatprep.subr.mxu0 0.0
    %1843 = vmatpush1.msra.mxu0 0.0
    %1844 = vmatprep.subr.mxu0 0.0
    %1845 = vmatpush1.msra.mxu0 0.0
    %1846 = vmatprep.subr.mxu0 0.0
    %1847 = vmatpush1.msra.mxu0 0.0
    %1848 = vmatprep.subr.mxu0 0.0
    %1849 = vmatpush1.msra.mxu0 0.0
    %1850 = vmatprep.subr.mxu0 0.0
    %1851 = vmatpush1.msra.mxu0 0.0
    %1852 = vmatprep.subr.mxu0 0.0
    %1853 = vmatpush1.msra.mxu0 0.0
    %1854 = vmatprep.subr.mxu0 0.0
    %1855 = vmatpush1.msra.mxu0 0.0
    %1856 = vmatprep.subr.mxu0 0.0
    %1857 = vmatpush1.msra.mxu0 0.0
    %1858 = vmatprep.subr.mxu0 0.0
    %1859 = vmatpush1.msra.mxu0 0.0
    %1860 = vmatprep.subr.mxu0 0.0
    %1861 = vmatpush1.msra.mxu0 0.0
    %1862 = vmatprep.subr.mxu0 0.0
    %1863 = vmatpush1.msra.mxu0 0.0
    %1864 = vmatprep.subr.mxu0 0.0
    %1865 = vmatpush1.msra.mxu0 0.0
    %1866 = vmatprep.subr.mxu0 0.0
    %1867 = vmatpush1.msra.mxu0 0.0
    %1868 = vmatprep.subr.mxu0 0.0
    %1869 = vmatpush1.msra.mxu0 0.0
    %1870 = vmatprep.subr.mxu0 0.0
    %1871 = vmatpush1.msra.mxu0 0.0
    %1872 = vmatprep.subr.mxu0 0.0
    %1873 = vmatpush1.msra.mxu0 0.0
    %1874 = vmatprep.subr.mxu0 0.0
    %1875 = vmatpush1.msra.mxu0 0.0
    %1876 = vmatprep.subr.mxu0 0.0
    %1877 = vmatpush1.msra.mxu0 0.0
    %1878 = vmatprep.subr.mxu0 0.0
    %1879 = vmatpush1.msra.mxu0 0.0
    %1880 = vmatprep.subr.mxu0 0.0
    %1881 = vmatpush1.msra.mxu0 0.0
    %1882 = vmatprep.subr.mxu0 0.0
    %1883 = vmatpush1.msra.mxu0 0.0
    %1884 = vmatprep.subr.mxu0 0.0
    %1885 = vmatpush1.msra.mxu0 0.0
    %1886 = vmatprep.mubr.f32.mxu0 0.0
    %v1887 = vand.u32 %v1739, 4294901760
    %1888 = vmatmul.mubr.f32.gmra.mrb[0].mxu0 %v1887
    %v1889 = vpop.f32.mrb[0].mxu0
    %v1890 = vadd.f32 %v1814, %v1889
    %v1891 = vpop.f32.mrb[0].mxu0
    %1892 = vdwg.mxu0
    %1893 = vmatprep.subr.mxu0 0.0
    %v1894 = vand.u32 %v1719, 4294901760
    %v1895 = vsub.f32 %v1719, %v1894
    %1896 = vmatpush1.msra.mxu0 %v1895
    %1897 = vmatprep.subr.mxu0 0.0
    %1898 = vmatpush1.msra.mxu0 0.0
    %1899 = vmatprep.subr.mxu0 0.0
    %1900 = vmatpush1.msra.mxu0 0.0
    %1901 = vmatprep.subr.mxu0 0.0
    %1902 = vmatpush1.msra.mxu0 0.0
    %1903 = vmatprep.subr.mxu0 0.0
    %1904 = vmatpush1.msra.mxu0 0.0
    %1905 = vmatprep.subr.mxu0 0.0
    %1906 = vmatpush1.msra.mxu0 0.0
    %1907 = vmatprep.subr.mxu0 0.0
    %1908 = vmatpush1.msra.mxu0 0.0
    %1909 = vmatprep.subr.mxu0 0.0
    %1910 = vmatpush1.msra.mxu0 0.0
    %1911 = vmatprep.subr.mxu0 0.0
    %1912 = vmatpush1.msra.mxu0 0.0
    %1913 = vmatprep.subr.mxu0 0.0
    %1914 = vmatpush1.msra.mxu0 0.0
    %1915 = vmatprep.subr.mxu0 0.0
    %1916 = vmatpush1.msra.mxu0 0.0
    %1917 = vmatprep.subr.mxu0 0.0
    %1918 = vmatpush1.msra.mxu0 0.0
    %1919 = vmatprep.subr.mxu0 0.0
    %1920 = vmatpush1.msra.mxu0 0.0
    %1921 = vmatprep.subr.mxu0 0.0
    %1922 = vmatpush1.msra.mxu0 0.0
    %1923 = vmatprep.subr.mxu0 0.0
    %1924 = vmatpush1.msra.mxu0 0.0
    %1925 = vmatprep.subr.mxu0 0.0
    %1926 = vmatpush1.msra.mxu0 0.0
    %1927 = vmatprep.subr.mxu0 0.0
    %1928 = vmatpush1.msra.mxu0 0.0
    %1929 = vmatprep.subr.mxu0 0.0
    %1930 = vmatpush1.msra.mxu0 0.0
    %1931 = vmatprep.subr.mxu0 0.0
    %1932 = vmatpush1.msra.mxu0 0.0
    %1933 = vmatprep.subr.mxu0 0.0
    %1934 = vmatpush1.msra.mxu0 0.0
    %1935 = vmatprep.subr.mxu0 0.0
    %1936 = vmatpush1.msra.mxu0 0.0
    %1937 = vmatprep.subr.mxu0 0.0
    %1938 = vmatpush1.msra.mxu0 0.0
    %1939 = vmatprep.subr.mxu0 0.0
    %1940 = vmatpush1.msra.mxu0 0.0
    %1941 = vmatprep.subr.mxu0 0.0
    %1942 = vmatpush1.msra.mxu0 0.0
    %1943 = vmatprep.subr.mxu0 0.0
    %1944 = vmatpush1.msra.mxu0 0.0
    %1945 = vmatprep.subr.mxu0 0.0
    %1946 = vmatpush1.msra.mxu0 0.0
    %1947 = vmatprep.subr.mxu0 0.0
    %1948 = vmatpush1.msra.mxu0 0.0
    %1949 = vmatprep.subr.mxu0 0.0
    %1950 = vmatpush1.msra.mxu0 0.0
    %1951 = vmatprep.subr.mxu0 0.0
    %1952 = vmatpush1.msra.mxu0 0.0
    %1953 = vmatprep.subr.mxu0 0.0
    %1954 = vmatpush1.msra.mxu0 0.0
    %1955 = vmatprep.subr.mxu0 0.0
    %1956 = vmatpush1.msra.mxu0 0.0
    %1957 = vmatprep.subr.mxu0 0.0
    %1958 = vmatpush1.msra.mxu0 0.0
    %1959 = vmatprep.mubr.f32.mxu0 0.0
    %v1960 = vand.u32 %v1739, 4294901760
    %v1961 = vsub.f32 %v1739, %v1960
    %1962 = vmatmul.mubr.f32.gmra.mrb[0].mxu0 %v1961
    %v1963 = vpop.f32.mrb[0].mxu0
    %v1964 = vadd.f32 %v1890, %v1963
    %v1965 = vpop.f32.mrb[0].mxu0
    %1966 = vdwg.mxu0
    %1967 = vmatprep.subr.mxu0 0.0
    %v1968 = vand.u32 %v1719, 4294901760
    %1969 = vmatpush1.msra.mxu0 %v1968
    %1970 = vmatprep.subr.mxu0 0.0
    %1971 = vmatpush1.msra.mxu0 0.0
    %1972 = vmatprep.subr.mxu0 0.0
    %1973 = vmatpush1.msra.mxu0 0.0
    %1974 = vmatprep.subr.mxu0 0.0
    %1975 = vmatpush1.msra.mxu0 0.0
    %1976 = vmatprep.subr.mxu0 0.0
    %1977 = vmatpush1.msra.mxu0 0.0
    %1978 = vmatprep.subr.mxu0 0.0
    %1979 = vmatpush1.msra.mxu0 0.0
    %1980 = vmatprep.subr.mxu0 0.0
    %1981 = vmatpush1.msra.mxu0 0.0
    %1982 = vmatprep.subr.mxu0 0.0
    %1983 = vmatpush1.msra.mxu0 0.0
    %1984 = vmatprep.subr.mxu0 0.0
    %1985 = vmatpush1.msra.mxu0 0.0
    %1986 = vmatprep.subr.mxu0 0.0
    %1987 = vmatpush1.msra.mxu0 0.0
    %1988 = vmatprep.subr.mxu0 0.0
    %1989 = vmatpush1.msra.mxu0 0.0
    %1990 = vmatprep.subr.mxu0 0.0
    %1991 = vmatpush1.msra.mxu0 0.0
    %1992 = vmatprep.subr.mxu0 0.0
    %1993 = vmatpush1.msra.mxu0 0.0
    %1994 = vmatprep.subr.mxu0 0.0
    %1995 = vmatpush1.msra.mxu0 0.0
    %1996 = vmatprep.subr.mxu0 0.0
    %1997 = vmatpush1.msra.mxu0 0.0
    %1998 = vmatprep.subr.mxu0 0.0
    %1999 = vmatpush1.msra.mxu0 0.0
    %2000 = vmatprep.subr.mxu0 0.0
    %2001 = vmatpush1.msra.mxu0 0.0
    %2002 = vmatprep.subr.mxu0 0.0
    %2003 = vmatpush1.msra.mxu0 0.0
    %2004 = vmatprep.subr.mxu0 0.0
    %2005 = vmatpush1.msra.mxu0 0.0
    %2006 = vmatprep.subr.mxu0 0.0
    %2007 = vmatpush1.msra.mxu0 0.0
    %2008 = vmatprep.subr.mxu0 0.0
    %2009 = vmatpush1.msra.mxu0 0.0
    %2010 = vmatprep.subr.mxu0 0.0
    %2011 = vmatpush1.msra.mxu0 0.0
    %2012 = vmatprep.subr.mxu0 0.0
    %2013 = vmatpush1.msra.mxu0 0.0
    %2014 = vmatprep.subr.mxu0 0.0
    %2015 = vmatpush1.msra.mxu0 0.0
    %2016 = vmatprep.subr.mxu0 0.0
    %2017 = vmatpush1.msra.mxu0 0.0
    %2018 = vmatprep.subr.mxu0 0.0
    %2019 = vmatpush1.msra.mxu0 0.0
    %2020 = vmatprep.subr.mxu0 0.0
    %2021 = vmatpush1.msra.mxu0 0.0
    %2022 = vmatprep.subr.mxu0 0.0
    %2023 = vmatpush1.msra.mxu0 0.0
    %2024 = vmatprep.subr.mxu0 0.0
    %2025 = vmatpush1.msra.mxu0 0.0
    %2026 = vmatprep.subr.mxu0 0.0
    %2027 = vmatpush1.msra.mxu0 0.0
    %2028 = vmatprep.subr.mxu0 0.0
    %2029 = vmatpush1.msra.mxu0 0.0
    %2030 = vmatprep.subr.mxu0 0.0
    %2031 = vmatpush1.msra.mxu0 0.0
    %2032 = vmatprep.mubr.f32.mxu0 0.0
    %v2033 = vand.u32 %v1739, 4294901760
    %v2034 = vsub.f32 %v1739, %v2033
    %v2035 = vand.u32 %v2034, 4294901760
    %2036 = vmatmul.mubr.f32.gmra.mrb[0].mxu0 %v2035
    %v2037 = vpop.f32.mrb[0].mxu0
    %v2038 = vadd.f32 %v1964, %v2037
    %v2039 = vpop.f32.mrb[0].mxu0
    %2040 = vdwg.mxu0
    %2041 = vmatprep.subr.mxu0 0.0
    %v2042 = vand.u32 %v1719, 4294901760
    %v2043 = vsub.f32 %v1719, %v2042
    %v2044 = vand.u32 %v2043, 4294901760
    %2045 = vmatpush1.msra.mxu0 %v2044
    %2046 = vmatprep.subr.mxu0 0.0
    %2047 = vmatpush1.msra.mxu0 0.0
    %2048 = vmatprep.subr.mxu0 0.0
    %2049 = vmatpush1.msra.mxu0 0.0
    %2050 = vmatprep.subr.mxu0 0.0
    %2051 = vmatpush1.msra.mxu0 0.0
    %2052 = vmatprep.subr.mxu0 0.0
    %2053 = vmatpush1.msra.mxu0 0.0
    %2054 = vmatprep.subr.mxu0 0.0
    %2055 = vmatpush1.msra.mxu0 0.0
    %2056 = vmatprep.subr.mxu0 0.0
    %2057 = vmatpush1.msra.mxu0 0.0
    %2058 = vmatprep.subr.mxu0 0.0
    %2059 = vmatpush1.msra.mxu0 0.0
    %2060 = vmatprep.subr.mxu0 0.0
    %2061 = vmatpush1.msra.mxu0 0.0
    %2062 = vmatprep.subr.mxu0 0.0
    %2063 = vmatpush1.msra.mxu0 0.0
    %2064 = vmatprep.subr.mxu0 0.0
    %2065 = vmatpush1.msra.mxu0 0.0
    %2066 = vmatprep.subr.mxu0 0.0
    %2067 = vmatpush1.msra.mxu0 0.0
    %2068 = vmatprep.subr.mxu0 0.0
    %2069 = vmatpush1.msra.mxu0 0.0
    %2070 = vmatprep.subr.mxu0 0.0
    %2071 = vmatpush1.msra.mxu0 0.0
    %2072 = vmatprep.subr.mxu0 0.0
    %2073 = vmatpush1.msra.mxu0 0.0
    %2074 = vmatprep.subr.mxu0 0.0
    %2075 = vmatpush1.msra.mxu0 0.0
    %2076 = vmatprep.subr.mxu0 0.0
    %2077 = vmatpush1.msra.mxu0 0.0
    %2078 = vmatprep.subr.mxu0 0.0
    %2079 = vmatpush1.msra.mxu0 0.0
    %2080 = vmatprep.subr.mxu0 0.0
    %2081 = vmatpush1.msra.mxu0 0.0
    %2082 = vmatprep.subr.mxu0 0.0
    %2083 = vmatpush1.msra.mxu0 0.0
    %2084 = vmatprep.subr.mxu0 0.0
    %2085 = vmatpush1.msra.mxu0 0.0
    %2086 = vmatprep.subr.mxu0 0.0
    %2087 = vmatpush1.msra.mxu0 0.0
    %2088 = vmatprep.subr.mxu0 0.0
    %2089 = vmatpush1.msra.mxu0 0.0
    %2090 = vmatprep.subr.mxu0 0.0
    %2091 = vmatpush1.msra.mxu0 0.0
    %2092 = vmatprep.subr.mxu0 0.0
    %2093 = vmatpush1.msra.mxu0 0.0
    %2094 = vmatprep.subr.mxu0 0.0
    %2095 = vmatpush1.msra.mxu0 0.0
    %2096 = vmatprep.subr.mxu0 0.0
    %2097 = vmatpush1.msra.mxu0 0.0
    %2098 = vmatprep.subr.mxu0 0.0
    %2099 = vmatpush1.msra.mxu0 0.0
    %2100 = vmatprep.subr.mxu0 0.0
    %2101 = vmatpush1.msra.mxu0 0.0
    %2102 = vmatprep.subr.mxu0 0.0
    %2103 = vmatpush1.msra.mxu0 0.0
    %2104 = vmatprep.subr.mxu0 0.0
    %2105 = vmatpush1.msra.mxu0 0.0
    %2106 = vmatprep.subr.mxu0 0.0
    %2107 = vmatpush1.msra.mxu0 0.0
    %2108 = vmatprep.mubr.f32.mxu0 0.0
    %v2109 = vand.u32 %v1739, 4294901760
    %2110 = vmatmul.mubr.f32.gmra.mrb[0].mxu0 %v2109
    %v2111 = vpop.f32.mrb[0].mxu0
    %v2112 = vadd.f32 %v2038, %v2111
    %v2113 = vpop.f32.mrb[0].mxu0
    %2114 = vdwg.mxu0
    %2115 = vmatprep.subr.mxu0 0.0
    %v2116 = vand.u32 %v1719, 4294901760
    %2117 = vmatpush1.msra.mxu0 %v2116
    %2118 = vmatprep.subr.mxu0 0.0
    %2119 = vmatpush1.msra.mxu0 0.0
    %2120 = vmatprep.subr.mxu0 0.0
    %2121 = vmatpush1.msra.mxu0 0.0
    %2122 = vmatprep.subr.mxu0 0.0
    %2123 = vmatpush1.msra.mxu0 0.0
    %2124 = vmatprep.subr.mxu0 0.0
    %2125 = vmatpush1.msra.mxu0 0.0
    %2126 = vmatprep.subr.mxu0 0.0
    %2127 = vmatpush1.msra.mxu0 0.0
    %2128 = vmatprep.subr.mxu0 0.0
    %2129 = vmatpush1.msra.mxu0 0.0
    %2130 = vmatprep.subr.mxu0 0.0
    %2131 = vmatpush1.msra.mxu0 0.0
    %2132 = vmatprep.subr.mxu0 0.0
    %2133 = vmatpush1.msra.mxu0 0.0
    %2134 = vmatprep.subr.mxu0 0.0
    %2135 = vmatpush1.msra.mxu0 0.0
    %2136 = vmatprep.subr.mxu0 0.0
    %2137 = vmatpush1.msra.mxu0 0.0
    %2138 = vmatprep.subr.mxu0 0.0
    %2139 = vmatpush1.msra.mxu0 0.0
    %2140 = vmatprep.subr.mxu0 0.0
    %2141 = vmatpush1.msra.mxu0 0.0
    %2142 = vmatprep.subr.mxu0 0.0
    %2143 = vmatpush1.msra.mxu0 0.0
    %2144 = vmatprep.subr.mxu0 0.0
    %2145 = vmatpush1.msra.mxu0 0.0
    %2146 = vmatprep.subr.mxu0 0.0
    %2147 = vmatpush1.msra.mxu0 0.0
    %2148 = vmatprep.subr.mxu0 0.0
    %2149 = vmatpush1.msra.mxu0 0.0
    %2150 = vmatprep.subr.mxu0 0.0
    %2151 = vmatpush1.msra.mxu0 0.0
    %2152 = vmatprep.subr.mxu0 0.0
    %2153 = vmatpush1.msra.mxu0 0.0
    %2154 = vmatprep.subr.mxu0 0.0
    %2155 = vmatpush1.msra.mxu0 0.0
    %2156 = vmatprep.subr.mxu0 0.0
    %2157 = vmatpush1.msra.mxu0 0.0
    %2158 = vmatprep.subr.mxu0 0.0
    %2159 = vmatpush1.msra.mxu0 0.0
    %2160 = vmatprep.subr.mxu0 0.0
    %2161 = vmatpush1.msra.mxu0 0.0
    %2162 = vmatprep.subr.mxu0 0.0
    %2163 = vmatpush1.msra.mxu0 0.0
    %2164 = vmatprep.subr.mxu0 0.0
    %2165 = vmatpush1.msra.mxu0 0.0
    %2166 = vmatprep.subr.mxu0 0.0
    %2167 = vmatpush1.msra.mxu0 0.0
    %2168 = vmatprep.subr.mxu0 0.0
    %2169 = vmatpush1.msra.mxu0 0.0
    %2170 = vmatprep.subr.mxu0 0.0
    %2171 = vmatpush1.msra.mxu0 0.0
    %2172 = vmatprep.subr.mxu0 0.0
    %2173 = vmatpush1.msra.mxu0 0.0
    %2174 = vmatprep.subr.mxu0 0.0
    %2175 = vmatpush1.msra.mxu0 0.0
    %2176 = vmatprep.subr.mxu0 0.0
    %2177 = vmatpush1.msra.mxu0 0.0
    %2178 = vmatprep.subr.mxu0 0.0
    %2179 = vmatpush1.msra.mxu0 0.0
    %2180 = vmatprep.mubr.f32.mxu0 0.0
    %v2181 = vand.u32 %v1739, 4294901760
    %2182 = vmatmul.mubr.f32.gmra.mrb[0].mxu0 %v2181
    %v2183 = vpop.f32.mrb[0].mxu0
    %v2184 = vadd.f32 %v2112, %v2183
    %v2185 = vpop.f32.mrb[0].mxu0
    %2186 = vdwg.mxu0
    %2188 = vrot.lane.b32.xlu0 %v2184, 64
    %v2189 = vpop.permute.xlu0 %2188
    %v2191 = vsel %vm90, %v1719, %v2189
    %v2193 = vrot.slane %v2191, 5
    %vm2195 = vcmask 1042432
    %v2196 = vsel %vm2195, 0.0, %v2193
    %v2197 = vlaneseq
    %v2198 = vshrl.u32 %v2197, 7
    %v2199 = vsub.s32 0, %v2198
    %v2200 = vrot.slane %v87, %v2199
    %v2201 = vlaneseq
    %v2202 = vshrl.u32 %v2201, 7
    %v2203 = vsub.s32 0, %v2202
    %v2204 = vrot.slane %v89, %v2203
    %v2205 = vmul.f32 %v2196, %v2204
    %v2206 = vadd.f32 %v2200, %v2205
    %v2207 = vlaneseq
    %v2208 = vshrl.u32 %v2207, 7
    %v2209 = vsub.s32 1, %v2208
    %v2210 = vrot.slane %v89, %v2209
    %v2211 = vmul.f32 %v2196, %v2210
    %v2212 = vmul.f32 %v2193, %v2210
    %vm2215 = vcmask 1046528
    %v2216 = vrot.slane %v2211, 1
    %v2217 = vrot.slane %v2212, 1
    %v2218 = vsel %vm2215, %v2216, %v2217
    %v2220 = vadd.f32 %v2206, %v2218
    %v2221 = vlaneseq
    %v2222 = vshrl.u32 %v2221, 7
    %v2223 = vsub.s32 2, %v2222
    %v2224 = vrot.slane %v89, %v2223
    %v2225 = vmul.f32 %v2196, %v2224
    %v2226 = vmul.f32 %v2193, %v2224
    %vm2229 = vcmask 1045504
    %v2230 = vrot.slane %v2225, 2
    %v2231 = vrot.slane %v2226, 2
    %v2232 = vsel %vm2229, %v2230, %v2231
    %v2234 = vadd.f32 %v2220, %v2232
    %v2235 = vlaneseq
    %v2236 = vshrl.u32 %v2235, 7
    %v2237 = vsub.s32 3, %v2236
    %v2238 = vrot.slane %v89, %v2237
    %v2239 = vmul.f32 %v2196, %v2238
    %v2240 = vmul.f32 %v2193, %v2238
    %vm2243 = vcmask 1044480
    %v2244 = vrot.slane %v2239, 3
    %v2245 = vrot.slane %v2240, 3
    %v2246 = vsel %vm2243, %v2244, %v2245
    %v2248 = vadd.f32 %v2234, %v2246
    %v2249 = vsub.f32 0.0, %v2248
    %v2250 = vmul.f32 %v2249, 1.442695
    %v2251 = vpow.pop %v2250
    %v2252 = vadd.f32 %v2251, 1.0
    %v2253 = vrcp.pop %v2252
    %v2254 = vmul.f32 1.0, %v2253
    %v2255 = vmul.f32 %v2248, %v2254
    %v2256 = vlaneseq
    %v2257 = vshrl.u32 %v2256, 7
    %v2258 = vsub.s32 0, %v2257
    %v2259 = vrot.slane %v85, %v2258
    %2260 = vmatprep.subr.mxu0 0.0
    %v2261 = vand.u32 %v42, 4294901760
    %2262 = vmatpush1.msra.mxu0 %v2261
    %2263 = vmatprep.subr.mxu0 0.0
    %v2264 = vand.u32 %v43, 4294901760
    %2265 = vmatpush1.msra.mxu0 %v2264
    %2266 = vmatprep.subr.mxu0 0.0
    %v2267 = vand.u32 %v44, 4294901760
    %2268 = vmatpush1.msra.mxu0 %v2267
    %2269 = vmatprep.subr.mxu0 0.0
    %v2270 = vand.u32 %v45, 4294901760
    %2271 = vmatpush1.msra.mxu0 %v2270
    %2272 = vmatprep.subr.mxu0 0.0
    %v2273 = vand.u32 %v46, 4294901760
    %2274 = vmatpush1.msra.mxu0 %v2273
    %2275 = vmatprep.subr.mxu0 0.0
    %v2276 = vand.u32 %v47, 4294901760
    %2277 = vmatpush1.msra.mxu0 %v2276
    %2278 = vmatprep.subr.mxu0 0.0
    %v2279 = vand.u32 %v48, 4294901760
    %2280 = vmatpush1.msra.mxu0 %v2279
    %2281 = vmatprep.subr.mxu0 0.0
    %v2282 = vand.u32 %v49, 4294901760
    %2283 = vmatpush1.msra.mxu0 %v2282
    %2284 = vmatprep.subr.mxu0 0.0
    %v2285 = vand.u32 %v50, 4294901760
    %2286 = vmatpush1.msra.mxu0 %v2285
    %2287 = vmatprep.subr.mxu0 0.0
    %v2288 = vand.u32 %v51, 4294901760
    %2289 = vmatpush1.msra.mxu0 %v2288
    %2290 = vmatprep.subr.mxu0 0.0
    %v2291 = vand.u32 %v52, 4294901760
    %2292 = vmatpush1.msra.mxu0 %v2291
    %2293 = vmatprep.subr.mxu0 0.0
    %v2294 = vand.u32 %v53, 4294901760
    %2295 = vmatpush1.msra.mxu0 %v2294
    %2296 = vmatprep.subr.mxu0 0.0
    %v2297 = vand.u32 %v54, 4294901760
    %2298 = vmatpush1.msra.mxu0 %v2297
    %2299 = vmatprep.subr.mxu0 0.0
    %v2300 = vand.u32 %v55, 4294901760
    %2301 = vmatpush1.msra.mxu0 %v2300
    %2302 = vmatprep.subr.mxu0 0.0
    %v2303 = vand.u32 %v56, 4294901760
    %2304 = vmatpush1.msra.mxu0 %v2303
    %2305 = vmatprep.subr.mxu0 0.0
    %v2306 = vand.u32 %v57, 4294901760
    %2307 = vmatpush1.msra.mxu0 %v2306
    %2308 = vmatprep.subr.mxu0 0.0
    %2309 = vmatpush1.msra.mxu0 0.0
    %2310 = vmatprep.subr.mxu0 0.0
    %2311 = vmatpush1.msra.mxu0 0.0
    %2312 = vmatprep.subr.mxu0 0.0
    %2313 = vmatpush1.msra.mxu0 0.0
    %2314 = vmatprep.subr.mxu0 0.0
    %2315 = vmatpush1.msra.mxu0 0.0
    %2316 = vmatprep.subr.mxu0 0.0
    %2317 = vmatpush1.msra.mxu0 0.0
    %2318 = vmatprep.subr.mxu0 0.0
    %2319 = vmatpush1.msra.mxu0 0.0
    %2320 = vmatprep.subr.mxu0 0.0
    %2321 = vmatpush1.msra.mxu0 0.0
    %2322 = vmatprep.subr.mxu0 0.0
    %2323 = vmatpush1.msra.mxu0 0.0
    %2324 = vmatprep.subr.mxu0 0.0
    %2325 = vmatpush1.msra.mxu0 0.0
    %2326 = vmatprep.subr.mxu0 0.0
    %2327 = vmatpush1.msra.mxu0 0.0
    %2328 = vmatprep.subr.mxu0 0.0
    %2329 = vmatpush1.msra.mxu0 0.0
    %2330 = vmatprep.subr.mxu0 0.0
    %2331 = vmatpush1.msra.mxu0 0.0
    %2332 = vmatprep.subr.mxu0 0.0
    %2333 = vmatpush1.msra.mxu0 0.0
    %2334 = vmatprep.subr.mxu0 0.0
    %2335 = vmatpush1.msra.mxu0 0.0
    %2336 = vmatprep.subr.mxu0 0.0
    %2337 = vmatpush1.msra.mxu0 0.0
    %2338 = vmatprep.subr.mxu0 0.0
    %2339 = vmatpush1.msra.mxu0 0.0
    %2340 = vmatprep.mubr.f32.mxu0 0.0
    %v2341 = vand.u32 %v2255, 4294901760
    %v2342 = vsub.f32 %v2255, %v2341
    %v2343 = vand.u32 %v2342, 4294901760
    %v2344 = vsub.f32 %v2342, %v2343
    %v2345 = vand.u32 %v2344, 4294901760
    %2346 = vmatmul.mubr.f32.gmra.mrb[0].mxu0 %v2345
    %v2347 = vpop.f32.mrb[0].mxu0
    %v2348 = vadd.f32 %v2259, %v2347
    %v2349 = vpop.f32.mrb[0].mxu0
    %2350 = vdwg.mxu0
    %2351 = vmatprep.subr.mxu0 0.0
    %v2352 = vand.u32 %v42, 4294901760
    %v2353 = vsub.f32 %v42, %v2352
    %v2354 = vand.u32 %v2353, 4294901760
    %v2355 = vsub.f32 %v2353, %v2354
    %v2356 = vand.u32 %v2355, 4294901760
    %2357 = vmatpush1.msra.mxu0 %v2356
    %2358 = vmatprep.subr.mxu0 0.0
    %v2359 = vand.u32 %v43, 4294901760
    %v2360 = vsub.f32 %v43, %v2359
    %v2361 = vand.u32 %v2360, 4294901760
    %v2362 = vsub.f32 %v2360, %v2361
    %v2363 = vand.u32 %v2362, 4294901760
    %2364 = vmatpush1.msra.mxu0 %v2363
    %2365 = vmatprep.subr.mxu0 0.0
    %v2366 = vand.u32 %v44, 4294901760
    %v2367 = vsub.f32 %v44, %v2366
    %v2368 = vand.u32 %v2367, 4294901760
    %v2369 = vsub.f32 %v2367, %v2368
    %v2370 = vand.u32 %v2369, 4294901760
    %2371 = vmatpush1.msra.mxu0 %v2370
    %2372 = vmatprep.subr.mxu0 0.0
    %v2373 = vand.u32 %v45, 4294901760
    %v2374 = vsub.f32 %v45, %v2373
    %v2375 = vand.u32 %v2374, 4294901760
    %v2376 = vsub.f32 %v2374, %v2375
    %v2377 = vand.u32 %v2376, 4294901760
    %2378 = vmatpush1.msra.mxu0 %v2377
    %2379 = vmatprep.subr.mxu0 0.0
    %v2380 = vand.u32 %v46, 4294901760
    %v2381 = vsub.f32 %v46, %v2380
    %v2382 = vand.u32 %v2381, 4294901760
    %v2383 = vsub.f32 %v2381, %v2382
    %v2384 = vand.u32 %v2383, 4294901760
    %2385 = vmatpush1.msra.mxu0 %v2384
    %2386 = vmatprep.subr.mxu0 0.0
    %v2387 = vand.u32 %v47, 4294901760
    %v2388 = vsub.f32 %v47, %v2387
    %v2389 = vand.u32 %v2388, 4294901760
    %v2390 = vsub.f32 %v2388, %v2389
    %v2391 = vand.u32 %v2390, 4294901760
    %2392 = vmatpush1.msra.mxu0 %v2391
    %2393 = vmatprep.subr.mxu0 0.0
    %v2394 = vand.u32 %v48, 4294901760
    %v2395 = vsub.f32 %v48, %v2394
    %v2396 = vand.u32 %v2395, 4294901760
    %v2397 = vsub.f32 %v2395, %v2396
    %v2398 = vand.u32 %v2397, 4294901760
    %2399 = vmatpush1.msra.mxu0 %v2398
    %2400 = vmatprep.subr.mxu0 0.0
    %v2401 = vand.u32 %v49, 4294901760
    %v2402 = vsub.f32 %v49, %v2401
    %v2403 = vand.u32 %v2402, 4294901760
    %v2404 = vsub.f32 %v2402, %v2403
    %v2405 = vand.u32 %v2404, 4294901760
    %2406 = vmatpush1.msra.mxu0 %v2405
    %2407 = vmatprep.subr.mxu0 0.0
    %v2408 = vand.u32 %v50, 4294901760
    %v2409 = vsub.f32 %v50, %v2408
    %v2410 = vand.u32 %v2409, 4294901760
    %v2411 = vsub.f32 %v2409, %v2410
    %v2412 = vand.u32 %v2411, 4294901760
    %2413 = vmatpush1.msra.mxu0 %v2412
    %2414 = vmatprep.subr.mxu0 0.0
    %v2415 = vand.u32 %v51, 4294901760
    %v2416 = vsub.f32 %v51, %v2415
    %v2417 = vand.u32 %v2416, 4294901760
    %v2418 = vsub.f32 %v2416, %v2417
    %v2419 = vand.u32 %v2418, 4294901760
    %2420 = vmatpush1.msra.mxu0 %v2419
    %2421 = vmatprep.subr.mxu0 0.0
    %v2422 = vand.u32 %v52, 4294901760
    %v2423 = vsub.f32 %v52, %v2422
    %v2424 = vand.u32 %v2423, 4294901760
    %v2425 = vsub.f32 %v2423, %v2424
    %v2426 = vand.u32 %v2425, 4294901760
    %2427 = vmatpush1.msra.mxu0 %v2426
    %2428 = vmatprep.subr.mxu0 0.0
    %v2429 = vand.u32 %v53, 4294901760
    %v2430 = vsub.f32 %v53, %v2429
    %v2431 = vand.u32 %v2430, 4294901760
    %v2432 = vsub.f32 %v2430, %v2431
    %v2433 = vand.u32 %v2432, 4294901760
    %2434 = vmatpush1.msra.mxu0 %v2433
    %2435 = vmatprep.subr.mxu0 0.0
    %v2436 = vand.u32 %v54, 4294901760
    %v2437 = vsub.f32 %v54, %v2436
    %v2438 = vand.u32 %v2437, 4294901760
    %v2439 = vsub.f32 %v2437, %v2438
    %v2440 = vand.u32 %v2439, 4294901760
    %2441 = vmatpush1.msra.mxu0 %v2440
    %2442 = vmatprep.subr.mxu0 0.0
    %v2443 = vand.u32 %v55, 4294901760
    %v2444 = vsub.f32 %v55, %v2443
    %v2445 = vand.u32 %v2444, 4294901760
    %v2446 = vsub.f32 %v2444, %v2445
    %v2447 = vand.u32 %v2446, 4294901760
    %2448 = vmatpush1.msra.mxu0 %v2447
    %2449 = vmatprep.subr.mxu0 0.0
    %v2450 = vand.u32 %v56, 4294901760
    %v2451 = vsub.f32 %v56, %v2450
    %v2452 = vand.u32 %v2451, 4294901760
    %v2453 = vsub.f32 %v2451, %v2452
    %v2454 = vand.u32 %v2453, 4294901760
    %2455 = vmatpush1.msra.mxu0 %v2454
    %2456 = vmatprep.subr.mxu0 0.0
    %v2457 = vand.u32 %v57, 4294901760
    %v2458 = vsub.f32 %v57, %v2457
    %v2459 = vand.u32 %v2458, 4294901760
    %v2460 = vsub.f32 %v2458, %v2459
    %v2461 = vand.u32 %v2460, 4294901760
    %2462 = vmatpush1.msra.mxu0 %v2461
    %2463 = vmatprep.subr.mxu0 0.0
    %2464 = vmatpush1.msra.mxu0 0.0
    %2465 = vmatprep.subr.mxu0 0.0
    %2466 = vmatpush1.msra.mxu0 0.0
    %2467 = vmatprep.subr.mxu0 0.0
    %2468 = vmatpush1.msra.mxu0 0.0
    %2469 = vmatprep.subr.mxu0 0.0
    %2470 = vmatpush1.msra.mxu0 0.0
    %2471 = vmatprep.subr.mxu0 0.0
    %2472 = vmatpush1.msra.mxu0 0.0
    %2473 = vmatprep.subr.mxu0 0.0
    %2474 = vmatpush1.msra.mxu0 0.0
    %2475 = vmatprep.subr.mxu0 0.0
    %2476 = vmatpush1.msra.mxu0 0.0
    %2477 = vmatprep.subr.mxu0 0.0
    %2478 = vmatpush1.msra.mxu0 0.0
    %2479 = vmatprep.subr.mxu0 0.0
    %2480 = vmatpush1.msra.mxu0 0.0
    %2481 = vmatprep.subr.mxu0 0.0
    %2482 = vmatpush1.msra.mxu0 0.0
    %2483 = vmatprep.subr.mxu0 0.0
    %2484 = vmatpush1.msra.mxu0 0.0
    %2485 = vmatprep.subr.mxu0 0.0
    %2486 = vmatpush1.msra.mxu0 0.0
    %2487 = vmatprep.subr.mxu0 0.0
    %2488 = vmatpush1.msra.mxu0 0.0
    %2489 = vmatprep.subr.mxu0 0.0
    %2490 = vmatpush1.msra.mxu0 0.0
    %2491 = vmatprep.subr.mxu0 0.0
    %2492 = vmatpush1.msra.mxu0 0.0
    %2493 = vmatprep.subr.mxu0 0.0
    %2494 = vmatpush1.msra.mxu0 0.0
    %2495 = vmatprep.mubr.f32.mxu0 0.0
    %v2496 = vand.u32 %v2255, 4294901760
    %2497 = vmatmul.mubr.f32.gmra.mrb[0].mxu0 %v2496
    %v2498 = vpop.f32.mrb[0].mxu0
    %v2499 = vadd.f32 %v2348, %v2498
    %v2500 = vpop.f32.mrb[0].mxu0
    %2501 = vdwg.mxu0
    %2502 = vmatprep.subr.mxu0 0.0
    %v2503 = vand.u32 %v42, 4294901760
    %v2504 = vsub.f32 %v42, %v2503
    %2505 = vmatpush1.msra.mxu0 %v2504
    %2506 = vmatprep.subr.mxu0 0.0
    %v2507 = vand.u32 %v43, 4294901760
    %v2508 = vsub.f32 %v43, %v2507
    %2509 = vmatpush1.msra.mxu0 %v2508
    %2510 = vmatprep.subr.mxu0 0.0
    %v2511 = vand.u32 %v44, 4294901760
    %v2512 = vsub.f32 %v44, %v2511
    %2513 = vmatpush1.msra.mxu0 %v2512
    %2514 = vmatprep.subr.mxu0 0.0
    %v2515 = vand.u32 %v45, 4294901760
    %v2516 = vsub.f32 %v45, %v2515
    %2517 = vmatpush1.msra.mxu0 %v2516
    %2518 = vmatprep.subr.mxu0 0.0
    %v2519 = vand.u32 %v46, 4294901760
    %v2520 = vsub.f32 %v46, %v2519
    %2521 = vmatpush1.msra.mxu0 %v2520
    %2522 = vmatprep.subr.mxu0 0.0
    %v2523 = vand.u32 %v47, 4294901760
    %v2524 = vsub.f32 %v47, %v2523
    %2525 = vmatpush1.msra.mxu0 %v2524
    %2526 = vmatprep.subr.mxu0 0.0
    %v2527 = vand.u32 %v48, 4294901760
    %v2528 = vsub.f32 %v48, %v2527
    %2529 = vmatpush1.msra.mxu0 %v2528
    %2530 = vmatprep.subr.mxu0 0.0
    %v2531 = vand.u32 %v49, 4294901760
    %v2532 = vsub.f32 %v49, %v2531
    %2533 = vmatpush1.msra.mxu0 %v2532
    %2534 = vmatprep.subr.mxu0 0.0
    %v2535 = vand.u32 %v50, 4294901760
    %v2536 = vsub.f32 %v50, %v2535
    %2537 = vmatpush1.msra.mxu0 %v2536
    %2538 = vmatprep.subr.mxu0 0.0
    %v2539 = vand.u32 %v51, 4294901760
    %v2540 = vsub.f32 %v51, %v2539
    %2541 = vmatpush1.msra.mxu0 %v2540
    %2542 = vmatprep.subr.mxu0 0.0
    %v2543 = vand.u32 %v52, 4294901760
    %v2544 = vsub.f32 %v52, %v2543
    %2545 = vmatpush1.msra.mxu0 %v2544
    %2546 = vmatprep.subr.mxu0 0.0
    %v2547 = vand.u32 %v53, 4294901760
    %v2548 = vsub.f32 %v53, %v2547
    %2549 = vmatpush1.msra.mxu0 %v2548
    %2550 = vmatprep.subr.mxu0 0.0
    %v2551 = vand.u32 %v54, 4294901760
    %v2552 = vsub.f32 %v54, %v2551
    %2553 = vmatpush1.msra.mxu0 %v2552
    %2554 = vmatprep.subr.mxu0 0.0
    %v2555 = vand.u32 %v55, 4294901760
    %v2556 = vsub.f32 %v55, %v2555
    %2557 = vmatpush1.msra.mxu0 %v2556
    %2558 = vmatprep.subr.mxu0 0.0
    %v2559 = vand.u32 %v56, 4294901760
    %v2560 = vsub.f32 %v56, %v2559
    %2561 = vmatpush1.msra.mxu0 %v2560
    %2562 = vmatprep.subr.mxu0 0.0
    %v2563 = vand.u32 %v57, 4294901760
    %v2564 = vsub.f32 %v57, %v2563
    %2565 = vmatpush1.msra.mxu0 %v2564
    %2566 = vmatprep.subr.mxu0 0.0
    %2567 = vmatpush1.msra.mxu0 0.0
    %2568 = vmatprep.subr.mxu0 0.0
    %2569 = vmatpush1.msra.mxu0 0.0
    %2570 = vmatprep.subr.mxu0 0.0
    %2571 = vmatpush1.msra.mxu0 0.0
    %2572 = vmatprep.subr.mxu0 0.0
    %2573 = vmatpush1.msra.mxu0 0.0
    %2574 = vmatprep.subr.mxu0 0.0
    %2575 = vmatpush1.msra.mxu0 0.0
    %2576 = vmatprep.subr.mxu0 0.0
    %2577 = vmatpush1.msra.mxu0 0.0
    %2578 = vmatprep.subr.mxu0 0.0
    %2579 = vmatpush1.msra.mxu0 0.0
    %2580 = vmatprep.subr.mxu0 0.0
    %2581 = vmatpush1.msra.mxu0 0.0
    %2582 = vmatprep.subr.mxu0 0.0
    %2583 = vmatpush1.msra.mxu0 0.0
    %2584 = vmatprep.subr.mxu0 0.0
    %2585 = vmatpush1.msra.mxu0 0.0
    %2586 = vmatprep.subr.mxu0 0.0
    %2587 = vmatpush1.msra.mxu0 0.0
    %2588 = vmatprep.subr.mxu0 0.0
    %2589 = vmatpush1.msra.mxu0 0.0
    %2590 = vmatprep.subr.mxu0 0.0
    %2591 = vmatpush1.msra.mxu0 0.0
    %2592 = vmatprep.subr.mxu0 0.0
    %2593 = vmatpush1.msra.mxu0 0.0
    %2594 = vmatprep.subr.mxu0 0.0
    %2595 = vmatpush1.msra.mxu0 0.0
    %2596 = vmatprep.subr.mxu0 0.0
    %2597 = vmatpush1.msra.mxu0 0.0
    %2598 = vmatprep.mubr.f32.mxu0 0.0
    %v2599 = vand.u32 %v2255, 4294901760
    %v2600 = vsub.f32 %v2255, %v2599
    %2601 = vmatmul.mubr.f32.gmra.mrb[0].mxu0 %v2600
    %v2602 = vpop.f32.mrb[0].mxu0
    %v2603 = vadd.f32 %v2499, %v2602
    %v2604 = vpop.f32.mrb[0].mxu0
    %2605 = vdwg.mxu0
    %2606 = vmatprep.subr.mxu0 0.0
    %v2607 = vand.u32 %v42, 4294901760
    %2608 = vmatpush1.msra.mxu0 %v2607
    %2609 = vmatprep.subr.mxu0 0.0
    %v2610 = vand.u32 %v43, 4294901760
    %2611 = vmatpush1.msra.mxu0 %v2610
    %2612 = vmatprep.subr.mxu0 0.0
    %v2613 = vand.u32 %v44, 4294901760
    %2614 = vmatpush1.msra.mxu0 %v2613
    %2615 = vmatprep.subr.mxu0 0.0
    %v2616 = vand.u32 %v45, 4294901760
    %2617 = vmatpush1.msra.mxu0 %v2616
    %2618 = vmatprep.subr.mxu0 0.0
    %v2619 = vand.u32 %v46, 4294901760
    %2620 = vmatpush1.msra.mxu0 %v2619
    %2621 = vmatprep.subr.mxu0 0.0
    %v2622 = vand.u32 %v47, 4294901760
    %2623 = vmatpush1.msra.mxu0 %v2622
    %2624 = vmatprep.subr.mxu0 0.0
    %v2625 = vand.u32 %v48, 4294901760
    %2626 = vmatpush1.msra.mxu0 %v2625
    %2627 = vmatprep.subr.mxu0 0.0
    %v2628 = vand.u32 %v49, 4294901760
    %2629 = vmatpush1.msra.mxu0 %v2628
    %2630 = vmatprep.subr.mxu0 0.0
    %v2631 = vand.u32 %v50, 4294901760
    %2632 = vmatpush1.msra.mxu0 %v2631
    %2633 = vmatprep.subr.mxu0 0.0
    %v2634 = vand.u32 %v51, 4294901760
    %2635 = vmatpush1.msra.mxu0 %v2634
    %2636 = vmatprep.subr.mxu0 0.0
    %v2637 = vand.u32 %v52, 4294901760
    %2638 = vmatpush1.msra.mxu0 %v2637
    %2639 = vmatprep.subr.mxu0 0.0
    %v2640 = vand.u32 %v53, 4294901760
    %2641 = vmatpush1.msra.mxu0 %v2640
    %2642 = vmatprep.subr.mxu0 0.0
    %v2643 = vand.u32 %v54, 4294901760
    %2644 = vmatpush1.msra.mxu0 %v2643
    %2645 = vmatprep.subr.mxu0 0.0
    %v2646 = vand.u32 %v55, 4294901760
    %2647 = vmatpush1.msra.mxu0 %v2646
    %2648 = vmatprep.subr.mxu0 0.0
    %v2649 = vand.u32 %v56, 4294901760
    %2650 = vmatpush1.msra.mxu0 %v2649
    %2651 = vmatprep.subr.mxu0 0.0
    %v2652 = vand.u32 %v57, 4294901760
    %2653 = vmatpush1.msra.mxu0 %v2652
    %2654 = vmatprep.subr.mxu0 0.0
    %2655 = vmatpush1.msra.mxu0 0.0
    %2656 = vmatprep.subr.mxu0 0.0
    %2657 = vmatpush1.msra.mxu0 0.0
    %2658 = vmatprep.subr.mxu0 0.0
    %2659 = vmatpush1.msra.mxu0 0.0
    %2660 = vmatprep.subr.mxu0 0.0
    %2661 = vmatpush1.msra.mxu0 0.0
    %2662 = vmatprep.subr.mxu0 0.0
    %2663 = vmatpush1.msra.mxu0 0.0
    %2664 = vmatprep.subr.mxu0 0.0
    %2665 = vmatpush1.msra.mxu0 0.0
    %2666 = vmatprep.subr.mxu0 0.0
    %2667 = vmatpush1.msra.mxu0 0.0
    %2668 = vmatprep.subr.mxu0 0.0
    %2669 = vmatpush1.msra.mxu0 0.0
    %2670 = vmatprep.subr.mxu0 0.0
    %2671 = vmatpush1.msra.mxu0 0.0
    %2672 = vmatprep.subr.mxu0 0.0
    %2673 = vmatpush1.msra.mxu0 0.0
    %2674 = vmatprep.subr.mxu0 0.0
    %2675 = vmatpush1.msra.mxu0 0.0
    %2676 = vmatprep.subr.mxu0 0.0
    %2677 = vmatpush1.msra.mxu0 0.0
    %2678 = vmatprep.subr.mxu0 0.0
    %2679 = vmatpush1.msra.mxu0 0.0
    %2680 = vmatprep.subr.mxu0 0.0
    %2681 = vmatpush1.msra.mxu0 0.0
    %2682 = vmatprep.subr.mxu0 0.0
    %2683 = vmatpush1.msra.mxu0 0.0
    %2684 = vmatprep.subr.mxu0 0.0
    %2685 = vmatpush1.msra.mxu0 0.0
    %2686 = vmatprep.mubr.f32.mxu0 0.0
    %v2687 = vand.u32 %v2255, 4294901760
    %v2688 = vsub.f32 %v2255, %v2687
    %v2689 = vand.u32 %v2688, 4294901760
    %2690 = vmatmul.mubr.f32.gmra.mrb[0].mxu0 %v2689
    %v2691 = vpop.f32.mrb[0].mxu0
    %v2692 = vadd.f32 %v2603, %v2691
    %v2693 = vpop.f32.mrb[0].mxu0
    %2694 = vdwg.mxu0
    %2695 = vmatprep.subr.mxu0 0.0
    %v2696 = vand.u32 %v42, 4294901760
    %v2697 = vsub.f32 %v42, %v2696
    %v2698 = vand.u32 %v2697, 4294901760
    %2699 = vmatpush1.msra.mxu0 %v2698
    %2700 = vmatprep.subr.mxu0 0.0
    %v2701 = vand.u32 %v43, 4294901760
    %v2702 = vsub.f32 %v43, %v2701
    %v2703 = vand.u32 %v2702, 4294901760
    %2704 = vmatpush1.msra.mxu0 %v2703
    %2705 = vmatprep.subr.mxu0 0.0
    %v2706 = vand.u32 %v44, 4294901760
    %v2707 = vsub.f32 %v44, %v2706
    %v2708 = vand.u32 %v2707, 4294901760
    %2709 = vmatpush1.msra.mxu0 %v2708
    %2710 = vmatprep.subr.mxu0 0.0
    %v2711 = vand.u32 %v45, 4294901760
    %v2712 = vsub.f32 %v45, %v2711
    %v2713 = vand.u32 %v2712, 4294901760
    %2714 = vmatpush1.msra.mxu0 %v2713
    %2715 = vmatprep.subr.mxu0 0.0
    %v2716 = vand.u32 %v46, 4294901760
    %v2717 = vsub.f32 %v46, %v2716
    %v2718 = vand.u32 %v2717, 4294901760
    %2719 = vmatpush1.msra.mxu0 %v2718
    %2720 = vmatprep.subr.mxu0 0.0
    %v2721 = vand.u32 %v47, 4294901760
    %v2722 = vsub.f32 %v47, %v2721
    %v2723 = vand.u32 %v2722, 4294901760
    %2724 = vmatpush1.msra.mxu0 %v2723
    %2725 = vmatprep.subr.mxu0 0.0
    %v2726 = vand.u32 %v48, 4294901760
    %v2727 = vsub.f32 %v48, %v2726
    %v2728 = vand.u32 %v2727, 4294901760
    %2729 = vmatpush1.msra.mxu0 %v2728
    %2730 = vmatprep.subr.mxu0 0.0
    %v2731 = vand.u32 %v49, 4294901760
    %v2732 = vsub.f32 %v49, %v2731
    %v2733 = vand.u32 %v2732, 4294901760
    %2734 = vmatpush1.msra.mxu0 %v2733
    %2735 = vmatprep.subr.mxu0 0.0
    %v2736 = vand.u32 %v50, 4294901760
    %v2737 = vsub.f32 %v50, %v2736
    %v2738 = vand.u32 %v2737, 4294901760
    %2739 = vmatpush1.msra.mxu0 %v2738
    %2740 = vmatprep.subr.mxu0 0.0
    %v2741 = vand.u32 %v51, 4294901760
    %v2742 = vsub.f32 %v51, %v2741
    %v2743 = vand.u32 %v2742, 4294901760
    %2744 = vmatpush1.msra.mxu0 %v2743
    %2745 = vmatprep.subr.mxu0 0.0
    %v2746 = vand.u32 %v52, 4294901760
    %v2747 = vsub.f32 %v52, %v2746
    %v2748 = vand.u32 %v2747, 4294901760
    %2749 = vmatpush1.msra.mxu0 %v2748
    %2750 = vmatprep.subr.mxu0 0.0
    %v2751 = vand.u32 %v53, 4294901760
    %v2752 = vsub.f32 %v53, %v2751
    %v2753 = vand.u32 %v2752, 4294901760
    %2754 = vmatpush1.msra.mxu0 %v2753
    %2755 = vmatprep.subr.mxu0 0.0
    %v2756 = vand.u32 %v54, 4294901760
    %v2757 = vsub.f32 %v54, %v2756
    %v2758 = vand.u32 %v2757, 4294901760
    %2759 = vmatpush1.msra.mxu0 %v2758
    %2760 = vmatprep.subr.mxu0 0.0
    %v2761 = vand.u32 %v55, 4294901760
    %v2762 = vsub.f32 %v55, %v2761
    %v2763 = vand.u32 %v2762, 4294901760
    %2764 = vmatpush1.msra.mxu0 %v2763
    %2765 = vmatprep.subr.mxu0 0.0
    %v2766 = vand.u32 %v56, 4294901760
    %v2767 = vsub.f32 %v56, %v2766
    %v2768 = vand.u32 %v2767, 4294901760
    %2769 = vmatpush1.msra.mxu0 %v2768
    %2770 = vmatprep.subr.mxu0 0.0
    %v2771 = vand.u32 %v57, 4294901760
    %v2772 = vsub.f32 %v57, %v2771
    %v2773 = vand.u32 %v2772, 4294901760
    %2774 = vmatpush1.msra.mxu0 %v2773
    %2775 = vmatprep.subr.mxu0 0.0
    %2776 = vmatpush1.msra.mxu0 0.0
    %2777 = vmatprep.subr.mxu0 0.0
    %2778 = vmatpush1.msra.mxu0 0.0
    %2779 = vmatprep.subr.mxu0 0.0
    %2780 = vmatpush1.msra.mxu0 0.0
    %2781 = vmatprep.subr.mxu0 0.0
    %2782 = vmatpush1.msra.mxu0 0.0
    %2783 = vmatprep.subr.mxu0 0.0
    %2784 = vmatpush1.msra.mxu0 0.0
    %2785 = vmatprep.subr.mxu0 0.0
    %2786 = vmatpush1.msra.mxu0 0.0
    %2787 = vmatprep.subr.mxu0 0.0
    %2788 = vmatpush1.msra.mxu0 0.0
    %2789 = vmatprep.subr.mxu0 0.0
    %2790 = vmatpush1.msra.mxu0 0.0
    %2791 = vmatprep.subr.mxu0 0.0
    %2792 = vmatpush1.msra.mxu0 0.0
    %2793 = vmatprep.subr.mxu0 0.0
    %2794 = vmatpush1.msra.mxu0 0.0
    %2795 = vmatprep.subr.mxu0 0.0
    %2796 = vmatpush1.msra.mxu0 0.0
    %2797 = vmatprep.subr.mxu0 0.0
    %2798 = vmatpush1.msra.mxu0 0.0
    %2799 = vmatprep.subr.mxu0 0.0
    %2800 = vmatpush1.msra.mxu0 0.0
    %2801 = vmatprep.subr.mxu0 0.0
    %2802 = vmatpush1.msra.mxu0 0.0
    %2803 = vmatprep.subr.mxu0 0.0
    %2804 = vmatpush1.msra.mxu0 0.0
    %2805 = vmatprep.subr.mxu0 0.0
    %2806 = vmatpush1.msra.mxu0 0.0
    %2807 = vmatprep.mubr.f32.mxu0 0.0
    %v2808 = vand.u32 %v2255, 4294901760
    %2809 = vmatmul.mubr.f32.gmra.mrb[0].mxu0 %v2808
    %v2810 = vpop.f32.mrb[0].mxu0
    %v2811 = vadd.f32 %v2692, %v2810
    %v2812 = vpop.f32.mrb[0].mxu0
    %2813 = vdwg.mxu0
    %2814 = vmatprep.subr.mxu0 0.0
    %v2815 = vand.u32 %v42, 4294901760
    %2816 = vmatpush1.msra.mxu0 %v2815
    %2817 = vmatprep.subr.mxu0 0.0
    %v2818 = vand.u32 %v43, 4294901760
    %2819 = vmatpush1.msra.mxu0 %v2818
    %2820 = vmatprep.subr.mxu0 0.0
    %v2821 = vand.u32 %v44, 4294901760
    %2822 = vmatpush1.msra.mxu0 %v2821
    %2823 = vmatprep.subr.mxu0 0.0
    %v2824 = vand.u32 %v45, 4294901760
    %2825 = vmatpush1.msra.mxu0 %v2824
    %2826 = vmatprep.subr.mxu0 0.0
    %v2827 = vand.u32 %v46, 4294901760
    %2828 = vmatpush1.msra.mxu0 %v2827
    %2829 = vmatprep.subr.mxu0 0.0
    %v2830 = vand.u32 %v47, 4294901760
    %2831 = vmatpush1.msra.mxu0 %v2830
    %2832 = vmatprep.subr.mxu0 0.0
    %v2833 = vand.u32 %v48, 4294901760
    %2834 = vmatpush1.msra.mxu0 %v2833
    %2835 = vmatprep.subr.mxu0 0.0
    %v2836 = vand.u32 %v49, 4294901760
    %2837 = vmatpush1.msra.mxu0 %v2836
    %2838 = vmatprep.subr.mxu0 0.0
    %v2839 = vand.u32 %v50, 4294901760
    %2840 = vmatpush1.msra.mxu0 %v2839
    %2841 = vmatprep.subr.mxu0 0.0
    %v2842 = vand.u32 %v51, 4294901760
    %2843 = vmatpush1.msra.mxu0 %v2842
    %2844 = vmatprep.subr.mxu0 0.0
    %v2845 = vand.u32 %v52, 4294901760
    %2846 = vmatpush1.msra.mxu0 %v2845
    %2847 = vmatprep.subr.mxu0 0.0
    %v2848 = vand.u32 %v53, 4294901760
    %2849 = vmatpush1.msra.mxu0 %v2848
    %2850 = vmatprep.subr.mxu0 0.0
    %v2851 = vand.u32 %v54, 4294901760
    %2852 = vmatpush1.msra.mxu0 %v2851
    %2853 = vmatprep.subr.mxu0 0.0
    %v2854 = vand.u32 %v55, 4294901760
    %2855 = vmatpush1.msra.mxu0 %v2854
    %2856 = vmatprep.subr.mxu0 0.0
    %v2857 = vand.u32 %v56, 4294901760
    %2858 = vmatpush1.msra.mxu0 %v2857
    %2859 = vmatprep.subr.mxu0 0.0
    %v2860 = vand.u32 %v57, 4294901760
    %2861 = vmatpush1.msra.mxu0 %v2860
    %2862 = vmatprep.subr.mxu0 0.0
    %2863 = vmatpush1.msra.mxu0 0.0
    %2864 = vmatprep.subr.mxu0 0.0
    %2865 = vmatpush1.msra.mxu0 0.0
    %2866 = vmatprep.subr.mxu0 0.0
    %2867 = vmatpush1.msra.mxu0 0.0
    %2868 = vmatprep.subr.mxu0 0.0
    %2869 = vmatpush1.msra.mxu0 0.0
    %2870 = vmatprep.subr.mxu0 0.0
    %2871 = vmatpush1.msra.mxu0 0.0
    %2872 = vmatprep.subr.mxu0 0.0
    %2873 = vmatpush1.msra.mxu0 0.0
    %2874 = vmatprep.subr.mxu0 0.0
    %2875 = vmatpush1.msra.mxu0 0.0
    %2876 = vmatprep.subr.mxu0 0.0
    %2877 = vmatpush1.msra.mxu0 0.0
    %2878 = vmatprep.subr.mxu0 0.0
    %2879 = vmatpush1.msra.mxu0 0.0
    %2880 = vmatprep.subr.mxu0 0.0
    %2881 = vmatpush1.msra.mxu0 0.0
    %2882 = vmatprep.subr.mxu0 0.0
    %2883 = vmatpush1.msra.mxu0 0.0
    %2884 = vmatprep.subr.mxu0 0.0
    %2885 = vmatpush1.msra.mxu0 0.0
    %2886 = vmatprep.subr.mxu0 0.0
    %2887 = vmatpush1.msra.mxu0 0.0
    %2888 = vmatprep.subr.mxu0 0.0
    %2889 = vmatpush1.msra.mxu0 0.0
    %2890 = vmatprep.subr.mxu0 0.0
    %2891 = vmatpush1.msra.mxu0 0.0
    %2892 = vmatprep.subr.mxu0 0.0
    %2893 = vmatpush1.msra.mxu0 0.0
    %2894 = vmatprep.mubr.f32.mxu0 0.0
    %v2895 = vand.u32 %v2255, 4294901760
    %2896 = vmatmul.mubr.f32.gmra.mrb[0].mxu0 %v2895
    %v2897 = vpop.f32.mrb[0].mxu0
    %v2898 = vadd.f32 %v2811, %v2897
    %v2899 = vpop.f32.mrb[0].mxu0
    %2900 = vdwg.mxu0
    %vm2901 = vcmp.gt.f32.partialorder %v2898, 20.0
    %v2902 = vmul.f32 %v2898, 1.442695
    %v2903 = vpow.pop %v2902
    %v2904 = vadd.f32 %v2903, 1.0
    %v2905 = vlog2.pop %v2904
    %v2906 = vmul.f32 %v2905, 0.6931472
    %v2907 = vsel %vm2901, %v2898, %v2906
    %v2908 = vmul.f32 %v2907, %v2255
    %2909 = vmatprep.subr.mxu0 0.0
    %v2910 = vand.u32 %v2255, 4294901760
    %2911 = vmatpush1.xpose.msra.mxu0 %v2910
    %2912 = vmatprep.subr.mxu0 0.0
    %2913 = vmatpush1.xpose.msra.mxu0 0.0
    %2914 = vmatprep.subr.mxu0 0.0
    %2915 = vmatpush1.xpose.msra.mxu0 0.0
    %2916 = vmatprep.subr.mxu0 0.0
    %2917 = vmatpush1.xpose.msra.mxu0 0.0
    %2918 = vmatprep.subr.mxu0 0.0
    %2919 = vmatpush1.xpose.msra.mxu0 0.0
    %2920 = vmatprep.subr.mxu0 0.0
    %2921 = vmatpush1.xpose.msra.mxu0 0.0
    %2922 = vmatprep.subr.mxu0 0.0
    %2923 = vmatpush1.xpose.msra.mxu0 0.0
    %2924 = vmatprep.subr.mxu0 0.0
    %2925 = vmatpush1.xpose.msra.mxu0 0.0
    %2926 = vmatprep.subr.mxu0 0.0
    %2927 = vmatpush1.xpose.msra.mxu0 0.0
    %2928 = vmatprep.subr.mxu0 0.0
    %2929 = vmatpush1.xpose.msra.mxu0 0.0
    %2930 = vmatprep.subr.mxu0 0.0
    %2931 = vmatpush1.xpose.msra.mxu0 0.0
    %2932 = vmatprep.subr.mxu0 0.0
    %2933 = vmatpush1.xpose.msra.mxu0 0.0
    %2934 = vmatprep.subr.mxu0 0.0
    %2935 = vmatpush1.xpose.msra.mxu0 0.0
    %2936 = vmatprep.subr.mxu0 0.0
    %2937 = vmatpush1.xpose.msra.mxu0 0.0
    %2938 = vmatprep.subr.mxu0 0.0
    %2939 = vmatpush1.xpose.msra.mxu0 0.0
    %2940 = vmatprep.subr.mxu0 0.0
    %2941 = vmatpush1.xpose.msra.mxu0 0.0
    %2942 = vmatprep.subr.mxu0 0.0
    %2943 = vmatpush1.xpose.msra.mxu0 0.0
    %2944 = vmatprep.subr.mxu0 0.0
    %2945 = vmatpush1.xpose.msra.mxu0 0.0
    %2946 = vmatprep.subr.mxu0 0.0
    %2947 = vmatpush1.xpose.msra.mxu0 0.0
    %2948 = vmatprep.subr.mxu0 0.0
    %2949 = vmatpush1.xpose.msra.mxu0 0.0
    %2950 = vmatprep.subr.mxu0 0.0
    %2951 = vmatpush1.xpose.msra.mxu0 0.0
    %2952 = vmatprep.subr.mxu0 0.0
    %2953 = vmatpush1.xpose.msra.mxu0 0.0
    %2954 = vmatprep.subr.mxu0 0.0
    %2955 = vmatpush1.xpose.msra.mxu0 0.0
    %2956 = vmatprep.subr.mxu0 0.0
    %2957 = vmatpush1.xpose.msra.mxu0 0.0
    %2958 = vmatprep.subr.mxu0 0.0
    %2959 = vmatpush1.xpose.msra.mxu0 0.0
    %2960 = vmatprep.subr.mxu0 0.0
    %2961 = vmatpush1.xpose.msra.mxu0 0.0
    %2962 = vmatprep.subr.mxu0 0.0
    %2963 = vmatpush1.xpose.msra.mxu0 0.0
    %2964 = vmatprep.subr.mxu0 0.0
    %2965 = vmatpush1.xpose.msra.mxu0 0.0
    %2966 = vmatprep.subr.mxu0 0.0
    %2967 = vmatpush1.xpose.msra.mxu0 0.0
    %2968 = vmatprep.subr.mxu0 0.0
    %2969 = vmatpush1.xpose.msra.mxu0 0.0
    %2970 = vmatprep.subr.mxu0 0.0
    %2971 = vmatpush1.xpose.msra.mxu0 0.0
    %2972 = vmatprep.subr.mxu0 0.0
    %2973 = vmatpush1.xpose.msra.mxu0 0.0
    %2974 = vmatprep.mubr.f32.mxu0 0.0
    %v2975 = vand.u32 %v58, 4294901760
    %v2976 = vsub.f32 %v58, %v2975
    %v2977 = vand.u32 %v2976, 4294901760
    %v2978 = vsub.f32 %v2976, %v2977
    %v2979 = vand.u32 %v2978, 4294901760
    %2980 = vmatmul.mubr.f32.gmra.mrb[0].mxu0 %v2979
    %v2981 = vpop.f32.mrb[0].mxu0
    %v2982 = vadd.f32 0.0, %v2981
    %v2983 = vpop.f32.mrb[0].mxu0
    %2984 = vmatprep.mubr.f32.mxu0 0.0
    %v2985 = vand.u32 %v59, 4294901760
    %v2986 = vsub.f32 %v59, %v2985
    %v2987 = vand.u32 %v2986, 4294901760
    %v2988 = vsub.f32 %v2986, %v2987
    %v2989 = vand.u32 %v2988, 4294901760
    %2990 = vmatmul.mubr.f32.gmra.mrb[0].mxu0 %v2989
    %v2991 = vpop.f32.mrb[0].mxu0
    %v2992 = vadd.f32 0.0, %v2991
    %v2993 = vpop.f32.mrb[0].mxu0
    %2994 = vmatprep.mubr.f32.mxu0 0.0
    %v2995 = vand.u32 %v60, 4294901760
    %v2996 = vsub.f32 %v60, %v2995
    %v2997 = vand.u32 %v2996, 4294901760
    %v2998 = vsub.f32 %v2996, %v2997
    %v2999 = vand.u32 %v2998, 4294901760
    %3000 = vmatmul.mubr.f32.gmra.mrb[0].mxu0 %v2999
    %v3001 = vpop.f32.mrb[0].mxu0
    %v3002 = vadd.f32 0.0, %v3001
    %v3003 = vpop.f32.mrb[0].mxu0
    %3004 = vmatprep.mubr.f32.mxu0 0.0
    %v3005 = vand.u32 %v61, 4294901760
    %v3006 = vsub.f32 %v61, %v3005
    %v3007 = vand.u32 %v3006, 4294901760
    %v3008 = vsub.f32 %v3006, %v3007
    %v3009 = vand.u32 %v3008, 4294901760
    %3010 = vmatmul.mubr.f32.gmra.mrb[0].mxu0 %v3009
    %v3011 = vpop.f32.mrb[0].mxu0
    %v3012 = vadd.f32 0.0, %v3011
    %v3013 = vpop.f32.mrb[0].mxu0
    %3014 = vmatprep.mubr.f32.mxu0 0.0
    %v3015 = vand.u32 %v62, 4294901760
    %v3016 = vsub.f32 %v62, %v3015
    %v3017 = vand.u32 %v3016, 4294901760
    %v3018 = vsub.f32 %v3016, %v3017
    %v3019 = vand.u32 %v3018, 4294901760
    %3020 = vmatmul.mubr.f32.gmra.mrb[0].mxu0 %v3019
    %v3021 = vpop.f32.mrb[0].mxu0
    %v3022 = vadd.f32 0.0, %v3021
    %v3023 = vpop.f32.mrb[0].mxu0
    %3024 = vmatprep.mubr.f32.mxu0 0.0
    %v3025 = vand.u32 %v63, 4294901760
    %v3026 = vsub.f32 %v63, %v3025
    %v3027 = vand.u32 %v3026, 4294901760
    %v3028 = vsub.f32 %v3026, %v3027
    %v3029 = vand.u32 %v3028, 4294901760
    %3030 = vmatmul.mubr.f32.gmra.mrb[0].mxu0 %v3029
    %v3031 = vpop.f32.mrb[0].mxu0
    %v3032 = vadd.f32 0.0, %v3031
    %v3033 = vpop.f32.mrb[0].mxu0
    %3034 = vmatprep.mubr.f32.mxu0 0.0
    %v3035 = vand.u32 %v64, 4294901760
    %v3036 = vsub.f32 %v64, %v3035
    %v3037 = vand.u32 %v3036, 4294901760
    %v3038 = vsub.f32 %v3036, %v3037
    %v3039 = vand.u32 %v3038, 4294901760
    %3040 = vmatmul.mubr.f32.gmra.mrb[0].mxu0 %v3039
    %v3041 = vpop.f32.mrb[0].mxu0
    %v3042 = vadd.f32 0.0, %v3041
    %v3043 = vpop.f32.mrb[0].mxu0
    %3044 = vmatprep.mubr.f32.mxu0 0.0
    %v3045 = vand.u32 %v65, 4294901760
    %v3046 = vsub.f32 %v65, %v3045
    %v3047 = vand.u32 %v3046, 4294901760
    %v3048 = vsub.f32 %v3046, %v3047
    %v3049 = vand.u32 %v3048, 4294901760
    %3050 = vmatmul.mubr.f32.gmra.mrb[0].mxu0 %v3049
    %v3051 = vpop.f32.mrb[0].mxu0
    %v3052 = vadd.f32 0.0, %v3051
    %v3053 = vpop.f32.mrb[0].mxu0
    %3054 = vmatprep.mubr.f32.mxu0 0.0
    %v3055 = vand.u32 %v66, 4294901760
    %v3056 = vsub.f32 %v66, %v3055
    %v3057 = vand.u32 %v3056, 4294901760
    %v3058 = vsub.f32 %v3056, %v3057
    %v3059 = vand.u32 %v3058, 4294901760
    %3060 = vmatmul.mubr.f32.gmra.mrb[0].mxu0 %v3059
    %v3061 = vpop.f32.mrb[0].mxu0
    %v3062 = vadd.f32 0.0, %v3061
    %v3063 = vpop.f32.mrb[0].mxu0
    %3064 = vmatprep.mubr.f32.mxu0 0.0
    %v3065 = vand.u32 %v67, 4294901760
    %v3066 = vsub.f32 %v67, %v3065
    %v3067 = vand.u32 %v3066, 4294901760
    %v3068 = vsub.f32 %v3066, %v3067
    %v3069 = vand.u32 %v3068, 4294901760
    %3070 = vmatmul.mubr.f32.gmra.mrb[0].mxu0 %v3069
    %v3071 = vpop.f32.mrb[0].mxu0
    %v3072 = vadd.f32 0.0, %v3071
    %v3073 = vpop.f32.mrb[0].mxu0
    %3074 = vmatprep.mubr.f32.mxu0 0.0
    %v3075 = vand.u32 %v68, 4294901760
    %v3076 = vsub.f32 %v68, %v3075
    %v3077 = vand.u32 %v3076, 4294901760
    %v3078 = vsub.f32 %v3076, %v3077
    %v3079 = vand.u32 %v3078, 4294901760
    %3080 = vmatmul.mubr.f32.gmra.mrb[0].mxu0 %v3079
    %v3081 = vpop.f32.mrb[0].mxu0
    %v3082 = vadd.f32 0.0, %v3081
    %v3083 = vpop.f32.mrb[0].mxu0
    %3084 = vmatprep.mubr.f32.mxu0 0.0
    %v3085 = vand.u32 %v69, 4294901760
    %v3086 = vsub.f32 %v69, %v3085
    %v3087 = vand.u32 %v3086, 4294901760
    %v3088 = vsub.f32 %v3086, %v3087
    %v3089 = vand.u32 %v3088, 4294901760
    %3090 = vmatmul.mubr.f32.gmra.mrb[0].mxu0 %v3089
    %v3091 = vpop.f32.mrb[0].mxu0
    %v3092 = vadd.f32 0.0, %v3091
    %v3093 = vpop.f32.mrb[0].mxu0
    %3094 = vmatprep.mubr.f32.mxu0 0.0
    %v3095 = vand.u32 %v70, 4294901760
    %v3096 = vsub.f32 %v70, %v3095
    %v3097 = vand.u32 %v3096, 4294901760
    %v3098 = vsub.f32 %v3096, %v3097
    %v3099 = vand.u32 %v3098, 4294901760
    %3100 = vmatmul.mubr.f32.gmra.mrb[0].mxu0 %v3099
    %v3101 = vpop.f32.mrb[0].mxu0
    %v3102 = vadd.f32 0.0, %v3101
    %v3103 = vpop.f32.mrb[0].mxu0
    %3104 = vmatprep.mubr.f32.mxu0 0.0
    %v3105 = vand.u32 %v71, 4294901760
    %v3106 = vsub.f32 %v71, %v3105
    %v3107 = vand.u32 %v3106, 4294901760
    %v3108 = vsub.f32 %v3106, %v3107
    %v3109 = vand.u32 %v3108, 4294901760
    %3110 = vmatmul.mubr.f32.gmra.mrb[0].mxu0 %v3109
    %v3111 = vpop.f32.mrb[0].mxu0
    %v3112 = vadd.f32 0.0, %v3111
    %v3113 = vpop.f32.mrb[0].mxu0
    %3114 = vmatprep.mubr.f32.mxu0 0.0
    %v3115 = vand.u32 %v72, 4294901760
    %v3116 = vsub.f32 %v72, %v3115
    %v3117 = vand.u32 %v3116, 4294901760
    %v3118 = vsub.f32 %v3116, %v3117
    %v3119 = vand.u32 %v3118, 4294901760
    %3120 = vmatmul.mubr.f32.gmra.mrb[0].mxu0 %v3119
    %v3121 = vpop.f32.mrb[0].mxu0
    %v3122 = vadd.f32 0.0, %v3121
    %v3123 = vpop.f32.mrb[0].mxu0
    %3124 = vmatprep.mubr.f32.mxu0 0.0
    %v3125 = vand.u32 %v73, 4294901760
    %v3126 = vsub.f32 %v73, %v3125
    %v3127 = vand.u32 %v3126, 4294901760
    %v3128 = vsub.f32 %v3126, %v3127
    %v3129 = vand.u32 %v3128, 4294901760
    %3130 = vmatmul.mubr.f32.gmra.mrb[0].mxu0 %v3129
    %v3131 = vpop.f32.mrb[0].mxu0
    %v3132 = vadd.f32 0.0, %v3131
    %v3133 = vpop.f32.mrb[0].mxu0
    %3134 = vdwg.mxu0
    %3135 = vmatprep.subr.mxu0 0.0
    %v3136 = vand.u32 %v2255, 4294901760
    %v3137 = vsub.f32 %v2255, %v3136
    %v3138 = vand.u32 %v3137, 4294901760
    %v3139 = vsub.f32 %v3137, %v3138
    %v3140 = vand.u32 %v3139, 4294901760
    %3141 = vmatpush1.xpose.msra.mxu0 %v3140
    %3142 = vmatprep.subr.mxu0 0.0
    %3143 = vmatpush1.xpose.msra.mxu0 0.0
    %3144 = vmatprep.subr.mxu0 0.0
    %3145 = vmatpush1.xpose.msra.mxu0 0.0
    %3146 = vmatprep.subr.mxu0 0.0
    %3147 = vmatpush1.xpose.msra.mxu0 0.0
    %3148 = vmatprep.subr.mxu0 0.0
    %3149 = vmatpush1.xpose.msra.mxu0 0.0
    %3150 = vmatprep.subr.mxu0 0.0
    %3151 = vmatpush1.xpose.msra.mxu0 0.0
    %3152 = vmatprep.subr.mxu0 0.0
    %3153 = vmatpush1.xpose.msra.mxu0 0.0
    %3154 = vmatprep.subr.mxu0 0.0
    %3155 = vmatpush1.xpose.msra.mxu0 0.0
    %3156 = vmatprep.subr.mxu0 0.0
    %3157 = vmatpush1.xpose.msra.mxu0 0.0
    %3158 = vmatprep.subr.mxu0 0.0
    %3159 = vmatpush1.xpose.msra.mxu0 0.0
    %3160 = vmatprep.subr.mxu0 0.0
    %3161 = vmatpush1.xpose.msra.mxu0 0.0
    %3162 = vmatprep.subr.mxu0 0.0
    %3163 = vmatpush1.xpose.msra.mxu0 0.0
    %3164 = vmatprep.subr.mxu0 0.0
    %3165 = vmatpush1.xpose.msra.mxu0 0.0
    %3166 = vmatprep.subr.mxu0 0.0
    %3167 = vmatpush1.xpose.msra.mxu0 0.0
    %3168 = vmatprep.subr.mxu0 0.0
    %3169 = vmatpush1.xpose.msra.mxu0 0.0
    %3170 = vmatprep.subr.mxu0 0.0
    %3171 = vmatpush1.xpose.msra.mxu0 0.0
    %3172 = vmatprep.subr.mxu0 0.0
    %3173 = vmatpush1.xpose.msra.mxu0 0.0
    %3174 = vmatprep.subr.mxu0 0.0
    %3175 = vmatpush1.xpose.msra.mxu0 0.0
    %3176 = vmatprep.subr.mxu0 0.0
    %3177 = vmatpush1.xpose.msra.mxu0 0.0
    %3178 = vmatprep.subr.mxu0 0.0
    %3179 = vmatpush1.xpose.msra.mxu0 0.0
    %3180 = vmatprep.subr.mxu0 0.0
    %3181 = vmatpush1.xpose.msra.mxu0 0.0
    %3182 = vmatprep.subr.mxu0 0.0
    %3183 = vmatpush1.xpose.msra.mxu0 0.0
    %3184 = vmatprep.subr.mxu0 0.0
    %3185 = vmatpush1.xpose.msra.mxu0 0.0
    %3186 = vmatprep.subr.mxu0 0.0
    %3187 = vmatpush1.xpose.msra.mxu0 0.0
    %3188 = vmatprep.subr.mxu0 0.0
    %3189 = vmatpush1.xpose.msra.mxu0 0.0
    %3190 = vmatprep.subr.mxu0 0.0
    %3191 = vmatpush1.xpose.msra.mxu0 0.0
    %3192 = vmatprep.subr.mxu0 0.0
    %3193 = vmatpush1.xpose.msra.mxu0 0.0
    %3194 = vmatprep.subr.mxu0 0.0
    %3195 = vmatpush1.xpose.msra.mxu0 0.0
    %3196 = vmatprep.subr.mxu0 0.0
    %3197 = vmatpush1.xpose.msra.mxu0 0.0
    %3198 = vmatprep.subr.mxu0 0.0
    %3199 = vmatpush1.xpose.msra.mxu0 0.0
    %3200 = vmatprep.subr.mxu0 0.0
    %3201 = vmatpush1.xpose.msra.mxu0 0.0
    %3202 = vmatprep.subr.mxu0 0.0
    %3203 = vmatpush1.xpose.msra.mxu0 0.0
    %3204 = vmatprep.mubr.f32.mxu0 0.0
    %v3205 = vand.u32 %v58, 4294901760
    %3206 = vmatmul.mubr.f32.gmra.mrb[0].mxu0 %v3205
    %v3207 = vpop.f32.mrb[0].mxu0
    %v3208 = vadd.f32 %v2982, %v3207
    %v3209 = vpop.f32.mrb[0].mxu0
    %3210 = vmatprep.mubr.f32.mxu0 0.0
    %v3211 = vand.u32 %v59, 4294901760
    %3212 = vmatmul.mubr.f32.gmra.mrb[0].mxu0 %v3211
    %v3213 = vpop.f32.mrb[0].mxu0
    %v3214 = vadd.f32 %v2992, %v3213
    %v3215 = vpop.f32.mrb[0].mxu0
    %3216 = vmatprep.mubr.f32.mxu0 0.0
    %v3217 = vand.u32 %v60, 4294901760
    %3218 = vmatmul.mubr.f32.gmra.mrb[0].mxu0 %v3217
    %v3219 = vpop.f32.mrb[0].mxu0
    %v3220 = vadd.f32 %v3002, %v3219
    %v3221 = vpop.f32.mrb[0].mxu0
    %3222 = vmatprep.mubr.f32.mxu0 0.0
    %v3223 = vand.u32 %v61, 4294901760
    %3224 = vmatmul.mubr.f32.gmra.mrb[0].mxu0 %v3223
    %v3225 = vpop.f32.mrb[0].mxu0
    %v3226 = vadd.f32 %v3012, %v3225
    %v3227 = vpop.f32.mrb[0].mxu0
    %3228 = vmatprep.mubr.f32.mxu0 0.0
    %v3229 = vand.u32 %v62, 4294901760
    %3230 = vmatmul.mubr.f32.gmra.mrb[0].mxu0 %v3229
    %v3231 = vpop.f32.mrb[0].mxu0
    %v3232 = vadd.f32 %v3022, %v3231
    %v3233 = vpop.f32.mrb[0].mxu0
    %3234 = vmatprep.mubr.f32.mxu0 0.0
    %v3235 = vand.u32 %v63, 4294901760
    %3236 = vmatmul.mubr.f32.gmra.mrb[0].mxu0 %v3235
    %v3237 = vpop.f32.mrb[0].mxu0
    %v3238 = vadd.f32 %v3032, %v3237
    %v3239 = vpop.f32.mrb[0].mxu0
    %3240 = vmatprep.mubr.f32.mxu0 0.0
    %v3241 = vand.u32 %v64, 4294901760
    %3242 = vmatmul.mubr.f32.gmra.mrb[0].mxu0 %v3241
    %v3243 = vpop.f32.mrb[0].mxu0
    %v3244 = vadd.f32 %v3042, %v3243
    %v3245 = vpop.f32.mrb[0].mxu0
    %3246 = vmatprep.mubr.f32.mxu0 0.0
    %v3247 = vand.u32 %v65, 4294901760
    %3248 = vmatmul.mubr.f32.gmra.mrb[0].mxu0 %v3247
    %v3249 = vpop.f32.mrb[0].mxu0
    %v3250 = vadd.f32 %v3052, %v3249
    %v3251 = vpop.f32.mrb[0].mxu0
    %3252 = vmatprep.mubr.f32.mxu0 0.0
    %v3253 = vand.u32 %v66, 4294901760
    %3254 = vmatmul.mubr.f32.gmra.mrb[0].mxu0 %v3253
    %v3255 = vpop.f32.mrb[0].mxu0
    %v3256 = vadd.f32 %v3062, %v3255
    %v3257 = vpop.f32.mrb[0].mxu0
    %3258 = vmatprep.mubr.f32.mxu0 0.0
    %v3259 = vand.u32 %v67, 4294901760
    %3260 = vmatmul.mubr.f32.gmra.mrb[0].mxu0 %v3259
    %v3261 = vpop.f32.mrb[0].mxu0
    %v3262 = vadd.f32 %v3072, %v3261
    %v3263 = vpop.f32.mrb[0].mxu0
    %3264 = vmatprep.mubr.f32.mxu0 0.0
    %v3265 = vand.u32 %v68, 4294901760
    %3266 = vmatmul.mubr.f32.gmra.mrb[0].mxu0 %v3265
    %v3267 = vpop.f32.mrb[0].mxu0
    %v3268 = vadd.f32 %v3082, %v3267
    %v3269 = vpop.f32.mrb[0].mxu0
    %3270 = vmatprep.mubr.f32.mxu0 0.0
    %v3271 = vand.u32 %v69, 4294901760
    %3272 = vmatmul.mubr.f32.gmra.mrb[0].mxu0 %v3271
    %v3273 = vpop.f32.mrb[0].mxu0
    %v3274 = vadd.f32 %v3092, %v3273
    %v3275 = vpop.f32.mrb[0].mxu0
    %3276 = vmatprep.mubr.f32.mxu0 0.0
    %v3277 = vand.u32 %v70, 4294901760
    %3278 = vmatmul.mubr.f32.gmra.mrb[0].mxu0 %v3277
    %v3279 = vpop.f32.mrb[0].mxu0
    %v3280 = vadd.f32 %v3102, %v3279
    %v3281 = vpop.f32.mrb[0].mxu0
    %3282 = vmatprep.mubr.f32.mxu0 0.0
    %v3283 = vand.u32 %v71, 4294901760
    %3284 = vmatmul.mubr.f32.gmra.mrb[0].mxu0 %v3283
    %v3285 = vpop.f32.mrb[0].mxu0
    %v3286 = vadd.f32 %v3112, %v3285
    %v3287 = vpop.f32.mrb[0].mxu0
    %3288 = vmatprep.mubr.f32.mxu0 0.0
    %v3289 = vand.u32 %v72, 4294901760
    %3290 = vmatmul.mubr.f32.gmra.mrb[0].mxu0 %v3289
    %v3291 = vpop.f32.mrb[0].mxu0
    %v3292 = vadd.f32 %v3122, %v3291
    %v3293 = vpop.f32.mrb[0].mxu0
    %3294 = vmatprep.mubr.f32.mxu0 0.0
    %v3295 = vand.u32 %v73, 4294901760
    %3296 = vmatmul.mubr.f32.gmra.mrb[0].mxu0 %v3295
    %v3297 = vpop.f32.mrb[0].mxu0
    %v3298 = vadd.f32 %v3132, %v3297
    %v3299 = vpop.f32.mrb[0].mxu0
    %3300 = vdwg.mxu0
    %3301 = vmatprep.subr.mxu0 0.0
    %v3302 = vand.u32 %v2255, 4294901760
    %v3303 = vsub.f32 %v2255, %v3302
    %3304 = vmatpush1.xpose.msra.mxu0 %v3303
    %3305 = vmatprep.subr.mxu0 0.0
    %3306 = vmatpush1.xpose.msra.mxu0 0.0
    %3307 = vmatprep.subr.mxu0 0.0
    %3308 = vmatpush1.xpose.msra.mxu0 0.0
    %3309 = vmatprep.subr.mxu0 0.0
    %3310 = vmatpush1.xpose.msra.mxu0 0.0
    %3311 = vmatprep.subr.mxu0 0.0
    %3312 = vmatpush1.xpose.msra.mxu0 0.0
    %3313 = vmatprep.subr.mxu0 0.0
    %3314 = vmatpush1.xpose.msra.mxu0 0.0
    %3315 = vmatprep.subr.mxu0 0.0
    %3316 = vmatpush1.xpose.msra.mxu0 0.0
    %3317 = vmatprep.subr.mxu0 0.0
    %3318 = vmatpush1.xpose.msra.mxu0 0.0
    %3319 = vmatprep.subr.mxu0 0.0
    %3320 = vmatpush1.xpose.msra.mxu0 0.0
    %3321 = vmatprep.subr.mxu0 0.0
    %3322 = vmatpush1.xpose.msra.mxu0 0.0
    %3323 = vmatprep.subr.mxu0 0.0
    %3324 = vmatpush1.xpose.msra.mxu0 0.0
    %3325 = vmatprep.subr.mxu0 0.0
    %3326 = vmatpush1.xpose.msra.mxu0 0.0
    %3327 = vmatprep.subr.mxu0 0.0
    %3328 = vmatpush1.xpose.msra.mxu0 0.0
    %3329 = vmatprep.subr.mxu0 0.0
    %3330 = vmatpush1.xpose.msra.mxu0 0.0
    %3331 = vmatprep.subr.mxu0 0.0
    %3332 = vmatpush1.xpose.msra.mxu0 0.0
    %3333 = vmatprep.subr.mxu0 0.0
    %3334 = vmatpush1.xpose.msra.mxu0 0.0
    %3335 = vmatprep.subr.mxu0 0.0
    %3336 = vmatpush1.xpose.msra.mxu0 0.0
    %3337 = vmatprep.subr.mxu0 0.0
    %3338 = vmatpush1.xpose.msra.mxu0 0.0
    %3339 = vmatprep.subr.mxu0 0.0
    %3340 = vmatpush1.xpose.msra.mxu0 0.0
    %3341 = vmatprep.subr.mxu0 0.0
    %3342 = vmatpush1.xpose.msra.mxu0 0.0
    %3343 = vmatprep.subr.mxu0 0.0
    %3344 = vmatpush1.xpose.msra.mxu0 0.0
    %3345 = vmatprep.subr.mxu0 0.0
    %3346 = vmatpush1.xpose.msra.mxu0 0.0
    %3347 = vmatprep.subr.mxu0 0.0
    %3348 = vmatpush1.xpose.msra.mxu0 0.0
    %3349 = vmatprep.subr.mxu0 0.0
    %3350 = vmatpush1.xpose.msra.mxu0 0.0
    %3351 = vmatprep.subr.mxu0 0.0
    %3352 = vmatpush1.xpose.msra.mxu0 0.0
    %3353 = vmatprep.subr.mxu0 0.0
    %3354 = vmatpush1.xpose.msra.mxu0 0.0
    %3355 = vmatprep.subr.mxu0 0.0
    %3356 = vmatpush1.xpose.msra.mxu0 0.0
    %3357 = vmatprep.subr.mxu0 0.0
    %3358 = vmatpush1.xpose.msra.mxu0 0.0
    %3359 = vmatprep.subr.mxu0 0.0
    %3360 = vmatpush1.xpose.msra.mxu0 0.0
    %3361 = vmatprep.subr.mxu0 0.0
    %3362 = vmatpush1.xpose.msra.mxu0 0.0
    %3363 = vmatprep.subr.mxu0 0.0
    %3364 = vmatpush1.xpose.msra.mxu0 0.0
    %3365 = vmatprep.subr.mxu0 0.0
    %3366 = vmatpush1.xpose.msra.mxu0 0.0
    %3367 = vmatprep.mubr.f32.mxu0 0.0
    %v3368 = vand.u32 %v58, 4294901760
    %v3369 = vsub.f32 %v58, %v3368
    %3370 = vmatmul.mubr.f32.gmra.mrb[0].mxu0 %v3369
    %v3371 = vpop.f32.mrb[0].mxu0
    %v3372 = vadd.f32 %v3208, %v3371
    %v3373 = vpop.f32.mrb[0].mxu0
    %3374 = vmatprep.mubr.f32.mxu0 0.0
    %v3375 = vand.u32 %v59, 4294901760
    %v3376 = vsub.f32 %v59, %v3375
    %3377 = vmatmul.mubr.f32.gmra.mrb[0].mxu0 %v3376
    %v3378 = vpop.f32.mrb[0].mxu0
    %v3379 = vadd.f32 %v3214, %v3378
    %v3380 = vpop.f32.mrb[0].mxu0
    %3381 = vmatprep.mubr.f32.mxu0 0.0
    %v3382 = vand.u32 %v60, 4294901760
    %v3383 = vsub.f32 %v60, %v3382
    %3384 = vmatmul.mubr.f32.gmra.mrb[0].mxu0 %v3383
    %v3385 = vpop.f32.mrb[0].mxu0
    %v3386 = vadd.f32 %v3220, %v3385
    %v3387 = vpop.f32.mrb[0].mxu0
    %3388 = vmatprep.mubr.f32.mxu0 0.0
    %v3389 = vand.u32 %v61, 4294901760
    %v3390 = vsub.f32 %v61, %v3389
    %3391 = vmatmul.mubr.f32.gmra.mrb[0].mxu0 %v3390
    %v3392 = vpop.f32.mrb[0].mxu0
    %v3393 = vadd.f32 %v3226, %v3392
    %v3394 = vpop.f32.mrb[0].mxu0
    %3395 = vmatprep.mubr.f32.mxu0 0.0
    %v3396 = vand.u32 %v62, 4294901760
    %v3397 = vsub.f32 %v62, %v3396
    %3398 = vmatmul.mubr.f32.gmra.mrb[0].mxu0 %v3397
    %v3399 = vpop.f32.mrb[0].mxu0
    %v3400 = vadd.f32 %v3232, %v3399
    %v3401 = vpop.f32.mrb[0].mxu0
    %3402 = vmatprep.mubr.f32.mxu0 0.0
    %v3403 = vand.u32 %v63, 4294901760
    %v3404 = vsub.f32 %v63, %v3403
    %3405 = vmatmul.mubr.f32.gmra.mrb[0].mxu0 %v3404
    %v3406 = vpop.f32.mrb[0].mxu0
    %v3407 = vadd.f32 %v3238, %v3406
    %v3408 = vpop.f32.mrb[0].mxu0
    %3409 = vmatprep.mubr.f32.mxu0 0.0
    %v3410 = vand.u32 %v64, 4294901760
    %v3411 = vsub.f32 %v64, %v3410
    %3412 = vmatmul.mubr.f32.gmra.mrb[0].mxu0 %v3411
    %v3413 = vpop.f32.mrb[0].mxu0
    %v3414 = vadd.f32 %v3244, %v3413
    %v3415 = vpop.f32.mrb[0].mxu0
    %3416 = vmatprep.mubr.f32.mxu0 0.0
    %v3417 = vand.u32 %v65, 4294901760
    %v3418 = vsub.f32 %v65, %v3417
    %3419 = vmatmul.mubr.f32.gmra.mrb[0].mxu0 %v3418
    %v3420 = vpop.f32.mrb[0].mxu0
    %v3421 = vadd.f32 %v3250, %v3420
    %v3422 = vpop.f32.mrb[0].mxu0
    %3423 = vmatprep.mubr.f32.mxu0 0.0
    %v3424 = vand.u32 %v66, 4294901760
    %v3425 = vsub.f32 %v66, %v3424
    %3426 = vmatmul.mubr.f32.gmra.mrb[0].mxu0 %v3425
    %v3427 = vpop.f32.mrb[0].mxu0
    %v3428 = vadd.f32 %v3256, %v3427
    %v3429 = vpop.f32.mrb[0].mxu0
    %3430 = vmatprep.mubr.f32.mxu0 0.0
    %v3431 = vand.u32 %v67, 4294901760
    %v3432 = vsub.f32 %v67, %v3431
    %3433 = vmatmul.mubr.f32.gmra.mrb[0].mxu0 %v3432
    %v3434 = vpop.f32.mrb[0].mxu0
    %v3435 = vadd.f32 %v3262, %v3434
    %v3436 = vpop.f32.mrb[0].mxu0
    %3437 = vmatprep.mubr.f32.mxu0 0.0
    %v3438 = vand.u32 %v68, 4294901760
    %v3439 = vsub.f32 %v68, %v3438
    %3440 = vmatmul.mubr.f32.gmra.mrb[0].mxu0 %v3439
    %v3441 = vpop.f32.mrb[0].mxu0
    %v3442 = vadd.f32 %v3268, %v3441
    %v3443 = vpop.f32.mrb[0].mxu0
    %3444 = vmatprep.mubr.f32.mxu0 0.0
    %v3445 = vand.u32 %v69, 4294901760
    %v3446 = vsub.f32 %v69, %v3445
    %3447 = vmatmul.mubr.f32.gmra.mrb[0].mxu0 %v3446
    %v3448 = vpop.f32.mrb[0].mxu0
    %v3449 = vadd.f32 %v3274, %v3448
    %v3450 = vpop.f32.mrb[0].mxu0
    %3451 = vmatprep.mubr.f32.mxu0 0.0
    %v3452 = vand.u32 %v70, 4294901760
    %v3453 = vsub.f32 %v70, %v3452
    %3454 = vmatmul.mubr.f32.gmra.mrb[0].mxu0 %v3453
    %v3455 = vpop.f32.mrb[0].mxu0
    %v3456 = vadd.f32 %v3280, %v3455
    %v3457 = vpop.f32.mrb[0].mxu0
    %3458 = vmatprep.mubr.f32.mxu0 0.0
    %v3459 = vand.u32 %v71, 4294901760
    %v3460 = vsub.f32 %v71, %v3459
    %3461 = vmatmul.mubr.f32.gmra.mrb[0].mxu0 %v3460
    %v3462 = vpop.f32.mrb[0].mxu0
    %v3463 = vadd.f32 %v3286, %v3462
    %v3464 = vpop.f32.mrb[0].mxu0
    %3465 = vmatprep.mubr.f32.mxu0 0.0
    %v3466 = vand.u32 %v72, 4294901760
    %v3467 = vsub.f32 %v72, %v3466
    %3468 = vmatmul.mubr.f32.gmra.mrb[0].mxu0 %v3467
    %v3469 = vpop.f32.mrb[0].mxu0
    %v3470 = vadd.f32 %v3292, %v3469
    %v3471 = vpop.f32.mrb[0].mxu0
    %3472 = vmatprep.mubr.f32.mxu0 0.0
    %v3473 = vand.u32 %v73, 4294901760
    %v3474 = vsub.f32 %v73, %v3473
    %3475 = vmatmul.mubr.f32.gmra.mrb[0].mxu0 %v3474
    %v3476 = vpop.f32.mrb[0].mxu0
    %v3477 = vadd.f32 %v3298, %v3476
    %v3478 = vpop.f32.mrb[0].mxu0
    %3479 = vdwg.mxu0
    %3480 = vmatprep.subr.mxu0 0.0
    %v3481 = vand.u32 %v2255, 4294901760
    %3482 = vmatpush1.xpose.msra.mxu0 %v3481
    %3483 = vmatprep.subr.mxu0 0.0
    %3484 = vmatpush1.xpose.msra.mxu0 0.0
    %3485 = vmatprep.subr.mxu0 0.0
    %3486 = vmatpush1.xpose.msra.mxu0 0.0
    %3487 = vmatprep.subr.mxu0 0.0
    %3488 = vmatpush1.xpose.msra.mxu0 0.0
    %3489 = vmatprep.subr.mxu0 0.0
    %3490 = vmatpush1.xpose.msra.mxu0 0.0
    %3491 = vmatprep.subr.mxu0 0.0
    %3492 = vmatpush1.xpose.msra.mxu0 0.0
    %3493 = vmatprep.subr.mxu0 0.0
    %3494 = vmatpush1.xpose.msra.mxu0 0.0
    %3495 = vmatprep.subr.mxu0 0.0
    %3496 = vmatpush1.xpose.msra.mxu0 0.0
    %3497 = vmatprep.subr.mxu0 0.0
    %3498 = vmatpush1.xpose.msra.mxu0 0.0
    %3499 = vmatprep.subr.mxu0 0.0
    %3500 = vmatpush1.xpose.msra.mxu0 0.0
    %3501 = vmatprep.subr.mxu0 0.0
    %3502 = vmatpush1.xpose.msra.mxu0 0.0
    %3503 = vmatprep.subr.mxu0 0.0
    %3504 = vmatpush1.xpose.msra.mxu0 0.0
    %3505 = vmatprep.subr.mxu0 0.0
    %3506 = vmatpush1.xpose.msra.mxu0 0.0
    %3507 = vmatprep.subr.mxu0 0.0
    %3508 = vmatpush1.xpose.msra.mxu0 0.0
    %3509 = vmatprep.subr.mxu0 0.0
    %3510 = vmatpush1.xpose.msra.mxu0 0.0
    %3511 = vmatprep.subr.mxu0 0.0
    %3512 = vmatpush1.xpose.msra.mxu0 0.0
    %3513 = vmatprep.subr.mxu0 0.0
    %3514 = vmatpush1.xpose.msra.mxu0 0.0
    %3515 = vmatprep.subr.mxu0 0.0
    %3516 = vmatpush1.xpose.msra.mxu0 0.0
    %3517 = vmatprep.subr.mxu0 0.0
    %3518 = vmatpush1.xpose.msra.mxu0 0.0
    %3519 = vmatprep.subr.mxu0 0.0
    %3520 = vmatpush1.xpose.msra.mxu0 0.0
    %3521 = vmatprep.subr.mxu0 0.0
    %3522 = vmatpush1.xpose.msra.mxu0 0.0
    %3523 = vmatprep.subr.mxu0 0.0
    %3524 = vmatpush1.xpose.msra.mxu0 0.0
    %3525 = vmatprep.subr.mxu0 0.0
    %3526 = vmatpush1.xpose.msra.mxu0 0.0
    %3527 = vmatprep.subr.mxu0 0.0
    %3528 = vmatpush1.xpose.msra.mxu0 0.0
    %3529 = vmatprep.subr.mxu0 0.0
    %3530 = vmatpush1.xpose.msra.mxu0 0.0
    %3531 = vmatprep.subr.mxu0 0.0
    %3532 = vmatpush1.xpose.msra.mxu0 0.0
    %3533 = vmatprep.subr.mxu0 0.0
    %3534 = vmatpush1.xpose.msra.mxu0 0.0
    %3535 = vmatprep.subr.mxu0 0.0
    %3536 = vmatpush1.xpose.msra.mxu0 0.0
    %3537 = vmatprep.subr.mxu0 0.0
    %3538 = vmatpush1.xpose.msra.mxu0 0.0
    %3539 = vmatprep.subr.mxu0 0.0
    %3540 = vmatpush1.xpose.msra.mxu0 0.0
    %3541 = vmatprep.subr.mxu0 0.0
    %3542 = vmatpush1.xpose.msra.mxu0 0.0
    %3543 = vmatprep.subr.mxu0 0.0
    %3544 = vmatpush1.xpose.msra.mxu0 0.0
    %3545 = vmatprep.mubr.f32.mxu0 0.0
    %v3546 = vand.u32 %v58, 4294901760
    %v3547 = vsub.f32 %v58, %v3546
    %v3548 = vand.u32 %v3547, 4294901760
    %3549 = vmatmul.mubr.f32.gmra.mrb[0].mxu0 %v3548
    %v3550 = vpop.f32.mrb[0].mxu0
    %v3551 = vadd.f32 %v3372, %v3550
    %v3552 = vpop.f32.mrb[0].mxu0
    %3553 = vmatprep.mubr.f32.mxu0 0.0
    %v3554 = vand.u32 %v59, 4294901760
    %v3555 = vsub.f32 %v59, %v3554
    %v3556 = vand.u32 %v3555, 4294901760
    %3557 = vmatmul.mubr.f32.gmra.mrb[0].mxu0 %v3556
    %v3558 = vpop.f32.mrb[0].mxu0
    %v3559 = vadd.f32 %v3379, %v3558
    %v3560 = vpop.f32.mrb[0].mxu0
    %3561 = vmatprep.mubr.f32.mxu0 0.0
    %v3562 = vand.u32 %v60, 4294901760
    %v3563 = vsub.f32 %v60, %v3562
    %v3564 = vand.u32 %v3563, 4294901760
    %3565 = vmatmul.mubr.f32.gmra.mrb[0].mxu0 %v3564
    %v3566 = vpop.f32.mrb[0].mxu0
    %v3567 = vadd.f32 %v3386, %v3566
    %v3568 = vpop.f32.mrb[0].mxu0
    %3569 = vmatprep.mubr.f32.mxu0 0.0
    %v3570 = vand.u32 %v61, 4294901760
    %v3571 = vsub.f32 %v61, %v3570
    %v3572 = vand.u32 %v3571, 4294901760
    %3573 = vmatmul.mubr.f32.gmra.mrb[0].mxu0 %v3572
    %v3574 = vpop.f32.mrb[0].mxu0
    %v3575 = vadd.f32 %v3393, %v3574
    %v3576 = vpop.f32.mrb[0].mxu0
    %3577 = vmatprep.mubr.f32.mxu0 0.0
    %v3578 = vand.u32 %v62, 4294901760
    %v3579 = vsub.f32 %v62, %v3578
    %v3580 = vand.u32 %v3579, 4294901760
    %3581 = vmatmul.mubr.f32.gmra.mrb[0].mxu0 %v3580
    %v3582 = vpop.f32.mrb[0].mxu0
    %v3583 = vadd.f32 %v3400, %v3582
    %v3584 = vpop.f32.mrb[0].mxu0
    %3585 = vmatprep.mubr.f32.mxu0 0.0
    %v3586 = vand.u32 %v63, 4294901760
    %v3587 = vsub.f32 %v63, %v3586
    %v3588 = vand.u32 %v3587, 4294901760
    %3589 = vmatmul.mubr.f32.gmra.mrb[0].mxu0 %v3588
    %v3590 = vpop.f32.mrb[0].mxu0
    %v3591 = vadd.f32 %v3407, %v3590
    %v3592 = vpop.f32.mrb[0].mxu0
    %3593 = vmatprep.mubr.f32.mxu0 0.0
    %v3594 = vand.u32 %v64, 4294901760
    %v3595 = vsub.f32 %v64, %v3594
    %v3596 = vand.u32 %v3595, 4294901760
    %3597 = vmatmul.mubr.f32.gmra.mrb[0].mxu0 %v3596
    %v3598 = vpop.f32.mrb[0].mxu0
    %v3599 = vadd.f32 %v3414, %v3598
    %v3600 = vpop.f32.mrb[0].mxu0
    %3601 = vmatprep.mubr.f32.mxu0 0.0
    %v3602 = vand.u32 %v65, 4294901760
    %v3603 = vsub.f32 %v65, %v3602
    %v3604 = vand.u32 %v3603, 4294901760
    %3605 = vmatmul.mubr.f32.gmra.mrb[0].mxu0 %v3604
    %v3606 = vpop.f32.mrb[0].mxu0
    %v3607 = vadd.f32 %v3421, %v3606
    %v3608 = vpop.f32.mrb[0].mxu0
    %3609 = vmatprep.mubr.f32.mxu0 0.0
    %v3610 = vand.u32 %v66, 4294901760
    %v3611 = vsub.f32 %v66, %v3610
    %v3612 = vand.u32 %v3611, 4294901760
    %3613 = vmatmul.mubr.f32.gmra.mrb[0].mxu0 %v3612
    %v3614 = vpop.f32.mrb[0].mxu0
    %v3615 = vadd.f32 %v3428, %v3614
    %v3616 = vpop.f32.mrb[0].mxu0
    %3617 = vmatprep.mubr.f32.mxu0 0.0
    %v3618 = vand.u32 %v67, 4294901760
    %v3619 = vsub.f32 %v67, %v3618
    %v3620 = vand.u32 %v3619, 4294901760
    %3621 = vmatmul.mubr.f32.gmra.mrb[0].mxu0 %v3620
    %v3622 = vpop.f32.mrb[0].mxu0
    %v3623 = vadd.f32 %v3435, %v3622
    %v3624 = vpop.f32.mrb[0].mxu0
    %3625 = vmatprep.mubr.f32.mxu0 0.0
    %v3626 = vand.u32 %v68, 4294901760
    %v3627 = vsub.f32 %v68, %v3626
    %v3628 = vand.u32 %v3627, 4294901760
    %3629 = vmatmul.mubr.f32.gmra.mrb[0].mxu0 %v3628
    %v3630 = vpop.f32.mrb[0].mxu0
    %v3631 = vadd.f32 %v3442, %v3630
    %v3632 = vpop.f32.mrb[0].mxu0
    %3633 = vmatprep.mubr.f32.mxu0 0.0
    %v3634 = vand.u32 %v69, 4294901760
    %v3635 = vsub.f32 %v69, %v3634
    %v3636 = vand.u32 %v3635, 4294901760
    %3637 = vmatmul.mubr.f32.gmra.mrb[0].mxu0 %v3636
    %v3638 = vpop.f32.mrb[0].mxu0
    %v3639 = vadd.f32 %v3449, %v3638
    %v3640 = vpop.f32.mrb[0].mxu0
    %3641 = vmatprep.mubr.f32.mxu0 0.0
    %v3642 = vand.u32 %v70, 4294901760
    %v3643 = vsub.f32 %v70, %v3642
    %v3644 = vand.u32 %v3643, 4294901760
    %3645 = vmatmul.mubr.f32.gmra.mrb[0].mxu0 %v3644
    %v3646 = vpop.f32.mrb[0].mxu0
    %v3647 = vadd.f32 %v3456, %v3646
    %v3648 = vpop.f32.mrb[0].mxu0
    %3649 = vmatprep.mubr.f32.mxu0 0.0
    %v3650 = vand.u32 %v71, 4294901760
    %v3651 = vsub.f32 %v71, %v3650
    %v3652 = vand.u32 %v3651, 4294901760
    %3653 = vmatmul.mubr.f32.gmra.mrb[0].mxu0 %v3652
    %v3654 = vpop.f32.mrb[0].mxu0
    %v3655 = vadd.f32 %v3463, %v3654
    %v3656 = vpop.f32.mrb[0].mxu0
    %3657 = vmatprep.mubr.f32.mxu0 0.0
    %v3658 = vand.u32 %v72, 4294901760
    %v3659 = vsub.f32 %v72, %v3658
    %v3660 = vand.u32 %v3659, 4294901760
    %3661 = vmatmul.mubr.f32.gmra.mrb[0].mxu0 %v3660
    %v3662 = vpop.f32.mrb[0].mxu0
    %v3663 = vadd.f32 %v3470, %v3662
    %v3664 = vpop.f32.mrb[0].mxu0
    %3665 = vmatprep.mubr.f32.mxu0 0.0
    %v3666 = vand.u32 %v73, 4294901760
    %v3667 = vsub.f32 %v73, %v3666
    %v3668 = vand.u32 %v3667, 4294901760
    %3669 = vmatmul.mubr.f32.gmra.mrb[0].mxu0 %v3668
    %v3670 = vpop.f32.mrb[0].mxu0
    %v3671 = vadd.f32 %v3477, %v3670
    %v3672 = vpop.f32.mrb[0].mxu0
    %3673 = vdwg.mxu0
    %3674 = vmatprep.subr.mxu0 0.0
    %v3675 = vand.u32 %v2255, 4294901760
    %v3676 = vsub.f32 %v2255, %v3675
    %v3677 = vand.u32 %v3676, 4294901760
    %3678 = vmatpush1.xpose.msra.mxu0 %v3677
    %3679 = vmatprep.subr.mxu0 0.0
    %3680 = vmatpush1.xpose.msra.mxu0 0.0
    %3681 = vmatprep.subr.mxu0 0.0
    %3682 = vmatpush1.xpose.msra.mxu0 0.0
    %3683 = vmatprep.subr.mxu0 0.0
    %3684 = vmatpush1.xpose.msra.mxu0 0.0
    %3685 = vmatprep.subr.mxu0 0.0
    %3686 = vmatpush1.xpose.msra.mxu0 0.0
    %3687 = vmatprep.subr.mxu0 0.0
    %3688 = vmatpush1.xpose.msra.mxu0 0.0
    %3689 = vmatprep.subr.mxu0 0.0
    %3690 = vmatpush1.xpose.msra.mxu0 0.0
    %3691 = vmatprep.subr.mxu0 0.0
    %3692 = vmatpush1.xpose.msra.mxu0 0.0
    %3693 = vmatprep.subr.mxu0 0.0
    %3694 = vmatpush1.xpose.msra.mxu0 0.0
    %3695 = vmatprep.subr.mxu0 0.0
    %3696 = vmatpush1.xpose.msra.mxu0 0.0
    %3697 = vmatprep.subr.mxu0 0.0
    %3698 = vmatpush1.xpose.msra.mxu0 0.0
    %3699 = vmatprep.subr.mxu0 0.0
    %3700 = vmatpush1.xpose.msra.mxu0 0.0
    %3701 = vmatprep.subr.mxu0 0.0
    %3702 = vmatpush1.xpose.msra.mxu0 0.0
    %3703 = vmatprep.subr.mxu0 0.0
    %3704 = vmatpush1.xpose.msra.mxu0 0.0
    %3705 = vmatprep.subr.mxu0 0.0
    %3706 = vmatpush1.xpose.msra.mxu0 0.0
    %3707 = vmatprep.subr.mxu0 0.0
    %3708 = vmatpush1.xpose.msra.mxu0 0.0
    %3709 = vmatprep.subr.mxu0 0.0
    %3710 = vmatpush1.xpose.msra.mxu0 0.0
    %3711 = vmatprep.subr.mxu0 0.0
    %3712 = vmatpush1.xpose.msra.mxu0 0.0
    %3713 = vmatprep.subr.mxu0 0.0
    %3714 = vmatpush1.xpose.msra.mxu0 0.0
    %3715 = vmatprep.subr.mxu0 0.0
    %3716 = vmatpush1.xpose.msra.mxu0 0.0
    %3717 = vmatprep.subr.mxu0 0.0
    %3718 = vmatpush1.xpose.msra.mxu0 0.0
    %3719 = vmatprep.subr.mxu0 0.0
    %3720 = vmatpush1.xpose.msra.mxu0 0.0
    %3721 = vmatprep.subr.mxu0 0.0
    %3722 = vmatpush1.xpose.msra.mxu0 0.0
    %3723 = vmatprep.subr.mxu0 0.0
    %3724 = vmatpush1.xpose.msra.mxu0 0.0
    %3725 = vmatprep.subr.mxu0 0.0
    %3726 = vmatpush1.xpose.msra.mxu0 0.0
    %3727 = vmatprep.subr.mxu0 0.0
    %3728 = vmatpush1.xpose.msra.mxu0 0.0
    %3729 = vmatprep.subr.mxu0 0.0
    %3730 = vmatpush1.xpose.msra.mxu0 0.0
    %3731 = vmatprep.subr.mxu0 0.0
    %3732 = vmatpush1.xpose.msra.mxu0 0.0
    %3733 = vmatprep.subr.mxu0 0.0
    %3734 = vmatpush1.xpose.msra.mxu0 0.0
    %3735 = vmatprep.subr.mxu0 0.0
    %3736 = vmatpush1.xpose.msra.mxu0 0.0
    %3737 = vmatprep.subr.mxu0 0.0
    %3738 = vmatpush1.xpose.msra.mxu0 0.0
    %3739 = vmatprep.subr.mxu0 0.0
    %3740 = vmatpush1.xpose.msra.mxu0 0.0
    %3741 = vmatprep.mubr.f32.mxu0 0.0
    %v3742 = vand.u32 %v58, 4294901760
    %3743 = vmatmul.mubr.f32.gmra.mrb[0].mxu0 %v3742
    %v3744 = vpop.f32.mrb[0].mxu0
    %v3745 = vadd.f32 %v3551, %v3744
    %v3746 = vpop.f32.mrb[0].mxu0
    %3747 = vmatprep.mubr.f32.mxu0 0.0
    %v3748 = vand.u32 %v59, 4294901760
    %3749 = vmatmul.mubr.f32.gmra.mrb[0].mxu0 %v3748
    %v3750 = vpop.f32.mrb[0].mxu0
    %v3751 = vadd.f32 %v3559, %v3750
    %v3752 = vpop.f32.mrb[0].mxu0
    %3753 = vmatprep.mubr.f32.mxu0 0.0
    %v3754 = vand.u32 %v60, 4294901760
    %3755 = vmatmul.mubr.f32.gmra.mrb[0].mxu0 %v3754
    %v3756 = vpop.f32.mrb[0].mxu0
    %v3757 = vadd.f32 %v3567, %v3756
    %v3758 = vpop.f32.mrb[0].mxu0
    %3759 = vmatprep.mubr.f32.mxu0 0.0
    %v3760 = vand.u32 %v61, 4294901760
    %3761 = vmatmul.mubr.f32.gmra.mrb[0].mxu0 %v3760
    %v3762 = vpop.f32.mrb[0].mxu0
    %v3763 = vadd.f32 %v3575, %v3762
    %v3764 = vpop.f32.mrb[0].mxu0
    %3765 = vmatprep.mubr.f32.mxu0 0.0
    %v3766 = vand.u32 %v62, 4294901760
    %3767 = vmatmul.mubr.f32.gmra.mrb[0].mxu0 %v3766
    %v3768 = vpop.f32.mrb[0].mxu0
    %v3769 = vadd.f32 %v3583, %v3768
    %v3770 = vpop.f32.mrb[0].mxu0
    %3771 = vmatprep.mubr.f32.mxu0 0.0
    %v3772 = vand.u32 %v63, 4294901760
    %3773 = vmatmul.mubr.f32.gmra.mrb[0].mxu0 %v3772
    %v3774 = vpop.f32.mrb[0].mxu0
    %v3775 = vadd.f32 %v3591, %v3774
    %v3776 = vpop.f32.mrb[0].mxu0
    %3777 = vmatprep.mubr.f32.mxu0 0.0
    %v3778 = vand.u32 %v64, 4294901760
    %3779 = vmatmul.mubr.f32.gmra.mrb[0].mxu0 %v3778
    %v3780 = vpop.f32.mrb[0].mxu0
    %v3781 = vadd.f32 %v3599, %v3780
    %v3782 = vpop.f32.mrb[0].mxu0
    %3783 = vmatprep.mubr.f32.mxu0 0.0
    %v3784 = vand.u32 %v65, 4294901760
    %3785 = vmatmul.mubr.f32.gmra.mrb[0].mxu0 %v3784
    %v3786 = vpop.f32.mrb[0].mxu0
    %v3787 = vadd.f32 %v3607, %v3786
    %v3788 = vpop.f32.mrb[0].mxu0
    %3789 = vmatprep.mubr.f32.mxu0 0.0
    %v3790 = vand.u32 %v66, 4294901760
    %3791 = vmatmul.mubr.f32.gmra.mrb[0].mxu0 %v3790
    %v3792 = vpop.f32.mrb[0].mxu0
    %v3793 = vadd.f32 %v3615, %v3792
    %v3794 = vpop.f32.mrb[0].mxu0
    %3795 = vmatprep.mubr.f32.mxu0 0.0
    %v3796 = vand.u32 %v67, 4294901760
    %3797 = vmatmul.mubr.f32.gmra.mrb[0].mxu0 %v3796
    %v3798 = vpop.f32.mrb[0].mxu0
    %v3799 = vadd.f32 %v3623, %v3798
    %v3800 = vpop.f32.mrb[0].mxu0
    %3801 = vmatprep.mubr.f32.mxu0 0.0
    %v3802 = vand.u32 %v68, 4294901760
    %3803 = vmatmul.mubr.f32.gmra.mrb[0].mxu0 %v3802
    %v3804 = vpop.f32.mrb[0].mxu0
    %v3805 = vadd.f32 %v3631, %v3804
    %v3806 = vpop.f32.mrb[0].mxu0
    %3807 = vmatprep.mubr.f32.mxu0 0.0
    %v3808 = vand.u32 %v69, 4294901760
    %3809 = vmatmul.mubr.f32.gmra.mrb[0].mxu0 %v3808
    %v3810 = vpop.f32.mrb[0].mxu0
    %v3811 = vadd.f32 %v3639, %v3810
    %v3812 = vpop.f32.mrb[0].mxu0
    %3813 = vmatprep.mubr.f32.mxu0 0.0
    %v3814 = vand.u32 %v70, 4294901760
    %3815 = vmatmul.mubr.f32.gmra.mrb[0].mxu0 %v3814
    %v3816 = vpop.f32.mrb[0].mxu0
    %v3817 = vadd.f32 %v3647, %v3816
    %v3818 = vpop.f32.mrb[0].mxu0
    %3819 = vmatprep.mubr.f32.mxu0 0.0
    %v3820 = vand.u32 %v71, 4294901760
    %3821 = vmatmul.mubr.f32.gmra.mrb[0].mxu0 %v3820
    %v3822 = vpop.f32.mrb[0].mxu0
    %v3823 = vadd.f32 %v3655, %v3822
    %v3824 = vpop.f32.mrb[0].mxu0
    %3825 = vmatprep.mubr.f32.mxu0 0.0
    %v3826 = vand.u32 %v72, 4294901760
    %3827 = vmatmul.mubr.f32.gmra.mrb[0].mxu0 %v3826
    %v3828 = vpop.f32.mrb[0].mxu0
    %v3829 = vadd.f32 %v3663, %v3828
    %v3830 = vpop.f32.mrb[0].mxu0
    %3831 = vmatprep.mubr.f32.mxu0 0.0
    %v3832 = vand.u32 %v73, 4294901760
    %3833 = vmatmul.mubr.f32.gmra.mrb[0].mxu0 %v3832
    %v3834 = vpop.f32.mrb[0].mxu0
    %v3835 = vadd.f32 %v3671, %v3834
    %v3836 = vpop.f32.mrb[0].mxu0
    %3837 = vdwg.mxu0
    %3838 = vmatprep.subr.mxu0 0.0
    %v3839 = vand.u32 %v2255, 4294901760
    %3840 = vmatpush1.xpose.msra.mxu0 %v3839
    %3841 = vmatprep.subr.mxu0 0.0
    %3842 = vmatpush1.xpose.msra.mxu0 0.0
    %3843 = vmatprep.subr.mxu0 0.0
    %3844 = vmatpush1.xpose.msra.mxu0 0.0
    %3845 = vmatprep.subr.mxu0 0.0
    %3846 = vmatpush1.xpose.msra.mxu0 0.0
    %3847 = vmatprep.subr.mxu0 0.0
    %3848 = vmatpush1.xpose.msra.mxu0 0.0
    %3849 = vmatprep.subr.mxu0 0.0
    %3850 = vmatpush1.xpose.msra.mxu0 0.0
    %3851 = vmatprep.subr.mxu0 0.0
    %3852 = vmatpush1.xpose.msra.mxu0 0.0
    %3853 = vmatprep.subr.mxu0 0.0
    %3854 = vmatpush1.xpose.msra.mxu0 0.0
    %3855 = vmatprep.subr.mxu0 0.0
    %3856 = vmatpush1.xpose.msra.mxu0 0.0
    %3857 = vmatprep.subr.mxu0 0.0
    %3858 = vmatpush1.xpose.msra.mxu0 0.0
    %3859 = vmatprep.subr.mxu0 0.0
    %3860 = vmatpush1.xpose.msra.mxu0 0.0
    %3861 = vmatprep.subr.mxu0 0.0
    %3862 = vmatpush1.xpose.msra.mxu0 0.0
    %3863 = vmatprep.subr.mxu0 0.0
    %3864 = vmatpush1.xpose.msra.mxu0 0.0
    %3865 = vmatprep.subr.mxu0 0.0
    %3866 = vmatpush1.xpose.msra.mxu0 0.0
    %3867 = vmatprep.subr.mxu0 0.0
    %3868 = vmatpush1.xpose.msra.mxu0 0.0
    %3869 = vmatprep.subr.mxu0 0.0
    %3870 = vmatpush1.xpose.msra.mxu0 0.0
    %3871 = vmatprep.subr.mxu0 0.0
    %3872 = vmatpush1.xpose.msra.mxu0 0.0
    %3873 = vmatprep.subr.mxu0 0.0
    %3874 = vmatpush1.xpose.msra.mxu0 0.0
    %3875 = vmatprep.subr.mxu0 0.0
    %3876 = vmatpush1.xpose.msra.mxu0 0.0
    %3877 = vmatprep.subr.mxu0 0.0
    %3878 = vmatpush1.xpose.msra.mxu0 0.0
    %3879 = vmatprep.subr.mxu0 0.0
    %3880 = vmatpush1.xpose.msra.mxu0 0.0
    %3881 = vmatprep.subr.mxu0 0.0
    %3882 = vmatpush1.xpose.msra.mxu0 0.0
    %3883 = vmatprep.subr.mxu0 0.0
    %3884 = vmatpush1.xpose.msra.mxu0 0.0
    %3885 = vmatprep.subr.mxu0 0.0
    %3886 = vmatpush1.xpose.msra.mxu0 0.0
    %3887 = vmatprep.subr.mxu0 0.0
    %3888 = vmatpush1.xpose.msra.mxu0 0.0
    %3889 = vmatprep.subr.mxu0 0.0
    %3890 = vmatpush1.xpose.msra.mxu0 0.0
    %3891 = vmatprep.subr.mxu0 0.0
    %3892 = vmatpush1.xpose.msra.mxu0 0.0
    %3893 = vmatprep.subr.mxu0 0.0
    %3894 = vmatpush1.xpose.msra.mxu0 0.0
    %3895 = vmatprep.subr.mxu0 0.0
    %3896 = vmatpush1.xpose.msra.mxu0 0.0
    %3897 = vmatprep.subr.mxu0 0.0
    %3898 = vmatpush1.xpose.msra.mxu0 0.0
    %3899 = vmatprep.subr.mxu0 0.0
    %3900 = vmatpush1.xpose.msra.mxu0 0.0
    %3901 = vmatprep.subr.mxu0 0.0
    %3902 = vmatpush1.xpose.msra.mxu0 0.0
    %3903 = vmatprep.mubr.f32.mxu0 0.0
    %v3904 = vand.u32 %v58, 4294901760
    %3905 = vmatmul.mubr.f32.gmra.mrb[0].mxu0 %v3904
    %v3906 = vpop.f32.mrb[0].mxu0
    %v3907 = vadd.f32 %v3745, %v3906
    %v3908 = vpop.f32.mrb[0].mxu0
    %3909 = vmatprep.mubr.f32.mxu0 0.0
    %v3910 = vand.u32 %v59, 4294901760
    %3911 = vmatmul.mubr.f32.gmra.mrb[0].mxu0 %v3910
    %v3912 = vpop.f32.mrb[0].mxu0
    %v3913 = vadd.f32 %v3751, %v3912
    %v3914 = vpop.f32.mrb[0].mxu0
    %3915 = vmatprep.mubr.f32.mxu0 0.0
    %v3916 = vand.u32 %v60, 4294901760
    %3917 = vmatmul.mubr.f32.gmra.mrb[0].mxu0 %v3916
    %v3918 = vpop.f32.mrb[0].mxu0
    %v3919 = vadd.f32 %v3757, %v3918
    %v3920 = vpop.f32.mrb[0].mxu0
    %3921 = vmatprep.mubr.f32.mxu0 0.0
    %v3922 = vand.u32 %v61, 4294901760
    %3923 = vmatmul.mubr.f32.gmra.mrb[0].mxu0 %v3922
    %v3924 = vpop.f32.mrb[0].mxu0
    %v3925 = vadd.f32 %v3763, %v3924
    %v3926 = vpop.f32.mrb[0].mxu0
    %3927 = vmatprep.mubr.f32.mxu0 0.0
    %v3928 = vand.u32 %v62, 4294901760
    %3929 = vmatmul.mubr.f32.gmra.mrb[0].mxu0 %v3928
    %v3930 = vpop.f32.mrb[0].mxu0
    %v3931 = vadd.f32 %v3769, %v3930
    %v3932 = vpop.f32.mrb[0].mxu0
    %3933 = vmatprep.mubr.f32.mxu0 0.0
    %v3934 = vand.u32 %v63, 4294901760
    %3935 = vmatmul.mubr.f32.gmra.mrb[0].mxu0 %v3934
    %v3936 = vpop.f32.mrb[0].mxu0
    %v3937 = vadd.f32 %v3775, %v3936
    %v3938 = vpop.f32.mrb[0].mxu0
    %3939 = vmatprep.mubr.f32.mxu0 0.0
    %v3940 = vand.u32 %v64, 4294901760
    %3941 = vmatmul.mubr.f32.gmra.mrb[0].mxu0 %v3940
    %v3942 = vpop.f32.mrb[0].mxu0
    %v3943 = vadd.f32 %v3781, %v3942
    %v3944 = vpop.f32.mrb[0].mxu0
    %3945 = vmatprep.mubr.f32.mxu0 0.0
    %v3946 = vand.u32 %v65, 4294901760
    %3947 = vmatmul.mubr.f32.gmra.mrb[0].mxu0 %v3946
    %v3948 = vpop.f32.mrb[0].mxu0
    %v3949 = vadd.f32 %v3787, %v3948
    %v3950 = vpop.f32.mrb[0].mxu0
    %3951 = vmatprep.mubr.f32.mxu0 0.0
    %v3952 = vand.u32 %v66, 4294901760
    %3953 = vmatmul.mubr.f32.gmra.mrb[0].mxu0 %v3952
    %v3954 = vpop.f32.mrb[0].mxu0
    %v3955 = vadd.f32 %v3793, %v3954
    %v3956 = vpop.f32.mrb[0].mxu0
    %3957 = vmatprep.mubr.f32.mxu0 0.0
    %v3958 = vand.u32 %v67, 4294901760
    %3959 = vmatmul.mubr.f32.gmra.mrb[0].mxu0 %v3958
    %v3960 = vpop.f32.mrb[0].mxu0
    %v3961 = vadd.f32 %v3799, %v3960
    %v3962 = vpop.f32.mrb[0].mxu0
    %3963 = vmatprep.mubr.f32.mxu0 0.0
    %v3964 = vand.u32 %v68, 4294901760
    %3965 = vmatmul.mubr.f32.gmra.mrb[0].mxu0 %v3964
    %v3966 = vpop.f32.mrb[0].mxu0
    %v3967 = vadd.f32 %v3805, %v3966
    %v3968 = vpop.f32.mrb[0].mxu0
    %3969 = vmatprep.mubr.f32.mxu0 0.0
    %v3970 = vand.u32 %v69, 4294901760
    %3971 = vmatmul.mubr.f32.gmra.mrb[0].mxu0 %v3970
    %v3972 = vpop.f32.mrb[0].mxu0
    %v3973 = vadd.f32 %v3811, %v3972
    %v3974 = vpop.f32.mrb[0].mxu0
    %3975 = vmatprep.mubr.f32.mxu0 0.0
    %v3976 = vand.u32 %v70, 4294901760
    %3977 = vmatmul.mubr.f32.gmra.mrb[0].mxu0 %v3976
    %v3978 = vpop.f32.mrb[0].mxu0
    %v3979 = vadd.f32 %v3817, %v3978
    %v3980 = vpop.f32.mrb[0].mxu0
    %3981 = vmatprep.mubr.f32.mxu0 0.0
    %v3982 = vand.u32 %v71, 4294901760
    %3983 = vmatmul.mubr.f32.gmra.mrb[0].mxu0 %v3982
    %v3984 = vpop.f32.mrb[0].mxu0
    %v3985 = vadd.f32 %v3823, %v3984
    %v3986 = vpop.f32.mrb[0].mxu0
    %3987 = vmatprep.mubr.f32.mxu0 0.0
    %v3988 = vand.u32 %v72, 4294901760
    %3989 = vmatmul.mubr.f32.gmra.mrb[0].mxu0 %v3988
    %v3990 = vpop.f32.mrb[0].mxu0
    %v3991 = vadd.f32 %v3829, %v3990
    %v3992 = vpop.f32.mrb[0].mxu0
    %3993 = vmatprep.mubr.f32.mxu0 0.0
    %v3994 = vand.u32 %v73, 4294901760
    %3995 = vmatmul.mubr.f32.gmra.mrb[0].mxu0 %v3994
    %v3996 = vpop.f32.mrb[0].mxu0
    %v3997 = vadd.f32 %v3835, %v3996
    %v3998 = vpop.f32.mrb[0].mxu0
    %3999 = vdwg.mxu0
    %v4000 = vlaneseq
    %v4001 = vshrl.u32 %v4000, 7
    %v4002 = vsub.s32 0, %v4001
    %v4003 = vrot.slane %v2907, %v4002
    %v4004 = vmul.f32 %v4003, %v82
    %v4005 = vmul.f32 %v4003, %v83
    %v4006 = vmul.f32 %v4004, 1.442695
    %v4007 = vpow.pop %v4006
    %v4008 = vmul.f32 %v4005, 1.442695
    %v4009 = vpow.pop %v4008
    %4011 = vset.pattern.permute.xlu0 0
    %4012 = vperm.xlu0 %4011, %v3907
    %v4013 = vpop.permute.xlu0 %4012
    %4016 = vset.pattern.permute.xlu0 0
    %4017 = vperm.xlu0 %4016, %v3913
    %v4018 = vpop.permute.xlu0 %4017
    %4021 = vset.pattern.permute.xlu0 0
    %4022 = vperm.xlu0 %4021, %v3919
    %v4023 = vpop.permute.xlu0 %4022
    %4026 = vset.pattern.permute.xlu0 0
    %4027 = vperm.xlu0 %4026, %v3925
    %v4028 = vpop.permute.xlu0 %4027
    %4031 = vset.pattern.permute.xlu0 0
    %4032 = vperm.xlu0 %4031, %v3931
    %v4033 = vpop.permute.xlu0 %4032
    %4036 = vset.pattern.permute.xlu0 0
    %4037 = vperm.xlu0 %4036, %v3937
    %v4038 = vpop.permute.xlu0 %4037
    %4041 = vset.pattern.permute.xlu0 0
    %4042 = vperm.xlu0 %4041, %v3943
    %v4043 = vpop.permute.xlu0 %4042
    %4046 = vset.pattern.permute.xlu0 0
    %4047 = vperm.xlu0 %4046, %v3949
    %v4048 = vpop.permute.xlu0 %4047
    %4051 = vset.pattern.permute.xlu0 0
    %4052 = vperm.xlu0 %4051, %v3955
    %v4053 = vpop.permute.xlu0 %4052
    %4056 = vset.pattern.permute.xlu0 0
    %4057 = vperm.xlu0 %4056, %v3961
    %v4058 = vpop.permute.xlu0 %4057
    %4061 = vset.pattern.permute.xlu0 0
    %4062 = vperm.xlu0 %4061, %v3967
    %v4063 = vpop.permute.xlu0 %4062
    %4066 = vset.pattern.permute.xlu0 0
    %4067 = vperm.xlu0 %4066, %v3973
    %v4068 = vpop.permute.xlu0 %4067
    %4071 = vset.pattern.permute.xlu0 0
    %4072 = vperm.xlu0 %4071, %v3979
    %v4073 = vpop.permute.xlu0 %4072
    %4076 = vset.pattern.permute.xlu0 0
    %4077 = vperm.xlu0 %4076, %v3985
    %v4078 = vpop.permute.xlu0 %4077
    %4081 = vset.pattern.permute.xlu0 0
    %4082 = vperm.xlu0 %4081, %v3991
    %v4083 = vpop.permute.xlu0 %4082
    %4086 = vset.pattern.permute.xlu0 0
    %4087 = vperm.xlu0 %4086, %v3997
    %v4088 = vpop.permute.xlu0 %4087
    %vm4090 = vcmask 261120
    %v4091 = vsel %vm4090, %v4013, %v4033
    %v4092 = vsel %vm4090, %v4018, %v4038
    %v4093 = vsel %vm4090, %v4023, %v4043
    %v4094 = vsel %vm4090, %v4028, %v4048
    %v4095 = vsel %vm90, %v4091, %v4053
    %v4096 = vsel %vm90, %v4092, %v4058
    %v4097 = vsel %vm90, %v4093, %v4063
    %v4098 = vsel %vm90, %v4094, %v4068
    %vm4099 = vcmask 785408
    %v4100 = vsel %vm4099, %v4095, %v4073
    %v4101 = vsel %vm4099, %v4096, %v4078
    %v4102 = vsel %vm4099, %v4097, %v4083
    %v4103 = vsel %vm4099, %v4098, %v4088
    %v4104 = vmul.f32 %v4007, 0.0
    %v4105 = vmul.f32 %v4009, 0.0
    %v4106 = vlaneseq
    %v4107 = vshrl.u32 %v4106, 7
    %v4108 = vsub.s32 0, %v4107
    %v4109 = vrot.slane %v2908, %v4108
    %v4110 = vmul.f32 %v4109, %v4100
    %v4111 = vmul.f32 %v4109, %v4101
    %v4112 = vadd.f32 %v4104, %v4110
    %v4113 = vadd.f32 %v4105, %v4111
    %v4114 = vmul.f32 %v4112, %v4102
    %v4115 = vmul.f32 %v4113, %v4103
    %v4116 = vadd.f32 %v4114, %v4115
    %v4117 = vrot.slane %v4116, 4
    %v4118 = vadd.f32 %v4116, %v4117
    %v4119 = vrot.slane %v4118, 2
    %v4120 = vadd.f32 %v4118, %v4119
    %v4121 = vrot.slane %v4120, 1
    %v4122 = vadd.f32 %v4120, %v4121
    %v4123 = vlaneseq
    %v4124 = vshrl.u32 %v4123, 7
    %v4125 = vsub.s32 1, %v4124
    %v4126 = vrot.slane %v2907, %v4125
    %v4127 = vmul.f32 %v4126, %v82
    %v4128 = vmul.f32 %v4126, %v83
    %v4129 = vmul.f32 %v4127, 1.442695
    %v4130 = vpow.pop %v4129
    %v4131 = vmul.f32 %v4128, 1.442695
    %v4132 = vpow.pop %v4131
    %4133 = vset.pattern.permute.xlu0 1
    %4134 = vperm.xlu0 %4133, %v3907
    %v4135 = vpop.permute.xlu0 %4134
    %4137 = vset.pattern.permute.xlu0 1
    %4138 = vperm.xlu0 %4137, %v3913
    %v4139 = vpop.permute.xlu0 %4138
    %4141 = vset.pattern.permute.xlu0 1
    %4142 = vperm.xlu0 %4141, %v3919
    %v4143 = vpop.permute.xlu0 %4142
    %4145 = vset.pattern.permute.xlu0 1
    %4146 = vperm.xlu0 %4145, %v3925
    %v4147 = vpop.permute.xlu0 %4146
    %4149 = vset.pattern.permute.xlu0 1
    %4150 = vperm.xlu0 %4149, %v3931
    %v4151 = vpop.permute.xlu0 %4150
    %4153 = vset.pattern.permute.xlu0 1
    %4154 = vperm.xlu0 %4153, %v3937
    %v4155 = vpop.permute.xlu0 %4154
    %4157 = vset.pattern.permute.xlu0 1
    %4158 = vperm.xlu0 %4157, %v3943
    %v4159 = vpop.permute.xlu0 %4158
    %4161 = vset.pattern.permute.xlu0 1
    %4162 = vperm.xlu0 %4161, %v3949
    %v4163 = vpop.permute.xlu0 %4162
    %4165 = vset.pattern.permute.xlu0 1
    %4166 = vperm.xlu0 %4165, %v3955
    %v4167 = vpop.permute.xlu0 %4166
    %4169 = vset.pattern.permute.xlu0 1
    %4170 = vperm.xlu0 %4169, %v3961
    %v4171 = vpop.permute.xlu0 %4170
    %4173 = vset.pattern.permute.xlu0 1
    %4174 = vperm.xlu0 %4173, %v3967
    %v4175 = vpop.permute.xlu0 %4174
    %4177 = vset.pattern.permute.xlu0 1
    %4178 = vperm.xlu0 %4177, %v3973
    %v4179 = vpop.permute.xlu0 %4178
    %4181 = vset.pattern.permute.xlu0 1
    %4182 = vperm.xlu0 %4181, %v3979
    %v4183 = vpop.permute.xlu0 %4182
    %4185 = vset.pattern.permute.xlu0 1
    %4186 = vperm.xlu0 %4185, %v3985
    %v4187 = vpop.permute.xlu0 %4186
    %4189 = vset.pattern.permute.xlu0 1
    %4190 = vperm.xlu0 %4189, %v3991
    %v4191 = vpop.permute.xlu0 %4190
    %4193 = vset.pattern.permute.xlu0 1
    %4194 = vperm.xlu0 %4193, %v3997
    %v4195 = vpop.permute.xlu0 %4194
    %v4197 = vsel %vm4090, %v4135, %v4151
    %v4198 = vsel %vm4090, %v4139, %v4155
    %v4199 = vsel %vm4090, %v4143, %v4159
    %v4200 = vsel %vm4090, %v4147, %v4163
    %v4201 = vsel %vm90, %v4197, %v4167
    %v4202 = vsel %vm90, %v4198, %v4171
    %v4203 = vsel %vm90, %v4199, %v4175
    %v4204 = vsel %vm90, %v4200, %v4179
    %v4205 = vsel %vm4099, %v4201, %v4183
    %v4206 = vsel %vm4099, %v4202, %v4187
    %v4207 = vsel %vm4099, %v4203, %v4191
    %v4208 = vsel %vm4099, %v4204, %v4195
    %v4209 = vmul.f32 %v4130, %v4112
    %v4210 = vmul.f32 %v4132, %v4113
    %v4211 = vlaneseq
    %v4212 = vshrl.u32 %v4211, 7
    %v4213 = vsub.s32 1, %v4212
    %v4214 = vrot.slane %v2908, %v4213
    %v4215 = vmul.f32 %v4214, %v4205
    %v4216 = vmul.f32 %v4214, %v4206
    %v4217 = vadd.f32 %v4209, %v4215
    %v4218 = vadd.f32 %v4210, %v4216
    %v4219 = vmul.f32 %v4217, %v4207
    %v4220 = vmul.f32 %v4218, %v4208
    %v4221 = vadd.f32 %v4219, %v4220
    %v4222 = vrot.slane %v4221, 4
    %v4223 = vadd.f32 %v4221, %v4222
    %v4224 = vrot.slane %v4223, 2
    %v4225 = vadd.f32 %v4223, %v4224
    %v4226 = vrot.slane %v4225, 1
    %v4227 = vadd.f32 %v4225, %v4226
    %v4228 = vlaneseq
    %v4229 = vshrl.u32 %v4228, 7
    %v4230 = vsub.s32 2, %v4229
    %v4231 = vrot.slane %v2907, %v4230
    %v4232 = vmul.f32 %v4231, %v82
    %v4233 = vmul.f32 %v4231, %v83
    %v4234 = vmul.f32 %v4232, 1.442695
    %v4235 = vpow.pop %v4234
    %v4236 = vmul.f32 %v4233, 1.442695
    %v4237 = vpow.pop %v4236
    %4238 = vset.pattern.permute.xlu0 2
    %4239 = vperm.xlu0 %4238, %v3907
    %v4240 = vpop.permute.xlu0 %4239
    %4242 = vset.pattern.permute.xlu0 2
    %4243 = vperm.xlu0 %4242, %v3913
    %v4244 = vpop.permute.xlu0 %4243
    %4246 = vset.pattern.permute.xlu0 2
    %4247 = vperm.xlu0 %4246, %v3919
    %v4248 = vpop.permute.xlu0 %4247
    %4250 = vset.pattern.permute.xlu0 2
    %4251 = vperm.xlu0 %4250, %v3925
    %v4252 = vpop.permute.xlu0 %4251
    %4254 = vset.pattern.permute.xlu0 2
    %4255 = vperm.xlu0 %4254, %v3931
    %v4256 = vpop.permute.xlu0 %4255
    %4258 = vset.pattern.permute.xlu0 2
    %4259 = vperm.xlu0 %4258, %v3937
    %v4260 = vpop.permute.xlu0 %4259
    %4262 = vset.pattern.permute.xlu0 2
    %4263 = vperm.xlu0 %4262, %v3943
    %v4264 = vpop.permute.xlu0 %4263
    %4266 = vset.pattern.permute.xlu0 2
    %4267 = vperm.xlu0 %4266, %v3949
    %v4268 = vpop.permute.xlu0 %4267
    %4270 = vset.pattern.permute.xlu0 2
    %4271 = vperm.xlu0 %4270, %v3955
    %v4272 = vpop.permute.xlu0 %4271
    %4274 = vset.pattern.permute.xlu0 2
    %4275 = vperm.xlu0 %4274, %v3961
    %v4276 = vpop.permute.xlu0 %4275
    %4278 = vset.pattern.permute.xlu0 2
    %4279 = vperm.xlu0 %4278, %v3967
    %v4280 = vpop.permute.xlu0 %4279
    %4282 = vset.pattern.permute.xlu0 2
    %4283 = vperm.xlu0 %4282, %v3973
    %v4284 = vpop.permute.xlu0 %4283
    %4286 = vset.pattern.permute.xlu0 2
    %4287 = vperm.xlu0 %4286, %v3979
    %v4288 = vpop.permute.xlu0 %4287
    %4290 = vset.pattern.permute.xlu0 2
    %4291 = vperm.xlu0 %4290, %v3985
    %v4292 = vpop.permute.xlu0 %4291
    %4294 = vset.pattern.permute.xlu0 2
    %4295 = vperm.xlu0 %4294, %v3991
    %v4296 = vpop.permute.xlu0 %4295
    %4298 = vset.pattern.permute.xlu0 2
    %4299 = vperm.xlu0 %4298, %v3997
    %v4300 = vpop.permute.xlu0 %4299
    %v4302 = vsel %vm4090, %v4240, %v4256
    %v4303 = vsel %vm4090, %v4244, %v4260
    %v4304 = vsel %vm4090, %v4248, %v4264
    %v4305 = vsel %vm4090, %v4252, %v4268
    %v4306 = vsel %vm90, %v4302, %v4272
    %v4307 = vsel %vm90, %v4303, %v4276
    %v4308 = vsel %vm90, %v4304, %v4280
    %v4309 = vsel %vm90, %v4305, %v4284
    %v4310 = vsel %vm4099, %v4306, %v4288
    %v4311 = vsel %vm4099, %v4307, %v4292
    %v4312 = vsel %vm4099, %v4308, %v4296
    %v4313 = vsel %vm4099, %v4309, %v4300
    %v4314 = vmul.f32 %v4235, %v4217
    %v4315 = vmul.f32 %v4237, %v4218
    %v4316 = vlaneseq
    %v4317 = vshrl.u32 %v4316, 7
    %v4318 = vsub.s32 2, %v4317
    %v4319 = vrot.slane %v2908, %v4318
    %v4320 = vmul.f32 %v4319, %v4310
    %v4321 = vmul.f32 %v4319, %v4311
    %v4322 = vadd.f32 %v4314, %v4320
    %v4323 = vadd.f32 %v4315, %v4321
    %v4324 = vmul.f32 %v4322, %v4312
    %v4325 = vmul.f32 %v4323, %v4313
    %v4326 = vadd.f32 %v4324, %v4325
    %v4327 = vrot.slane %v4326, 4
    %v4328 = vadd.f32 %v4326, %v4327
    %v4329 = vrot.slane %v4328, 2
    %v4330 = vadd.f32 %v4328, %v4329
    %v4331 = vrot.slane %v4330, 1
    %v4332 = vadd.f32 %v4330, %v4331
    %v4333 = vlaneseq
    %v4334 = vshrl.u32 %v4333, 7
    %v4335 = vsub.s32 3, %v4334
    %v4336 = vrot.slane %v2907, %v4335
    %v4337 = vmul.f32 %v4336, %v82
    %v4338 = vmul.f32 %v4336, %v83
    %v4339 = vmul.f32 %v4337, 1.442695
    %v4340 = vpow.pop %v4339
    %v4341 = vmul.f32 %v4338, 1.442695
    %v4342 = vpow.pop %v4341
    %4343 = vset.pattern.permute.xlu0 3
    %4344 = vperm.xlu0 %4343, %v3907
    %v4345 = vpop.permute.xlu0 %4344
    %4347 = vset.pattern.permute.xlu0 3
    %4348 = vperm.xlu0 %4347, %v3913
    %v4349 = vpop.permute.xlu0 %4348
    %4351 = vset.pattern.permute.xlu0 3
    %4352 = vperm.xlu0 %4351, %v3919
    %v4353 = vpop.permute.xlu0 %4352
    %4355 = vset.pattern.permute.xlu0 3
    %4356 = vperm.xlu0 %4355, %v3925
    %v4357 = vpop.permute.xlu0 %4356
    %4359 = vset.pattern.permute.xlu0 3
    %4360 = vperm.xlu0 %4359, %v3931
    %v4361 = vpop.permute.xlu0 %4360
    %4363 = vset.pattern.permute.xlu0 3
    %4364 = vperm.xlu0 %4363, %v3937
    %v4365 = vpop.permute.xlu0 %4364
    %4367 = vset.pattern.permute.xlu0 3
    %4368 = vperm.xlu0 %4367, %v3943
    %v4369 = vpop.permute.xlu0 %4368
    %4371 = vset.pattern.permute.xlu0 3
    %4372 = vperm.xlu0 %4371, %v3949
    %v4373 = vpop.permute.xlu0 %4372
    %4375 = vset.pattern.permute.xlu0 3
    %4376 = vperm.xlu0 %4375, %v3955
    %v4377 = vpop.permute.xlu0 %4376
    %4379 = vset.pattern.permute.xlu0 3
    %4380 = vperm.xlu0 %4379, %v3961
    %v4381 = vpop.permute.xlu0 %4380
    %4383 = vset.pattern.permute.xlu0 3
    %4384 = vperm.xlu0 %4383, %v3967
    %v4385 = vpop.permute.xlu0 %4384
    %4387 = vset.pattern.permute.xlu0 3
    %4388 = vperm.xlu0 %4387, %v3973
    %v4389 = vpop.permute.xlu0 %4388
    %4391 = vset.pattern.permute.xlu0 3
    %4392 = vperm.xlu0 %4391, %v3979
    %v4393 = vpop.permute.xlu0 %4392
    %4395 = vset.pattern.permute.xlu0 3
    %4396 = vperm.xlu0 %4395, %v3985
    %v4397 = vpop.permute.xlu0 %4396
    %4399 = vset.pattern.permute.xlu0 3
    %4400 = vperm.xlu0 %4399, %v3991
    %v4401 = vpop.permute.xlu0 %4400
    %4403 = vset.pattern.permute.xlu0 3
    %4404 = vperm.xlu0 %4403, %v3997
    %v4405 = vpop.permute.xlu0 %4404
    %v4407 = vsel %vm4090, %v4345, %v4361
    %v4408 = vsel %vm4090, %v4349, %v4365
    %v4409 = vsel %vm4090, %v4353, %v4369
    %v4410 = vsel %vm4090, %v4357, %v4373
    %v4411 = vsel %vm90, %v4407, %v4377
    %v4412 = vsel %vm90, %v4408, %v4381
    %v4413 = vsel %vm90, %v4409, %v4385
    %v4414 = vsel %vm90, %v4410, %v4389
    %v4415 = vsel %vm4099, %v4411, %v4393
    %v4416 = vsel %vm4099, %v4412, %v4397
    %v4417 = vsel %vm4099, %v4413, %v4401
    %v4418 = vsel %vm4099, %v4414, %v4405
    %v4419 = vmul.f32 %v4340, %v4322
    %v4420 = vmul.f32 %v4342, %v4323
    %v4421 = vlaneseq
    %v4422 = vshrl.u32 %v4421, 7
    %v4423 = vsub.s32 3, %v4422
    %v4424 = vrot.slane %v2908, %v4423
    %v4425 = vmul.f32 %v4424, %v4415
    %v4426 = vmul.f32 %v4424, %v4416
    %v4427 = vadd.f32 %v4419, %v4425
    %v4428 = vadd.f32 %v4420, %v4426
    %v4429 = vmul.f32 %v4427, %v4417
    %v4430 = vmul.f32 %v4428, %v4418
    %v4431 = vadd.f32 %v4429, %v4430
    %v4432 = vrot.slane %v4431, 4
    %v4433 = vadd.f32 %v4431, %v4432
    %v4434 = vrot.slane %v4433, 2
    %v4435 = vadd.f32 %v4433, %v4434
    %v4436 = vrot.slane %v4435, 1
    %v4437 = vadd.f32 %v4435, %v4436
    %v4438 = vlaneseq
    %v4439 = vshrl.u32 %v4438, 7
    %v4440 = vsub.s32 4, %v4439
    %v4441 = vrot.slane %v2907, %v4440
    %v4442 = vmul.f32 %v4441, %v82
    %v4443 = vmul.f32 %v4441, %v83
    %v4444 = vmul.f32 %v4442, 1.442695
    %v4445 = vpow.pop %v4444
    %v4446 = vmul.f32 %v4443, 1.442695
    %v4447 = vpow.pop %v4446
    %4448 = vset.pattern.permute.xlu0 4
    %4449 = vperm.xlu0 %4448, %v3907
    %v4450 = vpop.permute.xlu0 %4449
    %4452 = vset.pattern.permute.xlu0 4
    %4453 = vperm.xlu0 %4452, %v3913
    %v4454 = vpop.permute.xlu0 %4453
    %4456 = vset.pattern.permute.xlu0 4
    %4457 = vperm.xlu0 %4456, %v3919
    %v4458 = vpop.permute.xlu0 %4457
    %4460 = vset.pattern.permute.xlu0 4
    %4461 = vperm.xlu0 %4460, %v3925
    %v4462 = vpop.permute.xlu0 %4461
    %4464 = vset.pattern.permute.xlu0 4
    %4465 = vperm.xlu0 %4464, %v3931
    %v4466 = vpop.permute.xlu0 %4465
    %4468 = vset.pattern.permute.xlu0 4
    %4469 = vperm.xlu0 %4468, %v3937
    %v4470 = vpop.permute.xlu0 %4469
    %4472 = vset.pattern.permute.xlu0 4
    %4473 = vperm.xlu0 %4472, %v3943
    %v4474 = vpop.permute.xlu0 %4473
    %4476 = vset.pattern.permute.xlu0 4
    %4477 = vperm.xlu0 %4476, %v3949
    %v4478 = vpop.permute.xlu0 %4477
    %4480 = vset.pattern.permute.xlu0 4
    %4481 = vperm.xlu0 %4480, %v3955
    %v4482 = vpop.permute.xlu0 %4481
    %4484 = vset.pattern.permute.xlu0 4
    %4485 = vperm.xlu0 %4484, %v3961
    %v4486 = vpop.permute.xlu0 %4485
    %4488 = vset.pattern.permute.xlu0 4
    %4489 = vperm.xlu0 %4488, %v3967
    %v4490 = vpop.permute.xlu0 %4489
    %4492 = vset.pattern.permute.xlu0 4
    %4493 = vperm.xlu0 %4492, %v3973
    %v4494 = vpop.permute.xlu0 %4493
    %4496 = vset.pattern.permute.xlu0 4
    %4497 = vperm.xlu0 %4496, %v3979
    %v4498 = vpop.permute.xlu0 %4497
    %4500 = vset.pattern.permute.xlu0 4
    %4501 = vperm.xlu0 %4500, %v3985
    %v4502 = vpop.permute.xlu0 %4501
    %4504 = vset.pattern.permute.xlu0 4
    %4505 = vperm.xlu0 %4504, %v3991
    %v4506 = vpop.permute.xlu0 %4505
    %4508 = vset.pattern.permute.xlu0 4
    %4509 = vperm.xlu0 %4508, %v3997
    %v4510 = vpop.permute.xlu0 %4509
    %v4512 = vsel %vm4090, %v4450, %v4466
    %v4513 = vsel %vm4090, %v4454, %v4470
    %v4514 = vsel %vm4090, %v4458, %v4474
    %v4515 = vsel %vm4090, %v4462, %v4478
    %v4516 = vsel %vm90, %v4512, %v4482
    %v4517 = vsel %vm90, %v4513, %v4486
    %v4518 = vsel %vm90, %v4514, %v4490
    %v4519 = vsel %vm90, %v4515, %v4494
    %v4520 = vsel %vm4099, %v4516, %v4498
    %v4521 = vsel %vm4099, %v4517, %v4502
    %v4522 = vsel %vm4099, %v4518, %v4506
    %v4523 = vsel %vm4099, %v4519, %v4510
    %v4524 = vmul.f32 %v4445, %v4427
    %v4525 = vmul.f32 %v4447, %v4428
    %v4526 = vlaneseq
    %v4527 = vshrl.u32 %v4526, 7
    %v4528 = vsub.s32 4, %v4527
    %v4529 = vrot.slane %v2908, %v4528
    %v4530 = vmul.f32 %v4529, %v4520
    %v4531 = vmul.f32 %v4529, %v4521
    %v4532 = vadd.f32 %v4524, %v4530
    %v4533 = vadd.f32 %v4525, %v4531
    %v4534 = vmul.f32 %v4532, %v4522
    %v4535 = vmul.f32 %v4533, %v4523
    %v4536 = vadd.f32 %v4534, %v4535
    %v4537 = vrot.slane %v4536, 4
    %v4538 = vadd.f32 %v4536, %v4537
    %v4539 = vrot.slane %v4538, 2
    %v4540 = vadd.f32 %v4538, %v4539
    %v4541 = vrot.slane %v4540, 1
    %v4542 = vadd.f32 %v4540, %v4541
    %v4543 = vlaneseq
    %v4544 = vshrl.u32 %v4543, 7
    %v4545 = vsub.s32 5, %v4544
    %v4546 = vrot.slane %v2907, %v4545
    %v4547 = vmul.f32 %v4546, %v82
    %v4548 = vmul.f32 %v4546, %v83
    %v4549 = vmul.f32 %v4547, 1.442695
    %v4550 = vpow.pop %v4549
    %v4551 = vmul.f32 %v4548, 1.442695
    %v4552 = vpow.pop %v4551
    %4553 = vset.pattern.permute.xlu0 5
    %4554 = vperm.xlu0 %4553, %v3907
    %v4555 = vpop.permute.xlu0 %4554
    %4557 = vset.pattern.permute.xlu0 5
    %4558 = vperm.xlu0 %4557, %v3913
    %v4559 = vpop.permute.xlu0 %4558
    %4561 = vset.pattern.permute.xlu0 5
    %4562 = vperm.xlu0 %4561, %v3919
    %v4563 = vpop.permute.xlu0 %4562
    %4565 = vset.pattern.permute.xlu0 5
    %4566 = vperm.xlu0 %4565, %v3925
    %v4567 = vpop.permute.xlu0 %4566
    %4569 = vset.pattern.permute.xlu0 5
    %4570 = vperm.xlu0 %4569, %v3931
    %v4571 = vpop.permute.xlu0 %4570
    %4573 = vset.pattern.permute.xlu0 5
    %4574 = vperm.xlu0 %4573, %v3937
    %v4575 = vpop.permute.xlu0 %4574
    %4577 = vset.pattern.permute.xlu0 5
    %4578 = vperm.xlu0 %4577, %v3943
    %v4579 = vpop.permute.xlu0 %4578
    %4581 = vset.pattern.permute.xlu0 5
    %4582 = vperm.xlu0 %4581, %v3949
    %v4583 = vpop.permute.xlu0 %4582
    %4585 = vset.pattern.permute.xlu0 5
    %4586 = vperm.xlu0 %4585, %v3955
    %v4587 = vpop.permute.xlu0 %4586
    %4589 = vset.pattern.permute.xlu0 5
    %4590 = vperm.xlu0 %4589, %v3961
    %v4591 = vpop.permute.xlu0 %4590
    %4593 = vset.pattern.permute.xlu0 5
    %4594 = vperm.xlu0 %4593, %v3967
    %v4595 = vpop.permute.xlu0 %4594
    %4597 = vset.pattern.permute.xlu0 5
    %4598 = vperm.xlu0 %4597, %v3973
    %v4599 = vpop.permute.xlu0 %4598
    %4601 = vset.pattern.permute.xlu0 5
    %4602 = vperm.xlu0 %4601, %v3979
    %v4603 = vpop.permute.xlu0 %4602
    %4605 = vset.pattern.permute.xlu0 5
    %4606 = vperm.xlu0 %4605, %v3985
    %v4607 = vpop.permute.xlu0 %4606
    %4609 = vset.pattern.permute.xlu0 5
    %4610 = vperm.xlu0 %4609, %v3991
    %v4611 = vpop.permute.xlu0 %4610
    %4613 = vset.pattern.permute.xlu0 5
    %4614 = vperm.xlu0 %4613, %v3997
    %v4615 = vpop.permute.xlu0 %4614
    %v4617 = vsel %vm4090, %v4555, %v4571
    %v4618 = vsel %vm4090, %v4559, %v4575
    %v4619 = vsel %vm4090, %v4563, %v4579
    %v4620 = vsel %vm4090, %v4567, %v4583
    %v4621 = vsel %vm90, %v4617, %v4587
    %v4622 = vsel %vm90, %v4618, %v4591
    %v4623 = vsel %vm90, %v4619, %v4595
    %v4624 = vsel %vm90, %v4620, %v4599
    %v4625 = vsel %vm4099, %v4621, %v4603
    %v4626 = vsel %vm4099, %v4622, %v4607
    %v4627 = vsel %vm4099, %v4623, %v4611
    %v4628 = vsel %vm4099, %v4624, %v4615
    %v4629 = vmul.f32 %v4550, %v4532
    %v4630 = vmul.f32 %v4552, %v4533
    %v4631 = vlaneseq
    %v4632 = vshrl.u32 %v4631, 7
    %v4633 = vsub.s32 5, %v4632
    %v4634 = vrot.slane %v2908, %v4633
    %v4635 = vmul.f32 %v4634, %v4625
    %v4636 = vmul.f32 %v4634, %v4626
    %v4637 = vadd.f32 %v4629, %v4635
    %v4638 = vadd.f32 %v4630, %v4636
    %v4639 = vmul.f32 %v4637, %v4627
    %v4640 = vmul.f32 %v4638, %v4628
    %v4641 = vadd.f32 %v4639, %v4640
    %v4642 = vrot.slane %v4641, 4
    %v4643 = vadd.f32 %v4641, %v4642
    %v4644 = vrot.slane %v4643, 2
    %v4645 = vadd.f32 %v4643, %v4644
    %v4646 = vrot.slane %v4645, 1
    %v4647 = vadd.f32 %v4645, %v4646
    %v4648 = vlaneseq
    %v4649 = vshrl.u32 %v4648, 7
    %v4650 = vsub.s32 6, %v4649
    %v4651 = vrot.slane %v2907, %v4650
    %v4652 = vmul.f32 %v4651, %v82
    %v4653 = vmul.f32 %v4651, %v83
    %v4654 = vmul.f32 %v4652, 1.442695
    %v4655 = vpow.pop %v4654
    %v4656 = vmul.f32 %v4653, 1.442695
    %v4657 = vpow.pop %v4656
    %4658 = vset.pattern.permute.xlu0 6
    %4659 = vperm.xlu0 %4658, %v3907
    %v4660 = vpop.permute.xlu0 %4659
    %4662 = vset.pattern.permute.xlu0 6
    %4663 = vperm.xlu0 %4662, %v3913
    %v4664 = vpop.permute.xlu0 %4663
    %4666 = vset.pattern.permute.xlu0 6
    %4667 = vperm.xlu0 %4666, %v3919
    %v4668 = vpop.permute.xlu0 %4667
    %4670 = vset.pattern.permute.xlu0 6
    %4671 = vperm.xlu0 %4670, %v3925
    %v4672 = vpop.permute.xlu0 %4671
    %4674 = vset.pattern.permute.xlu0 6
    %4675 = vperm.xlu0 %4674, %v3931
    %v4676 = vpop.permute.xlu0 %4675
    %4678 = vset.pattern.permute.xlu0 6
    %4679 = vperm.xlu0 %4678, %v3937
    %v4680 = vpop.permute.xlu0 %4679
    %4682 = vset.pattern.permute.xlu0 6
    %4683 = vperm.xlu0 %4682, %v3943
    %v4684 = vpop.permute.xlu0 %4683
    %4686 = vset.pattern.permute.xlu0 6
    %4687 = vperm.xlu0 %4686, %v3949
    %v4688 = vpop.permute.xlu0 %4687
    %4690 = vset.pattern.permute.xlu0 6
    %4691 = vperm.xlu0 %4690, %v3955
    %v4692 = vpop.permute.xlu0 %4691
    %4694 = vset.pattern.permute.xlu0 6
    %4695 = vperm.xlu0 %4694, %v3961
    %v4696 = vpop.permute.xlu0 %4695
    %4698 = vset.pattern.permute.xlu0 6
    %4699 = vperm.xlu0 %4698, %v3967
    %v4700 = vpop.permute.xlu0 %4699
    %4702 = vset.pattern.permute.xlu0 6
    %4703 = vperm.xlu0 %4702, %v3973
    %v4704 = vpop.permute.xlu0 %4703
    %4706 = vset.pattern.permute.xlu0 6
    %4707 = vperm.xlu0 %4706, %v3979
    %v4708 = vpop.permute.xlu0 %4707
    %4710 = vset.pattern.permute.xlu0 6
    %4711 = vperm.xlu0 %4710, %v3985
    %v4712 = vpop.permute.xlu0 %4711
    %4714 = vset.pattern.permute.xlu0 6
    %4715 = vperm.xlu0 %4714, %v3991
    %v4716 = vpop.permute.xlu0 %4715
    %4718 = vset.pattern.permute.xlu0 6
    %4719 = vperm.xlu0 %4718, %v3997
    %v4720 = vpop.permute.xlu0 %4719
    %v4722 = vsel %vm4090, %v4660, %v4676
    %v4723 = vsel %vm4090, %v4664, %v4680
    %v4724 = vsel %vm4090, %v4668, %v4684
    %v4725 = vsel %vm4090, %v4672, %v4688
    %v4726 = vsel %vm90, %v4722, %v4692
    %v4727 = vsel %vm90, %v4723, %v4696
    %v4728 = vsel %vm90, %v4724, %v4700
    %v4729 = vsel %vm90, %v4725, %v4704
    %v4730 = vsel %vm4099, %v4726, %v4708
    %v4731 = vsel %vm4099, %v4727, %v4712
    %v4732 = vsel %vm4099, %v4728, %v4716
    %v4733 = vsel %vm4099, %v4729, %v4720
    %v4734 = vmul.f32 %v4655, %v4637
    %v4735 = vmul.f32 %v4657, %v4638
    %v4736 = vlaneseq
    %v4737 = vshrl.u32 %v4736, 7
    %v4738 = vsub.s32 6, %v4737
    %v4739 = vrot.slane %v2908, %v4738
    %v4740 = vmul.f32 %v4739, %v4730
    %v4741 = vmul.f32 %v4739, %v4731
    %v4742 = vadd.f32 %v4734, %v4740
    %v4743 = vadd.f32 %v4735, %v4741
    %v4744 = vmul.f32 %v4742, %v4732
    %v4745 = vmul.f32 %v4743, %v4733
    %v4746 = vadd.f32 %v4744, %v4745
    %v4747 = vrot.slane %v4746, 4
    %v4748 = vadd.f32 %v4746, %v4747
    %v4749 = vrot.slane %v4748, 2
    %v4750 = vadd.f32 %v4748, %v4749
    %v4751 = vrot.slane %v4750, 1
    %v4752 = vadd.f32 %v4750, %v4751
    %v4753 = vlaneseq
    %v4754 = vshrl.u32 %v4753, 7
    %v4755 = vsub.s32 7, %v4754
    %v4756 = vrot.slane %v2907, %v4755
    %v4757 = vmul.f32 %v4756, %v82
    %v4758 = vmul.f32 %v4756, %v83
    %v4759 = vmul.f32 %v4757, 1.442695
    %v4760 = vpow.pop %v4759
    %v4761 = vmul.f32 %v4758, 1.442695
    %v4762 = vpow.pop %v4761
    %4763 = vset.pattern.permute.xlu0 7
    %4764 = vperm.xlu0 %4763, %v3907
    %v4765 = vpop.permute.xlu0 %4764
    %4767 = vset.pattern.permute.xlu0 7
    %4768 = vperm.xlu0 %4767, %v3913
    %v4769 = vpop.permute.xlu0 %4768
    %4771 = vset.pattern.permute.xlu0 7
    %4772 = vperm.xlu0 %4771, %v3919
    %v4773 = vpop.permute.xlu0 %4772
    %4775 = vset.pattern.permute.xlu0 7
    %4776 = vperm.xlu0 %4775, %v3925
    %v4777 = vpop.permute.xlu0 %4776
    %4779 = vset.pattern.permute.xlu0 7
    %4780 = vperm.xlu0 %4779, %v3931
    %v4781 = vpop.permute.xlu0 %4780
    %4783 = vset.pattern.permute.xlu0 7
    %4784 = vperm.xlu0 %4783, %v3937
    %v4785 = vpop.permute.xlu0 %4784
    %4787 = vset.pattern.permute.xlu0 7
    %4788 = vperm.xlu0 %4787, %v3943
    %v4789 = vpop.permute.xlu0 %4788
    %4791 = vset.pattern.permute.xlu0 7
    %4792 = vperm.xlu0 %4791, %v3949
    %v4793 = vpop.permute.xlu0 %4792
    %4795 = vset.pattern.permute.xlu0 7
    %4796 = vperm.xlu0 %4795, %v3955
    %v4797 = vpop.permute.xlu0 %4796
    %4799 = vset.pattern.permute.xlu0 7
    %4800 = vperm.xlu0 %4799, %v3961
    %v4801 = vpop.permute.xlu0 %4800
    %4803 = vset.pattern.permute.xlu0 7
    %4804 = vperm.xlu0 %4803, %v3967
    %v4805 = vpop.permute.xlu0 %4804
    %4807 = vset.pattern.permute.xlu0 7
    %4808 = vperm.xlu0 %4807, %v3973
    %v4809 = vpop.permute.xlu0 %4808
    %4811 = vset.pattern.permute.xlu0 7
    %4812 = vperm.xlu0 %4811, %v3979
    %v4813 = vpop.permute.xlu0 %4812
    %4815 = vset.pattern.permute.xlu0 7
    %4816 = vperm.xlu0 %4815, %v3985
    %v4817 = vpop.permute.xlu0 %4816
    %4819 = vset.pattern.permute.xlu0 7
    %4820 = vperm.xlu0 %4819, %v3991
    %v4821 = vpop.permute.xlu0 %4820
    %4823 = vset.pattern.permute.xlu0 7
    %4824 = vperm.xlu0 %4823, %v3997
    %v4825 = vpop.permute.xlu0 %4824
    %v4827 = vsel %vm4090, %v4765, %v4781
    %v4828 = vsel %vm4090, %v4769, %v4785
    %v4829 = vsel %vm4090, %v4773, %v4789
    %v4830 = vsel %vm4090, %v4777, %v4793
    %v4831 = vsel %vm90, %v4827, %v4797
    %v4832 = vsel %vm90, %v4828, %v4801
    %v4833 = vsel %vm90, %v4829, %v4805
    %v4834 = vsel %vm90, %v4830, %v4809
    %v4835 = vsel %vm4099, %v4831, %v4813
    %v4836 = vsel %vm4099, %v4832, %v4817
    %v4837 = vsel %vm4099, %v4833, %v4821
    %v4838 = vsel %vm4099, %v4834, %v4825
    %v4839 = vmul.f32 %v4760, %v4742
    %v4840 = vmul.f32 %v4762, %v4743
    %v4841 = vlaneseq
    %v4842 = vshrl.u32 %v4841, 7
    %v4843 = vsub.s32 7, %v4842
    %v4844 = vrot.slane %v2908, %v4843
    %v4845 = vmul.f32 %v4844, %v4835
    %v4846 = vmul.f32 %v4844, %v4836
    %v4847 = vadd.f32 %v4839, %v4845
    %v4848 = vadd.f32 %v4840, %v4846
    %v4849 = vmul.f32 %v4847, %v4837
    %v4850 = vmul.f32 %v4848, %v4838
    %v4851 = vadd.f32 %v4849, %v4850
    %v4852 = vrot.slane %v4851, 4
    %v4853 = vadd.f32 %v4851, %v4852
    %v4854 = vrot.slane %v4853, 2
    %v4855 = vadd.f32 %v4853, %v4854
    %v4856 = vrot.slane %v4855, 1
    %v4857 = vadd.f32 %v4855, %v4856
    %vm4858 = vcmask 1040384
    %v4859 = vsel %vm4858, %v4122, %v4227
    %vm4860 = vcmask 1041408
    %v4861 = vsel %vm4860, %v4859, %v4332
    %v4862 = vsel %vm2195, %v4861, %v4437
    %vm4863 = vcmask 1043456
    %v4864 = vsel %vm4863, %v4862, %v4542
    %v4865 = vsel %vm2243, %v4864, %v4647
    %v4866 = vsel %vm2229, %v4865, %v4752
    %v4867 = vsel %vm2215, %v4866, %v4857
    %v4868 = vlaneseq
    %v4869 = vshrl.u32 %v4868, 7
    %v4870 = vsub.s32 0, %v4869
    %v4871 = vrot.slane %v86, %v4870
    %v4872 = vmul.f32 %v2255, %v4871
    %v4873 = vadd.f32 %v4867, %v4872
    %4875 = vrot.lane.b32.xlu0 %v4873, 64
    %v4876 = vpop.permute.xlu0 %4875
    %4878 = vmatprep.subr.mxu0 0.0
    %v4879 = vand.u32 %v4876, 4294901760
    %4880 = vmatpush1.msra.mxu0 %v4879
    %4881 = vmatprep.subr.mxu0 0.0
    %4882 = vmatpush1.msra.mxu0 0.0
    %4883 = vmatprep.subr.mxu0 0.0
    %4884 = vmatpush1.msra.mxu0 0.0
    %4885 = vmatprep.subr.mxu0 0.0
    %4886 = vmatpush1.msra.mxu0 0.0
    %4887 = vmatprep.subr.mxu0 0.0
    %4888 = vmatpush1.msra.mxu0 0.0
    %4889 = vmatprep.subr.mxu0 0.0
    %4890 = vmatpush1.msra.mxu0 0.0
    %4891 = vmatprep.subr.mxu0 0.0
    %4892 = vmatpush1.msra.mxu0 0.0
    %4893 = vmatprep.subr.mxu0 0.0
    %4894 = vmatpush1.msra.mxu0 0.0
    %4895 = vmatprep.subr.mxu0 0.0
    %4896 = vmatpush1.msra.mxu0 0.0
    %4897 = vmatprep.subr.mxu0 0.0
    %4898 = vmatpush1.msra.mxu0 0.0
    %4899 = vmatprep.subr.mxu0 0.0
    %4900 = vmatpush1.msra.mxu0 0.0
    %4901 = vmatprep.subr.mxu0 0.0
    %4902 = vmatpush1.msra.mxu0 0.0
    %4903 = vmatprep.subr.mxu0 0.0
    %4904 = vmatpush1.msra.mxu0 0.0
    %4905 = vmatprep.subr.mxu0 0.0
    %4906 = vmatpush1.msra.mxu0 0.0
    %4907 = vmatprep.subr.mxu0 0.0
    %4908 = vmatpush1.msra.mxu0 0.0
    %4909 = vmatprep.subr.mxu0 0.0
    %4910 = vmatpush1.msra.mxu0 0.0
    %4911 = vmatprep.subr.mxu0 0.0
    %4912 = vmatpush1.msra.mxu0 0.0
    %4913 = vmatprep.subr.mxu0 0.0
    %4914 = vmatpush1.msra.mxu0 0.0
    %4915 = vmatprep.subr.mxu0 0.0
    %4916 = vmatpush1.msra.mxu0 0.0
    %4917 = vmatprep.subr.mxu0 0.0
    %4918 = vmatpush1.msra.mxu0 0.0
    %4919 = vmatprep.subr.mxu0 0.0
    %4920 = vmatpush1.msra.mxu0 0.0
    %4921 = vmatprep.subr.mxu0 0.0
    %4922 = vmatpush1.msra.mxu0 0.0
    %4923 = vmatprep.subr.mxu0 0.0
    %4924 = vmatpush1.msra.mxu0 0.0
    %4925 = vmatprep.subr.mxu0 0.0
    %4926 = vmatpush1.msra.mxu0 0.0
    %4927 = vmatprep.subr.mxu0 0.0
    %4928 = vmatpush1.msra.mxu0 0.0
    %4929 = vmatprep.subr.mxu0 0.0
    %4930 = vmatpush1.msra.mxu0 0.0
    %4931 = vmatprep.subr.mxu0 0.0
    %4932 = vmatpush1.msra.mxu0 0.0
    %4933 = vmatprep.subr.mxu0 0.0
    %4934 = vmatpush1.msra.mxu0 0.0
    %4935 = vmatprep.subr.mxu0 0.0
    %4936 = vmatpush1.msra.mxu0 0.0
    %4937 = vmatprep.subr.mxu0 0.0
    %4938 = vmatpush1.msra.mxu0 0.0
    %4939 = vmatprep.subr.mxu0 0.0
    %4940 = vmatpush1.msra.mxu0 0.0
    %4941 = vmatprep.subr.mxu0 0.0
    %4942 = vmatpush1.msra.mxu0 0.0
    %4943 = vmatprep.mubr.f32.mxu0 0.0
    %v4944 = vand.u32 %v1739, 4294901760
    %v4945 = vsub.f32 %v1739, %v4944
    %v4946 = vand.u32 %v4945, 4294901760
    %v4947 = vsub.f32 %v4945, %v4946
    %v4948 = vand.u32 %v4947, 4294901760
    %4949 = vmatmul.mubr.f32.gmra.mrb[0].mxu0 %v4948
    %v4950 = vpop.f32.mrb[0].mxu0
    %v4951 = vadd.f32 0.0, %v4950
    %v4952 = vpop.f32.mrb[0].mxu0
    %4953 = vdwg.mxu0
    %4954 = vmatprep.subr.mxu0 0.0
    %v4955 = vand.u32 %v4876, 4294901760
    %v4956 = vsub.f32 %v4876, %v4955
    %v4957 = vand.u32 %v4956, 4294901760
    %v4958 = vsub.f32 %v4956, %v4957
    %v4959 = vand.u32 %v4958, 4294901760
    %4960 = vmatpush1.msra.mxu0 %v4959
    %4961 = vmatprep.subr.mxu0 0.0
    %4962 = vmatpush1.msra.mxu0 0.0
    %4963 = vmatprep.subr.mxu0 0.0
    %4964 = vmatpush1.msra.mxu0 0.0
    %4965 = vmatprep.subr.mxu0 0.0
    %4966 = vmatpush1.msra.mxu0 0.0
    %4967 = vmatprep.subr.mxu0 0.0
    %4968 = vmatpush1.msra.mxu0 0.0
    %4969 = vmatprep.subr.mxu0 0.0
    %4970 = vmatpush1.msra.mxu0 0.0
    %4971 = vmatprep.subr.mxu0 0.0
    %4972 = vmatpush1.msra.mxu0 0.0
    %4973 = vmatprep.subr.mxu0 0.0
    %4974 = vmatpush1.msra.mxu0 0.0
    %4975 = vmatprep.subr.mxu0 0.0
    %4976 = vmatpush1.msra.mxu0 0.0
    %4977 = vmatprep.subr.mxu0 0.0
    %4978 = vmatpush1.msra.mxu0 0.0
    %4979 = vmatprep.subr.mxu0 0.0
    %4980 = vmatpush1.msra.mxu0 0.0
    %4981 = vmatprep.subr.mxu0 0.0
    %4982 = vmatpush1.msra.mxu0 0.0
    %4983 = vmatprep.subr.mxu0 0.0
    %4984 = vmatpush1.msra.mxu0 0.0
    %4985 = vmatprep.subr.mxu0 0.0
    %4986 = vmatpush1.msra.mxu0 0.0
    %4987 = vmatprep.subr.mxu0 0.0
    %4988 = vmatpush1.msra.mxu0 0.0
    %4989 = vmatprep.subr.mxu0 0.0
    %4990 = vmatpush1.msra.mxu0 0.0
    %4991 = vmatprep.subr.mxu0 0.0
    %4992 = vmatpush1.msra.mxu0 0.0
    %4993 = vmatprep.subr.mxu0 0.0
    %4994 = vmatpush1.msra.mxu0 0.0
    %4995 = vmatprep.subr.mxu0 0.0
    %4996 = vmatpush1.msra.mxu0 0.0
    %4997 = vmatprep.subr.mxu0 0.0
    %4998 = vmatpush1.msra.mxu0 0.0
    %4999 = vmatprep.subr.mxu0 0.0
    %5000 = vmatpush1.msra.mxu0 0.0
    %5001 = vmatprep.subr.mxu0 0.0
    %5002 = vmatpush1.msra.mxu0 0.0
    %5003 = vmatprep.subr.mxu0 0.0
    %5004 = vmatpush1.msra.mxu0 0.0
    %5005 = vmatprep.subr.mxu0 0.0
    %5006 = vmatpush1.msra.mxu0 0.0
    %5007 = vmatprep.subr.mxu0 0.0
    %5008 = vmatpush1.msra.mxu0 0.0
    %5009 = vmatprep.subr.mxu0 0.0
    %5010 = vmatpush1.msra.mxu0 0.0
    %5011 = vmatprep.subr.mxu0 0.0
    %5012 = vmatpush1.msra.mxu0 0.0
    %5013 = vmatprep.subr.mxu0 0.0
    %5014 = vmatpush1.msra.mxu0 0.0
    %5015 = vmatprep.subr.mxu0 0.0
    %5016 = vmatpush1.msra.mxu0 0.0
    %5017 = vmatprep.subr.mxu0 0.0
    %5018 = vmatpush1.msra.mxu0 0.0
    %5019 = vmatprep.subr.mxu0 0.0
    %5020 = vmatpush1.msra.mxu0 0.0
    %5021 = vmatprep.subr.mxu0 0.0
    %5022 = vmatpush1.msra.mxu0 0.0
    %5023 = vmatprep.mubr.f32.mxu0 0.0
    %v5024 = vand.u32 %v1739, 4294901760
    %5025 = vmatmul.mubr.f32.gmra.mrb[0].mxu0 %v5024
    %v5026 = vpop.f32.mrb[0].mxu0
    %v5027 = vadd.f32 %v4951, %v5026
    %v5028 = vpop.f32.mrb[0].mxu0
    %5029 = vdwg.mxu0
    %5030 = vmatprep.subr.mxu0 0.0
    %v5031 = vand.u32 %v4876, 4294901760
    %v5032 = vsub.f32 %v4876, %v5031
    %5033 = vmatpush1.msra.mxu0 %v5032
    %5034 = vmatprep.subr.mxu0 0.0
    %5035 = vmatpush1.msra.mxu0 0.0
    %5036 = vmatprep.subr.mxu0 0.0
    %5037 = vmatpush1.msra.mxu0 0.0
    %5038 = vmatprep.subr.mxu0 0.0
    %5039 = vmatpush1.msra.mxu0 0.0
    %5040 = vmatprep.subr.mxu0 0.0
    %5041 = vmatpush1.msra.mxu0 0.0
    %5042 = vmatprep.subr.mxu0 0.0
    %5043 = vmatpush1.msra.mxu0 0.0
    %5044 = vmatprep.subr.mxu0 0.0
    %5045 = vmatpush1.msra.mxu0 0.0
    %5046 = vmatprep.subr.mxu0 0.0
    %5047 = vmatpush1.msra.mxu0 0.0
    %5048 = vmatprep.subr.mxu0 0.0
    %5049 = vmatpush1.msra.mxu0 0.0
    %5050 = vmatprep.subr.mxu0 0.0
    %5051 = vmatpush1.msra.mxu0 0.0
    %5052 = vmatprep.subr.mxu0 0.0
    %5053 = vmatpush1.msra.mxu0 0.0
    %5054 = vmatprep.subr.mxu0 0.0
    %5055 = vmatpush1.msra.mxu0 0.0
    %5056 = vmatprep.subr.mxu0 0.0
    %5057 = vmatpush1.msra.mxu0 0.0
    %5058 = vmatprep.subr.mxu0 0.0
    %5059 = vmatpush1.msra.mxu0 0.0
    %5060 = vmatprep.subr.mxu0 0.0
    %5061 = vmatpush1.msra.mxu0 0.0
    %5062 = vmatprep.subr.mxu0 0.0
    %5063 = vmatpush1.msra.mxu0 0.0
    %5064 = vmatprep.subr.mxu0 0.0
    %5065 = vmatpush1.msra.mxu0 0.0
    %5066 = vmatprep.subr.mxu0 0.0
    %5067 = vmatpush1.msra.mxu0 0.0
    %5068 = vmatprep.subr.mxu0 0.0
    %5069 = vmatpush1.msra.mxu0 0.0
    %5070 = vmatprep.subr.mxu0 0.0
    %5071 = vmatpush1.msra.mxu0 0.0
    %5072 = vmatprep.subr.mxu0 0.0
    %5073 = vmatpush1.msra.mxu0 0.0
    %5074 = vmatprep.subr.mxu0 0.0
    %5075 = vmatpush1.msra.mxu0 0.0
    %5076 = vmatprep.subr.mxu0 0.0
    %5077 = vmatpush1.msra.mxu0 0.0
    %5078 = vmatprep.subr.mxu0 0.0
    %5079 = vmatpush1.msra.mxu0 0.0
    %5080 = vmatprep.subr.mxu0 0.0
    %5081 = vmatpush1.msra.mxu0 0.0
    %5082 = vmatprep.subr.mxu0 0.0
    %5083 = vmatpush1.msra.mxu0 0.0
    %5084 = vmatprep.subr.mxu0 0.0
    %5085 = vmatpush1.msra.mxu0 0.0
    %5086 = vmatprep.subr.mxu0 0.0
    %5087 = vmatpush1.msra.mxu0 0.0
    %5088 = vmatprep.subr.mxu0 0.0
    %5089 = vmatpush1.msra.mxu0 0.0
    %5090 = vmatprep.subr.mxu0 0.0
    %5091 = vmatpush1.msra.mxu0 0.0
    %5092 = vmatprep.subr.mxu0 0.0
    %5093 = vmatpush1.msra.mxu0 0.0
    %5094 = vmatprep.subr.mxu0 0.0
    %5095 = vmatpush1.msra.mxu0 0.0
    %5096 = vmatprep.mubr.f32.mxu0 0.0
    %v5097 = vand.u32 %v1739, 4294901760
    %v5098 = vsub.f32 %v1739, %v5097
    %5099 = vmatmul.mubr.f32.gmra.mrb[0].mxu0 %v5098
    %v5100 = vpop.f32.mrb[0].mxu0
    %v5101 = vadd.f32 %v5027, %v5100
    %v5102 = vpop.f32.mrb[0].mxu0
    %5103 = vdwg.mxu0
    %5104 = vmatprep.subr.mxu0 0.0
    %v5105 = vand.u32 %v4876, 4294901760
    %5106 = vmatpush1.msra.mxu0 %v5105
    %5107 = vmatprep.subr.mxu0 0.0
    %5108 = vmatpush1.msra.mxu0 0.0
    %5109 = vmatprep.subr.mxu0 0.0
    %5110 = vmatpush1.msra.mxu0 0.0
    %5111 = vmatprep.subr.mxu0 0.0
    %5112 = vmatpush1.msra.mxu0 0.0
    %5113 = vmatprep.subr.mxu0 0.0
    %5114 = vmatpush1.msra.mxu0 0.0
    %5115 = vmatprep.subr.mxu0 0.0
    %5116 = vmatpush1.msra.mxu0 0.0
    %5117 = vmatprep.subr.mxu0 0.0
    %5118 = vmatpush1.msra.mxu0 0.0
    %5119 = vmatprep.subr.mxu0 0.0
    %5120 = vmatpush1.msra.mxu0 0.0
    %5121 = vmatprep.subr.mxu0 0.0
    %5122 = vmatpush1.msra.mxu0 0.0
    %5123 = vmatprep.subr.mxu0 0.0
    %5124 = vmatpush1.msra.mxu0 0.0
    %5125 = vmatprep.subr.mxu0 0.0
    %5126 = vmatpush1.msra.mxu0 0.0
    %5127 = vmatprep.subr.mxu0 0.0
    %5128 = vmatpush1.msra.mxu0 0.0
    %5129 = vmatprep.subr.mxu0 0.0
    %5130 = vmatpush1.msra.mxu0 0.0
    %5131 = vmatprep.subr.mxu0 0.0
    %5132 = vmatpush1.msra.mxu0 0.0
    %5133 = vmatprep.subr.mxu0 0.0
    %5134 = vmatpush1.msra.mxu0 0.0
    %5135 = vmatprep.subr.mxu0 0.0
    %5136 = vmatpush1.msra.mxu0 0.0
    %5137 = vmatprep.subr.mxu0 0.0
    %5138 = vmatpush1.msra.mxu0 0.0
    %5139 = vmatprep.subr.mxu0 0.0
    %5140 = vmatpush1.msra.mxu0 0.0
    %5141 = vmatprep.subr.mxu0 0.0
    %5142 = vmatpush1.msra.mxu0 0.0
    %5143 = vmatprep.subr.mxu0 0.0
    %5144 = vmatpush1.msra.mxu0 0.0
    %5145 = vmatprep.subr.mxu0 0.0
    %5146 = vmatpush1.msra.mxu0 0.0
    %5147 = vmatprep.subr.mxu0 0.0
    %5148 = vmatpush1.msra.mxu0 0.0
    %5149 = vmatprep.subr.mxu0 0.0
    %5150 = vmatpush1.msra.mxu0 0.0
    %5151 = vmatprep.subr.mxu0 0.0
    %5152 = vmatpush1.msra.mxu0 0.0
    %5153 = vmatprep.subr.mxu0 0.0
    %5154 = vmatpush1.msra.mxu0 0.0
    %5155 = vmatprep.subr.mxu0 0.0
    %5156 = vmatpush1.msra.mxu0 0.0
    %5157 = vmatprep.subr.mxu0 0.0
    %5158 = vmatpush1.msra.mxu0 0.0
    %5159 = vmatprep.subr.mxu0 0.0
    %5160 = vmatpush1.msra.mxu0 0.0
    %5161 = vmatprep.subr.mxu0 0.0
    %5162 = vmatpush1.msra.mxu0 0.0
    %5163 = vmatprep.subr.mxu0 0.0
    %5164 = vmatpush1.msra.mxu0 0.0
    %5165 = vmatprep.subr.mxu0 0.0
    %5166 = vmatpush1.msra.mxu0 0.0
    %5167 = vmatprep.subr.mxu0 0.0
    %5168 = vmatpush1.msra.mxu0 0.0
    %5169 = vmatprep.mubr.f32.mxu0 0.0
    %v5170 = vand.u32 %v1739, 4294901760
    %v5171 = vsub.f32 %v1739, %v5170
    %v5172 = vand.u32 %v5171, 4294901760
    %5173 = vmatmul.mubr.f32.gmra.mrb[0].mxu0 %v5172
    %v5174 = vpop.f32.mrb[0].mxu0
    %v5175 = vadd.f32 %v5101, %v5174
    %v5176 = vpop.f32.mrb[0].mxu0
    %5177 = vdwg.mxu0
    %5178 = vmatprep.subr.mxu0 0.0
    %v5179 = vand.u32 %v4876, 4294901760
    %v5180 = vsub.f32 %v4876, %v5179
    %v5181 = vand.u32 %v5180, 4294901760
    %5182 = vmatpush1.msra.mxu0 %v5181
    %5183 = vmatprep.subr.mxu0 0.0
    %5184 = vmatpush1.msra.mxu0 0.0
    %5185 = vmatprep.subr.mxu0 0.0
    %5186 = vmatpush1.msra.mxu0 0.0
    %5187 = vmatprep.subr.mxu0 0.0
    %5188 = vmatpush1.msra.mxu0 0.0
    %5189 = vmatprep.subr.mxu0 0.0
    %5190 = vmatpush1.msra.mxu0 0.0
    %5191 = vmatprep.subr.mxu0 0.0
    %5192 = vmatpush1.msra.mxu0 0.0
    %5193 = vmatprep.subr.mxu0 0.0
    %5194 = vmatpush1.msra.mxu0 0.0
    %5195 = vmatprep.subr.mxu0 0.0
    %5196 = vmatpush1.msra.mxu0 0.0
    %5197 = vmatprep.subr.mxu0 0.0
    %5198 = vmatpush1.msra.mxu0 0.0
    %5199 = vmatprep.subr.mxu0 0.0
    %5200 = vmatpush1.msra.mxu0 0.0
    %5201 = vmatprep.subr.mxu0 0.0
    %5202 = vmatpush1.msra.mxu0 0.0
    %5203 = vmatprep.subr.mxu0 0.0
    %5204 = vmatpush1.msra.mxu0 0.0
    %5205 = vmatprep.subr.mxu0 0.0
    %5206 = vmatpush1.msra.mxu0 0.0
    %5207 = vmatprep.subr.mxu0 0.0
    %5208 = vmatpush1.msra.mxu0 0.0
    %5209 = vmatprep.subr.mxu0 0.0
    %5210 = vmatpush1.msra.mxu0 0.0
    %5211 = vmatprep.subr.mxu0 0.0
    %5212 = vmatpush1.msra.mxu0 0.0
    %5213 = vmatprep.subr.mxu0 0.0
    %5214 = vmatpush1.msra.mxu0 0.0
    %5215 = vmatprep.subr.mxu0 0.0
    %5216 = vmatpush1.msra.mxu0 0.0
    %5217 = vmatprep.subr.mxu0 0.0
    %5218 = vmatpush1.msra.mxu0 0.0
    %5219 = vmatprep.subr.mxu0 0.0
    %5220 = vmatpush1.msra.mxu0 0.0
    %5221 = vmatprep.subr.mxu0 0.0
    %5222 = vmatpush1.msra.mxu0 0.0
    %5223 = vmatprep.subr.mxu0 0.0
    %5224 = vmatpush1.msra.mxu0 0.0
    %5225 = vmatprep.subr.mxu0 0.0
    %5226 = vmatpush1.msra.mxu0 0.0
    %5227 = vmatprep.subr.mxu0 0.0
    %5228 = vmatpush1.msra.mxu0 0.0
    %5229 = vmatprep.subr.mxu0 0.0
    %5230 = vmatpush1.msra.mxu0 0.0
    %5231 = vmatprep.subr.mxu0 0.0
    %5232 = vmatpush1.msra.mxu0 0.0
    %5233 = vmatprep.subr.mxu0 0.0
    %5234 = vmatpush1.msra.mxu0 0.0
    %5235 = vmatprep.subr.mxu0 0.0
    %5236 = vmatpush1.msra.mxu0 0.0
    %5237 = vmatprep.subr.mxu0 0.0
    %5238 = vmatpush1.msra.mxu0 0.0
    %5239 = vmatprep.subr.mxu0 0.0
    %5240 = vmatpush1.msra.mxu0 0.0
    %5241 = vmatprep.subr.mxu0 0.0
    %5242 = vmatpush1.msra.mxu0 0.0
    %5243 = vmatprep.subr.mxu0 0.0
    %5244 = vmatpush1.msra.mxu0 0.0
    %5245 = vmatprep.mubr.f32.mxu0 0.0
    %v5246 = vand.u32 %v1739, 4294901760
    %5247 = vmatmul.mubr.f32.gmra.mrb[0].mxu0 %v5246
    %v5248 = vpop.f32.mrb[0].mxu0
    %v5249 = vadd.f32 %v5175, %v5248
    %v5250 = vpop.f32.mrb[0].mxu0
    %5251 = vdwg.mxu0
    %5252 = vmatprep.subr.mxu0 0.0
    %v5253 = vand.u32 %v4876, 4294901760
    %5254 = vmatpush1.msra.mxu0 %v5253
    %5255 = vmatprep.subr.mxu0 0.0
    %5256 = vmatpush1.msra.mxu0 0.0
    %5257 = vmatprep.subr.mxu0 0.0
    %5258 = vmatpush1.msra.mxu0 0.0
    %5259 = vmatprep.subr.mxu0 0.0
    %5260 = vmatpush1.msra.mxu0 0.0
    %5261 = vmatprep.subr.mxu0 0.0
    %5262 = vmatpush1.msra.mxu0 0.0
    %5263 = vmatprep.subr.mxu0 0.0
    %5264 = vmatpush1.msra.mxu0 0.0
    %5265 = vmatprep.subr.mxu0 0.0
    %5266 = vmatpush1.msra.mxu0 0.0
    %5267 = vmatprep.subr.mxu0 0.0
    %5268 = vmatpush1.msra.mxu0 0.0
    %5269 = vmatprep.subr.mxu0 0.0
    %5270 = vmatpush1.msra.mxu0 0.0
    %5271 = vmatprep.subr.mxu0 0.0
    %5272 = vmatpush1.msra.mxu0 0.0
    %5273 = vmatprep.subr.mxu0 0.0
    %5274 = vmatpush1.msra.mxu0 0.0
    %5275 = vmatprep.subr.mxu0 0.0
    %5276 = vmatpush1.msra.mxu0 0.0
    %5277 = vmatprep.subr.mxu0 0.0
    %5278 = vmatpush1.msra.mxu0 0.0
    %5279 = vmatprep.subr.mxu0 0.0
    %5280 = vmatpush1.msra.mxu0 0.0
    %5281 = vmatprep.subr.mxu0 0.0
    %5282 = vmatpush1.msra.mxu0 0.0
    %5283 = vmatprep.subr.mxu0 0.0
    %5284 = vmatpush1.msra.mxu0 0.0
    %5285 = vmatprep.subr.mxu0 0.0
    %5286 = vmatpush1.msra.mxu0 0.0
    %5287 = vmatprep.subr.mxu0 0.0
    %5288 = vmatpush1.msra.mxu0 0.0
    %5289 = vmatprep.subr.mxu0 0.0
    %5290 = vmatpush1.msra.mxu0 0.0
    %5291 = vmatprep.subr.mxu0 0.0
    %5292 = vmatpush1.msra.mxu0 0.0
    %5293 = vmatprep.subr.mxu0 0.0
    %5294 = vmatpush1.msra.mxu0 0.0
    %5295 = vmatprep.subr.mxu0 0.0
    %5296 = vmatpush1.msra.mxu0 0.0
    %5297 = vmatprep.subr.mxu0 0.0
    %5298 = vmatpush1.msra.mxu0 0.0
    %5299 = vmatprep.subr.mxu0 0.0
    %5300 = vmatpush1.msra.mxu0 0.0
    %5301 = vmatprep.subr.mxu0 0.0
    %5302 = vmatpush1.msra.mxu0 0.0
    %5303 = vmatprep.subr.mxu0 0.0
    %5304 = vmatpush1.msra.mxu0 0.0
    %5305 = vmatprep.subr.mxu0 0.0
    %5306 = vmatpush1.msra.mxu0 0.0
    %5307 = vmatprep.subr.mxu0 0.0
    %5308 = vmatpush1.msra.mxu0 0.0
    %5309 = vmatprep.subr.mxu0 0.0
    %5310 = vmatpush1.msra.mxu0 0.0
    %5311 = vmatprep.subr.mxu0 0.0
    %5312 = vmatpush1.msra.mxu0 0.0
    %5313 = vmatprep.subr.mxu0 0.0
    %5314 = vmatpush1.msra.mxu0 0.0
    %5315 = vmatprep.subr.mxu0 0.0
    %5316 = vmatpush1.msra.mxu0 0.0
    %5317 = vmatprep.mubr.f32.mxu0 0.0
    %v5318 = vand.u32 %v1739, 4294901760
    %5319 = vmatmul.mubr.f32.gmra.mrb[0].mxu0 %v5318
    %v5320 = vpop.f32.mrb[0].mxu0
    %v5321 = vadd.f32 %v5249, %v5320
    %v5322 = vpop.f32.mrb[0].mxu0
    %5323 = vdwg.mxu0
    %v5324 = vadd.f32 %v4873, %v5321
    %5326 = vrot.lane.b32.xlu0 %v1728, 64
    %v5327 = vpop.permute.xlu0 %5326
    %v5329 = vmul.f32 %v5324, %v5327
    %v5330 = vlaneseq
    %v5331 = vshrl.u32 %v5330, 7
    %v5332 = vsub.s32 0, %v5331
    %v5333 = vrot.slane %v88, %v5332
    %v5335 = vsel %vm90, %v5329, 0
    %5337 = vmatprep.subr.mxu0 0.0
    %v5338 = vand.u32 %v74, 4294901760
    %5339 = vmatpush1.msra.mxu0 %v5338
    %5340 = vmatprep.subr.mxu0 0.0
    %v5341 = vand.u32 %v75, 4294901760
    %5342 = vmatpush1.msra.mxu0 %v5341
    %5343 = vmatprep.subr.mxu0 0.0
    %v5344 = vand.u32 %v76, 4294901760
    %5345 = vmatpush1.msra.mxu0 %v5344
    %5346 = vmatprep.subr.mxu0 0.0
    %v5347 = vand.u32 %v77, 4294901760
    %5348 = vmatpush1.msra.mxu0 %v5347
    %5349 = vmatprep.subr.mxu0 0.0
    %v5350 = vand.u32 %v78, 4294901760
    %5351 = vmatpush1.msra.mxu0 %v5350
    %5352 = vmatprep.subr.mxu0 0.0
    %v5353 = vand.u32 %v79, 4294901760
    %5354 = vmatpush1.msra.mxu0 %v5353
    %5355 = vmatprep.subr.mxu0 0.0
    %v5356 = vand.u32 %v80, 4294901760
    %5357 = vmatpush1.msra.mxu0 %v5356
    %5358 = vmatprep.subr.mxu0 0.0
    %v5359 = vand.u32 %v81, 4294901760
    %5360 = vmatpush1.msra.mxu0 %v5359
    %5361 = vmatprep.subr.mxu0 0.0
    %5362 = vmatpush1.msra.mxu0 0.0
    %5363 = vmatprep.subr.mxu0 0.0
    %5364 = vmatpush1.msra.mxu0 0.0
    %5365 = vmatprep.subr.mxu0 0.0
    %5366 = vmatpush1.msra.mxu0 0.0
    %5367 = vmatprep.subr.mxu0 0.0
    %5368 = vmatpush1.msra.mxu0 0.0
    %5369 = vmatprep.subr.mxu0 0.0
    %5370 = vmatpush1.msra.mxu0 0.0
    %5371 = vmatprep.subr.mxu0 0.0
    %5372 = vmatpush1.msra.mxu0 0.0
    %5373 = vmatprep.subr.mxu0 0.0
    %5374 = vmatpush1.msra.mxu0 0.0
    %5375 = vmatprep.subr.mxu0 0.0
    %5376 = vmatpush1.msra.mxu0 0.0
    %5377 = vmatprep.subr.mxu0 0.0
    %5378 = vmatpush1.msra.mxu0 0.0
    %5379 = vmatprep.subr.mxu0 0.0
    %5380 = vmatpush1.msra.mxu0 0.0
    %5381 = vmatprep.subr.mxu0 0.0
    %5382 = vmatpush1.msra.mxu0 0.0
    %5383 = vmatprep.subr.mxu0 0.0
    %5384 = vmatpush1.msra.mxu0 0.0
    %5385 = vmatprep.subr.mxu0 0.0
    %5386 = vmatpush1.msra.mxu0 0.0
    %5387 = vmatprep.subr.mxu0 0.0
    %5388 = vmatpush1.msra.mxu0 0.0
    %5389 = vmatprep.subr.mxu0 0.0
    %5390 = vmatpush1.msra.mxu0 0.0
    %5391 = vmatprep.subr.mxu0 0.0
    %5392 = vmatpush1.msra.mxu0 0.0
    %5393 = vmatprep.subr.mxu0 0.0
    %5394 = vmatpush1.msra.mxu0 0.0
    %5395 = vmatprep.subr.mxu0 0.0
    %5396 = vmatpush1.msra.mxu0 0.0
    %5397 = vmatprep.subr.mxu0 0.0
    %5398 = vmatpush1.msra.mxu0 0.0
    %5399 = vmatprep.subr.mxu0 0.0
    %5400 = vmatpush1.msra.mxu0 0.0
    %5401 = vmatprep.subr.mxu0 0.0
    %5402 = vmatpush1.msra.mxu0 0.0
    %5403 = vmatprep.subr.mxu0 0.0
    %5404 = vmatpush1.msra.mxu0 0.0
    %5405 = vmatprep.subr.mxu0 0.0
    %5406 = vmatpush1.msra.mxu0 0.0
    %5407 = vmatprep.subr.mxu0 0.0
    %5408 = vmatpush1.msra.mxu0 0.0
    %5409 = vmatprep.mubr.f32.mxu0 0.0
    %v5410 = vand.u32 %v5335, 4294901760
    %v5411 = vsub.f32 %v5335, %v5410
    %v5412 = vand.u32 %v5411, 4294901760
    %v5413 = vsub.f32 %v5411, %v5412
    %v5414 = vand.u32 %v5413, 4294901760
    %5415 = vmatmul.mubr.f32.gmra.mrb[0].mxu0 %v5414
    %v5416 = vpop.f32.mrb[0].mxu0
    %v5417 = vadd.f32 %v5333, %v5416
    %v5418 = vpop.f32.mrb[0].mxu0
    %5419 = vdwg.mxu0
    %5420 = vmatprep.subr.mxu0 0.0
    %v5421 = vand.u32 %v74, 4294901760
    %v5422 = vsub.f32 %v74, %v5421
    %v5423 = vand.u32 %v5422, 4294901760
    %v5424 = vsub.f32 %v5422, %v5423
    %v5425 = vand.u32 %v5424, 4294901760
    %5426 = vmatpush1.msra.mxu0 %v5425
    %5427 = vmatprep.subr.mxu0 0.0
    %v5428 = vand.u32 %v75, 4294901760
    %v5429 = vsub.f32 %v75, %v5428
    %v5430 = vand.u32 %v5429, 4294901760
    %v5431 = vsub.f32 %v5429, %v5430
    %v5432 = vand.u32 %v5431, 4294901760
    %5433 = vmatpush1.msra.mxu0 %v5432
    %5434 = vmatprep.subr.mxu0 0.0
    %v5435 = vand.u32 %v76, 4294901760
    %v5436 = vsub.f32 %v76, %v5435
    %v5437 = vand.u32 %v5436, 4294901760
    %v5438 = vsub.f32 %v5436, %v5437
    %v5439 = vand.u32 %v5438, 4294901760
    %5440 = vmatpush1.msra.mxu0 %v5439
    %5441 = vmatprep.subr.mxu0 0.0
    %v5442 = vand.u32 %v77, 4294901760
    %v5443 = vsub.f32 %v77, %v5442
    %v5444 = vand.u32 %v5443, 4294901760
    %v5445 = vsub.f32 %v5443, %v5444
    %v5446 = vand.u32 %v5445, 4294901760
    %5447 = vmatpush1.msra.mxu0 %v5446
    %5448 = vmatprep.subr.mxu0 0.0
    %v5449 = vand.u32 %v78, 4294901760
    %v5450 = vsub.f32 %v78, %v5449
    %v5451 = vand.u32 %v5450, 4294901760
    %v5452 = vsub.f32 %v5450, %v5451
    %v5453 = vand.u32 %v5452, 4294901760
    %5454 = vmatpush1.msra.mxu0 %v5453
    %5455 = vmatprep.subr.mxu0 0.0
    %v5456 = vand.u32 %v79, 4294901760
    %v5457 = vsub.f32 %v79, %v5456
    %v5458 = vand.u32 %v5457, 4294901760
    %v5459 = vsub.f32 %v5457, %v5458
    %v5460 = vand.u32 %v5459, 4294901760
    %5461 = vmatpush1.msra.mxu0 %v5460
    %5462 = vmatprep.subr.mxu0 0.0
    %v5463 = vand.u32 %v80, 4294901760
    %v5464 = vsub.f32 %v80, %v5463
    %v5465 = vand.u32 %v5464, 4294901760
    %v5466 = vsub.f32 %v5464, %v5465
    %v5467 = vand.u32 %v5466, 4294901760
    %5468 = vmatpush1.msra.mxu0 %v5467
    %5469 = vmatprep.subr.mxu0 0.0
    %v5470 = vand.u32 %v81, 4294901760
    %v5471 = vsub.f32 %v81, %v5470
    %v5472 = vand.u32 %v5471, 4294901760
    %v5473 = vsub.f32 %v5471, %v5472
    %v5474 = vand.u32 %v5473, 4294901760
    %5475 = vmatpush1.msra.mxu0 %v5474
    %5476 = vmatprep.subr.mxu0 0.0
    %5477 = vmatpush1.msra.mxu0 0.0
    %5478 = vmatprep.subr.mxu0 0.0
    %5479 = vmatpush1.msra.mxu0 0.0
    %5480 = vmatprep.subr.mxu0 0.0
    %5481 = vmatpush1.msra.mxu0 0.0
    %5482 = vmatprep.subr.mxu0 0.0
    %5483 = vmatpush1.msra.mxu0 0.0
    %5484 = vmatprep.subr.mxu0 0.0
    %5485 = vmatpush1.msra.mxu0 0.0
    %5486 = vmatprep.subr.mxu0 0.0
    %5487 = vmatpush1.msra.mxu0 0.0
    %5488 = vmatprep.subr.mxu0 0.0
    %5489 = vmatpush1.msra.mxu0 0.0
    %5490 = vmatprep.subr.mxu0 0.0
    %5491 = vmatpush1.msra.mxu0 0.0
    %5492 = vmatprep.subr.mxu0 0.0
    %5493 = vmatpush1.msra.mxu0 0.0
    %5494 = vmatprep.subr.mxu0 0.0
    %5495 = vmatpush1.msra.mxu0 0.0
    %5496 = vmatprep.subr.mxu0 0.0
    %5497 = vmatpush1.msra.mxu0 0.0
    %5498 = vmatprep.subr.mxu0 0.0
    %5499 = vmatpush1.msra.mxu0 0.0
    %5500 = vmatprep.subr.mxu0 0.0
    %5501 = vmatpush1.msra.mxu0 0.0
    %5502 = vmatprep.subr.mxu0 0.0
    %5503 = vmatpush1.msra.mxu0 0.0
    %5504 = vmatprep.subr.mxu0 0.0
    %5505 = vmatpush1.msra.mxu0 0.0
    %5506 = vmatprep.subr.mxu0 0.0
    %5507 = vmatpush1.msra.mxu0 0.0
    %5508 = vmatprep.subr.mxu0 0.0
    %5509 = vmatpush1.msra.mxu0 0.0
    %5510 = vmatprep.subr.mxu0 0.0
    %5511 = vmatpush1.msra.mxu0 0.0
    %5512 = vmatprep.subr.mxu0 0.0
    %5513 = vmatpush1.msra.mxu0 0.0
    %5514 = vmatprep.subr.mxu0 0.0
    %5515 = vmatpush1.msra.mxu0 0.0
    %5516 = vmatprep.subr.mxu0 0.0
    %5517 = vmatpush1.msra.mxu0 0.0
    %5518 = vmatprep.subr.mxu0 0.0
    %5519 = vmatpush1.msra.mxu0 0.0
    %5520 = vmatprep.subr.mxu0 0.0
    %5521 = vmatpush1.msra.mxu0 0.0
    %5522 = vmatprep.subr.mxu0 0.0
    %5523 = vmatpush1.msra.mxu0 0.0
    %5524 = vmatprep.mubr.f32.mxu0 0.0
    %v5525 = vand.u32 %v5335, 4294901760
    %5526 = vmatmul.mubr.f32.gmra.mrb[0].mxu0 %v5525
    %v5527 = vpop.f32.mrb[0].mxu0
    %v5528 = vadd.f32 %v5417, %v5527
    %v5529 = vpop.f32.mrb[0].mxu0
    %5530 = vdwg.mxu0
    %5531 = vmatprep.subr.mxu0 0.0
    %v5532 = vand.u32 %v74, 4294901760
    %v5533 = vsub.f32 %v74, %v5532
    %5534 = vmatpush1.msra.mxu0 %v5533
    %5535 = vmatprep.subr.mxu0 0.0
    %v5536 = vand.u32 %v75, 4294901760
    %v5537 = vsub.f32 %v75, %v5536
    %5538 = vmatpush1.msra.mxu0 %v5537
    %5539 = vmatprep.subr.mxu0 0.0
    %v5540 = vand.u32 %v76, 4294901760
    %v5541 = vsub.f32 %v76, %v5540
    %5542 = vmatpush1.msra.mxu0 %v5541
    %5543 = vmatprep.subr.mxu0 0.0
    %v5544 = vand.u32 %v77, 4294901760
    %v5545 = vsub.f32 %v77, %v5544
    %5546 = vmatpush1.msra.mxu0 %v5545
    %5547 = vmatprep.subr.mxu0 0.0
    %v5548 = vand.u32 %v78, 4294901760
    %v5549 = vsub.f32 %v78, %v5548
    %5550 = vmatpush1.msra.mxu0 %v5549
    %5551 = vmatprep.subr.mxu0 0.0
    %v5552 = vand.u32 %v79, 4294901760
    %v5553 = vsub.f32 %v79, %v5552
    %5554 = vmatpush1.msra.mxu0 %v5553
    %5555 = vmatprep.subr.mxu0 0.0
    %v5556 = vand.u32 %v80, 4294901760
    %v5557 = vsub.f32 %v80, %v5556
    %5558 = vmatpush1.msra.mxu0 %v5557
    %5559 = vmatprep.subr.mxu0 0.0
    %v5560 = vand.u32 %v81, 4294901760
    %v5561 = vsub.f32 %v81, %v5560
    %5562 = vmatpush1.msra.mxu0 %v5561
    %5563 = vmatprep.subr.mxu0 0.0
    %5564 = vmatpush1.msra.mxu0 0.0
    %5565 = vmatprep.subr.mxu0 0.0
    %5566 = vmatpush1.msra.mxu0 0.0
    %5567 = vmatprep.subr.mxu0 0.0
    %5568 = vmatpush1.msra.mxu0 0.0
    %5569 = vmatprep.subr.mxu0 0.0
    %5570 = vmatpush1.msra.mxu0 0.0
    %5571 = vmatprep.subr.mxu0 0.0
    %5572 = vmatpush1.msra.mxu0 0.0
    %5573 = vmatprep.subr.mxu0 0.0
    %5574 = vmatpush1.msra.mxu0 0.0
    %5575 = vmatprep.subr.mxu0 0.0
    %5576 = vmatpush1.msra.mxu0 0.0
    %5577 = vmatprep.subr.mxu0 0.0
    %5578 = vmatpush1.msra.mxu0 0.0
    %5579 = vmatprep.subr.mxu0 0.0
    %5580 = vmatpush1.msra.mxu0 0.0
    %5581 = vmatprep.subr.mxu0 0.0
    %5582 = vmatpush1.msra.mxu0 0.0
    %5583 = vmatprep.subr.mxu0 0.0
    %5584 = vmatpush1.msra.mxu0 0.0
    %5585 = vmatprep.subr.mxu0 0.0
    %5586 = vmatpush1.msra.mxu0 0.0
    %5587 = vmatprep.subr.mxu0 0.0
    %5588 = vmatpush1.msra.mxu0 0.0
    %5589 = vmatprep.subr.mxu0 0.0
    %5590 = vmatpush1.msra.mxu0 0.0
    %5591 = vmatprep.subr.mxu0 0.0
    %5592 = vmatpush1.msra.mxu0 0.0
    %5593 = vmatprep.subr.mxu0 0.0
    %5594 = vmatpush1.msra.mxu0 0.0
    %5595 = vmatprep.subr.mxu0 0.0
    %5596 = vmatpush1.msra.mxu0 0.0
    %5597 = vmatprep.subr.mxu0 0.0
    %5598 = vmatpush1.msra.mxu0 0.0
    %5599 = vmatprep.subr.mxu0 0.0
    %5600 = vmatpush1.msra.mxu0 0.0
    %5601 = vmatprep.subr.mxu0 0.0
    %5602 = vmatpush1.msra.mxu0 0.0
    %5603 = vmatprep.subr.mxu0 0.0
    %5604 = vmatpush1.msra.mxu0 0.0
    %5605 = vmatprep.subr.mxu0 0.0
    %5606 = vmatpush1.msra.mxu0 0.0
    %5607 = vmatprep.subr.mxu0 0.0
    %5608 = vmatpush1.msra.mxu0 0.0
    %5609 = vmatprep.subr.mxu0 0.0
    %5610 = vmatpush1.msra.mxu0 0.0
    %5611 = vmatprep.mubr.f32.mxu0 0.0
    %v5612 = vand.u32 %v5335, 4294901760
    %v5613 = vsub.f32 %v5335, %v5612
    %5614 = vmatmul.mubr.f32.gmra.mrb[0].mxu0 %v5613
    %v5615 = vpop.f32.mrb[0].mxu0
    %v5616 = vadd.f32 %v5528, %v5615
    %v5617 = vpop.f32.mrb[0].mxu0
    %5618 = vdwg.mxu0
    %5619 = vmatprep.subr.mxu0 0.0
    %v5620 = vand.u32 %v74, 4294901760
    %5621 = vmatpush1.msra.mxu0 %v5620
    %5622 = vmatprep.subr.mxu0 0.0
    %v5623 = vand.u32 %v75, 4294901760
    %5624 = vmatpush1.msra.mxu0 %v5623
    %5625 = vmatprep.subr.mxu0 0.0
    %v5626 = vand.u32 %v76, 4294901760
    %5627 = vmatpush1.msra.mxu0 %v5626
    %5628 = vmatprep.subr.mxu0 0.0
    %v5629 = vand.u32 %v77, 4294901760
    %5630 = vmatpush1.msra.mxu0 %v5629
    %5631 = vmatprep.subr.mxu0 0.0
    %v5632 = vand.u32 %v78, 4294901760
    %5633 = vmatpush1.msra.mxu0 %v5632
    %5634 = vmatprep.subr.mxu0 0.0
    %v5635 = vand.u32 %v79, 4294901760
    %5636 = vmatpush1.msra.mxu0 %v5635
    %5637 = vmatprep.subr.mxu0 0.0
    %v5638 = vand.u32 %v80, 4294901760
    %5639 = vmatpush1.msra.mxu0 %v5638
    %5640 = vmatprep.subr.mxu0 0.0
    %v5641 = vand.u32 %v81, 4294901760
    %5642 = vmatpush1.msra.mxu0 %v5641
    %5643 = vmatprep.subr.mxu0 0.0
    %5644 = vmatpush1.msra.mxu0 0.0
    %5645 = vmatprep.subr.mxu0 0.0
    %5646 = vmatpush1.msra.mxu0 0.0
    %5647 = vmatprep.subr.mxu0 0.0
    %5648 = vmatpush1.msra.mxu0 0.0
    %5649 = vmatprep.subr.mxu0 0.0
    %5650 = vmatpush1.msra.mxu0 0.0
    %5651 = vmatprep.subr.mxu0 0.0
    %5652 = vmatpush1.msra.mxu0 0.0
    %5653 = vmatprep.subr.mxu0 0.0
    %5654 = vmatpush1.msra.mxu0 0.0
    %5655 = vmatprep.subr.mxu0 0.0
    %5656 = vmatpush1.msra.mxu0 0.0
    %5657 = vmatprep.subr.mxu0 0.0
    %5658 = vmatpush1.msra.mxu0 0.0
    %5659 = vmatprep.subr.mxu0 0.0
    %5660 = vmatpush1.msra.mxu0 0.0
    %5661 = vmatprep.subr.mxu0 0.0
    %5662 = vmatpush1.msra.mxu0 0.0
    %5663 = vmatprep.subr.mxu0 0.0
    %5664 = vmatpush1.msra.mxu0 0.0
    %5665 = vmatprep.subr.mxu0 0.0
    %5666 = vmatpush1.msra.mxu0 0.0
    %5667 = vmatprep.subr.mxu0 0.0
    %5668 = vmatpush1.msra.mxu0 0.0
    %5669 = vmatprep.subr.mxu0 0.0
    %5670 = vmatpush1.msra.mxu0 0.0
    %5671 = vmatprep.subr.mxu0 0.0
    %5672 = vmatpush1.msra.mxu0 0.0
    %5673 = vmatprep.subr.mxu0 0.0
    %5674 = vmatpush1.msra.mxu0 0.0
    %5675 = vmatprep.subr.mxu0 0.0
    %5676 = vmatpush1.msra.mxu0 0.0
    %5677 = vmatprep.subr.mxu0 0.0
    %5678 = vmatpush1.msra.mxu0 0.0
    %5679 = vmatprep.subr.mxu0 0.0
    %5680 = vmatpush1.msra.mxu0 0.0
    %5681 = vmatprep.subr.mxu0 0.0
    %5682 = vmatpush1.msra.mxu0 0.0
    %5683 = vmatprep.subr.mxu0 0.0
    %5684 = vmatpush1.msra.mxu0 0.0
    %5685 = vmatprep.subr.mxu0 0.0
    %5686 = vmatpush1.msra.mxu0 0.0
    %5687 = vmatprep.subr.mxu0 0.0
    %5688 = vmatpush1.msra.mxu0 0.0
    %5689 = vmatprep.subr.mxu0 0.0
    %5690 = vmatpush1.msra.mxu0 0.0
    %5691 = vmatprep.mubr.f32.mxu0 0.0
    %v5692 = vand.u32 %v5335, 4294901760
    %v5693 = vsub.f32 %v5335, %v5692
    %v5694 = vand.u32 %v5693, 4294901760
    %5695 = vmatmul.mubr.f32.gmra.mrb[0].mxu0 %v5694
    %v5696 = vpop.f32.mrb[0].mxu0
    %v5697 = vadd.f32 %v5616, %v5696
    %v5698 = vpop.f32.mrb[0].mxu0
    %5699 = vdwg.mxu0
    %5700 = vmatprep.subr.mxu0 0.0
    %v5701 = vand.u32 %v74, 4294901760
    %v5702 = vsub.f32 %v74, %v5701
    %v5703 = vand.u32 %v5702, 4294901760
    %5704 = vmatpush1.msra.mxu0 %v5703
    %5705 = vmatprep.subr.mxu0 0.0
    %v5706 = vand.u32 %v75, 4294901760
    %v5707 = vsub.f32 %v75, %v5706
    %v5708 = vand.u32 %v5707, 4294901760
    %5709 = vmatpush1.msra.mxu0 %v5708
    %5710 = vmatprep.subr.mxu0 0.0
    %v5711 = vand.u32 %v76, 4294901760
    %v5712 = vsub.f32 %v76, %v5711
    %v5713 = vand.u32 %v5712, 4294901760
    %5714 = vmatpush1.msra.mxu0 %v5713
    %5715 = vmatprep.subr.mxu0 0.0
    %v5716 = vand.u32 %v77, 4294901760
    %v5717 = vsub.f32 %v77, %v5716
    %v5718 = vand.u32 %v5717, 4294901760
    %5719 = vmatpush1.msra.mxu0 %v5718
    %5720 = vmatprep.subr.mxu0 0.0
    %v5721 = vand.u32 %v78, 4294901760
    %v5722 = vsub.f32 %v78, %v5721
    %v5723 = vand.u32 %v5722, 4294901760
    %5724 = vmatpush1.msra.mxu0 %v5723
    %5725 = vmatprep.subr.mxu0 0.0
    %v5726 = vand.u32 %v79, 4294901760
    %v5727 = vsub.f32 %v79, %v5726
    %v5728 = vand.u32 %v5727, 4294901760
    %5729 = vmatpush1.msra.mxu0 %v5728
    %5730 = vmatprep.subr.mxu0 0.0
    %v5731 = vand.u32 %v80, 4294901760
    %v5732 = vsub.f32 %v80, %v5731
    %v5733 = vand.u32 %v5732, 4294901760
    %5734 = vmatpush1.msra.mxu0 %v5733
    %5735 = vmatprep.subr.mxu0 0.0
    %v5736 = vand.u32 %v81, 4294901760
    %v5737 = vsub.f32 %v81, %v5736
    %v5738 = vand.u32 %v5737, 4294901760
    %5739 = vmatpush1.msra.mxu0 %v5738
    %5740 = vmatprep.subr.mxu0 0.0
    %5741 = vmatpush1.msra.mxu0 0.0
    %5742 = vmatprep.subr.mxu0 0.0
    %5743 = vmatpush1.msra.mxu0 0.0
    %5744 = vmatprep.subr.mxu0 0.0
    %5745 = vmatpush1.msra.mxu0 0.0
    %5746 = vmatprep.subr.mxu0 0.0
    %5747 = vmatpush1.msra.mxu0 0.0
    %5748 = vmatprep.subr.mxu0 0.0
    %5749 = vmatpush1.msra.mxu0 0.0
    %5750 = vmatprep.subr.mxu0 0.0
    %5751 = vmatpush1.msra.mxu0 0.0
    %5752 = vmatprep.subr.mxu0 0.0
    %5753 = vmatpush1.msra.mxu0 0.0
    %5754 = vmatprep.subr.mxu0 0.0
    %5755 = vmatpush1.msra.mxu0 0.0
    %5756 = vmatprep.subr.mxu0 0.0
    %5757 = vmatpush1.msra.mxu0 0.0
    %5758 = vmatprep.subr.mxu0 0.0
    %5759 = vmatpush1.msra.mxu0 0.0
    %5760 = vmatprep.subr.mxu0 0.0
    %5761 = vmatpush1.msra.mxu0 0.0
    %5762 = vmatprep.subr.mxu0 0.0
    %5763 = vmatpush1.msra.mxu0 0.0
    %5764 = vmatprep.subr.mxu0 0.0
    %5765 = vmatpush1.msra.mxu0 0.0
    %5766 = vmatprep.subr.mxu0 0.0
    %5767 = vmatpush1.msra.mxu0 0.0
    %5768 = vmatprep.subr.mxu0 0.0
    %5769 = vmatpush1.msra.mxu0 0.0
    %5770 = vmatprep.subr.mxu0 0.0
    %5771 = vmatpush1.msra.mxu0 0.0
    %5772 = vmatprep.subr.mxu0 0.0
    %5773 = vmatpush1.msra.mxu0 0.0
    %5774 = vmatprep.subr.mxu0 0.0
    %5775 = vmatpush1.msra.mxu0 0.0
    %5776 = vmatprep.subr.mxu0 0.0
    %5777 = vmatpush1.msra.mxu0 0.0
    %5778 = vmatprep.subr.mxu0 0.0
    %5779 = vmatpush1.msra.mxu0 0.0
    %5780 = vmatprep.subr.mxu0 0.0
    %5781 = vmatpush1.msra.mxu0 0.0
    %5782 = vmatprep.subr.mxu0 0.0
    %5783 = vmatpush1.msra.mxu0 0.0
    %5784 = vmatprep.subr.mxu0 0.0
    %5785 = vmatpush1.msra.mxu0 0.0
    %5786 = vmatprep.subr.mxu0 0.0
    %5787 = vmatpush1.msra.mxu0 0.0
    %5788 = vmatprep.mubr.f32.mxu0 0.0
    %v5789 = vand.u32 %v5335, 4294901760
    %5790 = vmatmul.mubr.f32.gmra.mrb[0].mxu0 %v5789
    %v5791 = vpop.f32.mrb[0].mxu0
    %v5792 = vadd.f32 %v5697, %v5791
    %v5793 = vpop.f32.mrb[0].mxu0
    %5794 = vdwg.mxu0
    %5795 = vmatprep.subr.mxu0 0.0
    %v5796 = vand.u32 %v74, 4294901760
    %5797 = vmatpush1.msra.mxu0 %v5796
    %5798 = vmatprep.subr.mxu0 0.0
    %v5799 = vand.u32 %v75, 4294901760
    %5800 = vmatpush1.msra.mxu0 %v5799
    %5801 = vmatprep.subr.mxu0 0.0
    %v5802 = vand.u32 %v76, 4294901760
    %5803 = vmatpush1.msra.mxu0 %v5802
    %5804 = vmatprep.subr.mxu0 0.0
    %v5805 = vand.u32 %v77, 4294901760
    %5806 = vmatpush1.msra.mxu0 %v5805
    %5807 = vmatprep.subr.mxu0 0.0
    %v5808 = vand.u32 %v78, 4294901760
    %5809 = vmatpush1.msra.mxu0 %v5808
    %5810 = vmatprep.subr.mxu0 0.0
    %v5811 = vand.u32 %v79, 4294901760
    %5812 = vmatpush1.msra.mxu0 %v5811
    %5813 = vmatprep.subr.mxu0 0.0
    %v5814 = vand.u32 %v80, 4294901760
    %5815 = vmatpush1.msra.mxu0 %v5814
    %5816 = vmatprep.subr.mxu0 0.0
    %v5817 = vand.u32 %v81, 4294901760
    %5818 = vmatpush1.msra.mxu0 %v5817
    %5819 = vmatprep.subr.mxu0 0.0
    %5820 = vmatpush1.msra.mxu0 0.0
    %5821 = vmatprep.subr.mxu0 0.0
    %5822 = vmatpush1.msra.mxu0 0.0
    %5823 = vmatprep.subr.mxu0 0.0
    %5824 = vmatpush1.msra.mxu0 0.0
    %5825 = vmatprep.subr.mxu0 0.0
    %5826 = vmatpush1.msra.mxu0 0.0
    %5827 = vmatprep.subr.mxu0 0.0
    %5828 = vmatpush1.msra.mxu0 0.0
    %5829 = vmatprep.subr.mxu0 0.0
    %5830 = vmatpush1.msra.mxu0 0.0
    %5831 = vmatprep.subr.mxu0 0.0
    %5832 = vmatpush1.msra.mxu0 0.0
    %5833 = vmatprep.subr.mxu0 0.0
    %5834 = vmatpush1.msra.mxu0 0.0
    %5835 = vmatprep.subr.mxu0 0.0
    %5836 = vmatpush1.msra.mxu0 0.0
    %5837 = vmatprep.subr.mxu0 0.0
    %5838 = vmatpush1.msra.mxu0 0.0
    %5839 = vmatprep.subr.mxu0 0.0
    %5840 = vmatpush1.msra.mxu0 0.0
    %5841 = vmatprep.subr.mxu0 0.0
    %5842 = vmatpush1.msra.mxu0 0.0
    %5843 = vmatprep.subr.mxu0 0.0
    %5844 = vmatpush1.msra.mxu0 0.0
    %5845 = vmatprep.subr.mxu0 0.0
    %5846 = vmatpush1.msra.mxu0 0.0
    %5847 = vmatprep.subr.mxu0 0.0
    %5848 = vmatpush1.msra.mxu0 0.0
    %5849 = vmatprep.subr.mxu0 0.0
    %5850 = vmatpush1.msra.mxu0 0.0
    %5851 = vmatprep.subr.mxu0 0.0
    %5852 = vmatpush1.msra.mxu0 0.0
    %5853 = vmatprep.subr.mxu0 0.0
    %5854 = vmatpush1.msra.mxu0 0.0
    %5855 = vmatprep.subr.mxu0 0.0
    %5856 = vmatpush1.msra.mxu0 0.0
    %5857 = vmatprep.subr.mxu0 0.0
    %5858 = vmatpush1.msra.mxu0 0.0
    %5859 = vmatprep.subr.mxu0 0.0
    %5860 = vmatpush1.msra.mxu0 0.0
    %5861 = vmatprep.subr.mxu0 0.0
    %5862 = vmatpush1.msra.mxu0 0.0
    %5863 = vmatprep.subr.mxu0 0.0
    %5864 = vmatpush1.msra.mxu0 0.0
    %5865 = vmatprep.subr.mxu0 0.0
    %5866 = vmatpush1.msra.mxu0 0.0
    %5867 = vmatprep.mubr.f32.mxu0 0.0
    %v5868 = vand.u32 %v5335, 4294901760
    %5869 = vmatmul.mubr.f32.gmra.mrb[0].mxu0 %v5868
    %v5870 = vpop.f32.mrb[0].mxu0
    %v5871 = vadd.f32 %v5792, %v5870
    %v5872 = vpop.f32.mrb[0].mxu0
    %5873 = vdwg.mxu0
    %v5874 = vadd.f32 %v25, %v5871
    %5875 = vst.msk [vmem:[%s2] sm:$0xff] %vm90, %v5874
    // Predicated region
    $region14: #{mamba_head_forward.1} parent=1 // pred_check
      _
    $region15: #{mamba_head_forward.1} parent=1 // pred_check_branch
      %5877 = sbr.rel (0) target = $region17
    $region16: #{mamba_head_forward.1} parent=1 // pred_region
      _
    $region17: #{mamba_head_forward.1} parent=1 // pred_fallthru
      _
    // Predicated region
    $region18: #{mamba_head_forward.1} parent=1 // pred_check
      _
    $region19: #{mamba_head_forward.1} parent=1 // pred_check_branch
      %5879 = sbr.rel (0) target = $region21
    $region20: #{mamba_head_forward.1} parent=1 // pred_region
      _
    $region21: #{mamba_head_forward.1} parent=1 // pred_fallthru
      _
    %5880 = vsyncpa [#allocation3], 1

</llo_original>
